<compile_context>
chip_gen: v7x
topology: tpu7x:2x2x1
jax: 0.10.0
libtpu: 0.0.40
codegen_flags: <defaults>
</compile_context>

<pallas_src>
import functools

import jax
import jax.numpy as jnp
from jax import lax
from jax.experimental import pallas as pl
from jax.experimental.pallas import tpu as pltpu

LRELU_SLOPE = 0.1
_HALO = 8          # receptive-field half-width is 7; padded to 8 sublanes
_CIN_CHUNK = 2048  # pre-layer contraction chunk (bounds f32 up-cast temporaries)


def _round_up(x, m):
    return (x + m - 1) // m * m


def _choose_tiling(T, t_tile):
    """Time tile tt and padded length Tp (multiple of tt)."""
    if T <= t_tile:
        tt = _round_up(T, 8)
        return tt, tt
    tt = _round_up(t_tile, 128)   # lane-dense final-output blocks when multi-tile
    return tt, _round_up(T, tt)


def _vmem_limit_bytes():
    # Generation-aware budget: ~40 MiB on v7x (64 MiB/TC), 80 MiB on 128-MiB parts.
    try:
        cap = int(pltpu.get_tpu_info().vmem_capacity_bytes)
    except Exception:
        cap = 128 * 1024 * 1024
    return min(int(cap) * 5 // 8, 80 * 1024 * 1024)


def _compiler_params():
    return pltpu.CompilerParams(
        dimension_semantics=("parallel", "parallel"),
        vmem_limit_bytes=_vmem_limit_bytes(),
    )


def _make_halos(x, t_tile):
    """Left/right halo slabs (B, nT, _HALO, C); zero outside [0, Tp). Tiny gather."""
    B, Tp, C = x.shape
    nT = Tp // t_tile
    starts = jnp.arange(nT)[:, None] * t_tile
    taps = jnp.arange(_HALO)[None, :]
    l_idx = starts - _HALO + taps          # (nT, 8): global t in [start-8, start)
    r_idx = starts + t_tile + taps         # (nT, 8): global t in [start+tt, start+tt+8)

    def gather(idx):
        valid = (idx >= 0) & (idx < Tp)
        g = x[:, jnp.clip(idx, 0, Tp - 1), :]                 # (B, nT, 8, C)
        return jnp.where(valid[None, :, :, None], g, jnp.zeros((), x.dtype))

    return gather(l_idx), gather(r_idx)


# ----------------------------------------------------------------- kernel ----

def _fused_kernel(lh_ref, x_ref, rh_ref,
                  wpre_ref, bpre_ref, w1_ref, b1_ref, w2_ref, b2_ref,
                  w3_ref, b3_ref, wpo_ref, bpo_ref, o_ref, *,
                  t_tile, t_valid):
    f32 = jnp.float32
    tt = t_tile
    start = pl.program_id(1) * tt

    def mask_rows(h, first_g):
        # Zero rows whose global time index is outside [0, t_valid): this
        # reproduces every conv's zero-padding for halo rows and for the padded
        # tail when T was rounded up to a tile multiple.  Load-bearing.
        n = h.shape[0]
        g = lax.broadcasted_iota(jnp.int32, (n, 1), 0) + (start + first_g)
        return jnp.where((g >= 0) & (g < t_valid), h, 0.0)

    # Raw-input window: rows cover global t in [start-8, start+tt+8); 8-row halo
    # slabs keep every concat piece 8-sublane aligned (no shifted full-tile copy).
    win = jnp.concatenate([lh_ref[0, 0], x_ref[0], rh_ref[0, 0]], axis=0)  # (tt+16, Cin) bf16

    # ---- pre: Conv1d(k=1); Cin contraction chunked with an f32 accumulator ----
    n0 = tt + 16
    cin = win.shape[1]
    w_pre = wpre_ref[...]                                # (Cin, C0p) f32, VMEM-resident
    h0 = jnp.zeros((n0, w_pre.shape[1]), f32)
    for c0 in range(0, cin, _CIN_CHUNK):
        c1 = min(c0 + _CIN_CHUNK, cin)
        # TODO(synk): on real TPU feed bf16 operands straight to the MXU
        # (preferred_element_type=f32); the f32 up-cast keeps interpret/CPU happy.
        h0 = h0 + jnp.dot(win[:, c0:c1].astype(f32), w_pre[c0:c1, :],
                          preferred_element_type=f32)
    h0 = mask_rows(h0 + bpre_ref[...], -8)               # (tt+16, C0p)

    # ---- convs[0]: k=5 + leaky_relu; im2col fills the MXU contraction depth ----
    n1 = tt + 12
    cols = jnp.concatenate([h0[k:k + n1, :] for k in range(5)], axis=1)    # (n1, 5*C0p)
    h1 = jnp.dot(cols, w1_ref[...], preferred_element_type=f32) + b1_ref[...]
    h1 = jnp.where(h1 >= 0, h1, LRELU_SLOPE * h1)
    h1 = mask_rows(h1, -6)                               # (tt+12, C1)

    # ---- convs[1]: k=5 + leaky_relu; K accumulated matmuls (no im2col buffer) ----
    n2 = tt + 8
    h2 = jnp.zeros((n2, w2_ref.shape[-1]), f32)
    for k in range(5):
        h2 = h2 + jnp.dot(h1[k:k + n2, :], w2_ref[k], preferred_element_type=f32)
    h2 = h2 + b2_ref[...]
    h2 = jnp.where(h2 >= 0, h2, LRELU_SLOPE * h2)
    h2 = mask_rows(h2, -4)                               # (tt+8, C2)

    # ---- convs[2]: k=5 + leaky_relu ----
    n3 = tt + 4
    h3 = jnp.zeros((n3, w3_ref.shape[-1]), f32)
    for k in range(5):
        h3 = h3 + jnp.dot(h2[k:k + n3, :], w3_ref[k], preferred_element_type=f32)
    h3 = h3 + b3_ref[...]
    h3 = jnp.where(h3 >= 0, h3, LRELU_SLOPE * h3)
    h3 = mask_rows(h3, -2)                               # (tt+4, C3)

    # ---- conv_post: k=3, Cout=1 zero-padded to 8; lane-dense (1, tt) output ----
    out8 = jnp.zeros((tt, 8), f32)
    for k in range(3):
        out8 = out8 + jnp.dot(h3[1 + k:1 + k + tt, :], wpo_ref[k],
                              preferred_element_type=f32)
    # Padded weight columns 1..7 are zero and discarded; rows beyond T in the
    # padded tail are trimmed by the wrapper.
    row = out8.T[0:1, :] + bpo_ref[...]                  # (1, tt)
    o_ref[0] = row.astype(o_ref.dtype)


# ---------------------------------------------------------------- wrapper ----

def wavlm_discriminator(x_ncw, params, *, t_tile=512):
    """Forward pass. x_ncw: (B, slm_hidden*slm_layers, T) like PyTorch. Returns (B, T) f32."""
    (wp, bp), (w1, b1), (w2, b2), (w3, b3), (wo, bo) = params
    B, Cin, T = x_ncw.shape
    tt, Tp = _choose_tiling(T, t_tile)
    nT = Tp // tt
    f32 = jnp.float32

    C0 = wp.shape[2]
    C0p = _round_up(C0, 128)          # MXU / lane-dense padding of the pre output
    C1, C2, C3 = w1.shape[2], w2.shape[2], w3.shape[2]

    # Effective weights (weight_norm only reparametrizes; forward needs w, b).
    wpre = jnp.pad(wp[0], ((0, 0), (0, C0p - C0))).astype(f32)             # (Cin, C0p)
    bpre = jnp.pad(bp, (0, C0p - C0)).reshape(1, C0p).astype(f32)
    w1f = jnp.pad(w1, ((0, 0), (0, C0p - C0), (0, 0))).astype(f32).reshape(5 * C0p, C1)
    wpo = jnp.pad(wo, ((0, 0), (0, 0), (0, 8 - wo.shape[2]))).astype(f32)  # (3, C3, 8)

    # Activations channels-last, bf16 in HBM (the Cin-wide input read dominates).
    x = jnp.transpose(x_ncw, (0, 2, 1)).astype(jnp.bfloat16)
    if Tp > T:
        x = jnp.pad(x, ((0, 0), (0, Tp - T), (0, 0)))     # one-time alignment pad
    lh, rh = _make_halos(x, tt)

    def _const_spec(shape):
        # Grid-invariant weight/bias blocks.
        # TODO(synk): on v7x add pipeline_mode=pl.Buffered(1) here to avoid
        # double-buffering the resident weights (frees a few MiB of VMEM).
        return pl.BlockSpec(shape, lambda b, t, _n=len(shape): (0,) * _n)

    kern = functools.partial(_fused_kernel, t_tile=tt, t_valid=T)
    out = pl.pallas_call(
        kern,
        out_shape=jax.ShapeDtypeStruct((B, 1, Tp), f32),
        grid=(B, nT),
        in_specs=[
            pl.BlockSpec((1, 1, _HALO, Cin), lambda b, t: (b, t, 0, 0)),
            pl.BlockSpec((1, tt, Cin), lambda b, t: (b, t, 0)),
            pl.BlockSpec((1, 1, _HALO, Cin), lambda b, t: (b, t, 0, 0)),
            _const_spec((Cin, C0p)),
            _const_spec((1, C0p)),
            _const_spec((5 * C0p, C1)),
            _const_spec((1, C1)),
            _const_spec((5, C1, C2)),
            _const_spec((1, C2)),
            _const_spec((5, C2, C3)),
            _const_spec((1, C3)),
            _const_spec((3, C3, 8)),
            _const_spec((1, 1)),
        ],
        out_specs=pl.BlockSpec((1, 1, tt), lambda b, t: (b, 0, t)),
        compiler_params=_compiler_params(),
    )(lh, x, rh,
      wpre, bpre,
      w1f, b1.reshape(1, C1).astype(f32),
      w2.astype(f32), b2.reshape(1, C2).astype(f32),
      w3.astype(f32), b3.reshape(1, C3).astype(f32),
      wpo, bo.reshape(1, 1).astype(f32))
    # torch.flatten(x, 1, -1) on (B, 1, T) == (B, T)
    return out[:, 0, :T]


# ------------------------------------------------------------------ model ----

def init_params(key, slm_hidden, slm_layers, initial_channel):
    """Deterministic synthetic parameters matching the module's __init__ shapes.

    Layout is (K, Cin, Cout); real PyTorch weights need (Cout,Cin,K)->(K,Cin,Cout).
    """
    in_ch = slm_hidden * slm_layers
    ic = initial_channel
    layer_shapes = [
        (1, in_ch, ic),        # pre:  Conv1d(in_ch, ic, 1)
        (5, ic, 2 * ic),       # convs[0]
        (5, 2 * ic, 4 * ic),   # convs[1]
        (5, 4 * ic, 4 * ic),   # convs[2]
        (3, 4 * ic, 1),        # conv_post
    ]
    params = []
    for shp in layer_shapes:
        key, kw, kb = jax.random.split(key, 3)
        fan_in = shp[0] * shp[1]
        w = jax.random.normal(kw, shp, jnp.float32) / jnp.sqrt(float(fan_in))
        b = 0.01 * jax.random.normal(kb, (shp[2],), jnp.float32)
        params.append((w, b))
    return params


def _ref_forward(x_ncw, params):
    """Pure-JAX reference matching the PyTorch module semantics (f32)."""
    (wp, bp), (w1, b1), (w2, b2), (w3, b3), (wo, bo) = params
    h = jnp.transpose(x_ncw, (0, 2, 1)).astype(jnp.float32)   # (B, T, C)

    def conv(h, w, b, pad):
        K = w.shape[0]
        T = h.shape[1]
        hp = jnp.pad(h, ((0, 0), (pad, pad), (0, 0)))
        out = sum(jnp.einsum("btc,cd->btd", hp[:, k:k + T, :], w[k]) for k in range(K))
        return out + b

    h = conv(h, wp, bp, 0)
    for (w, b) in ((w1, b1), (w2, b2), (w3, b3)):
        h = conv(h, w, b, 2)
        h = jnp.where(h >= 0, h, LRELU_SLOPE * h)
    h = conv(h, wo, bo, 1)                                    # (B, T, 1)
    return h[..., 0]


if __name__ == "__main__":
    # Small, module-consistent shapes (scaled-down slm_hidden/layers/initial_channel).
    slm_hidden, slm_layers, initial_channel = 32, 2, 16
    in_ch = slm_hidden * slm_layers  # 64

    key = jax.random.PRNGKey(0)
    kp, kx1, kx2 = jax.random.split(key, 3)
    params = init_params(kp, slm_hidden, slm_layers, initial_channel)

    # Case 1: tiny sequence, single time tile.
    B, T = 2, 16
    x1 = jax.random.normal(kx1, (B, in_ch, T), jnp.float32)   # PyTorch NCW convention
    out1 = jax.jit(wavlm_discriminator)(x1, params)
    jax.block_until_ready(out1)
    assert out1.shape == (B, T), out1.shape
    ref1 = _ref_forward(x1, params)
    assert jnp.allclose(out1, ref1, atol=3e-2, rtol=3e-2), \
        float(jnp.max(jnp.abs(out1 - ref1)))

    # Case 2: multi-tile with halo + tail masking (T not a multiple of the tile).
    B2, T2 = 2, 300
    x2 = jax.random.normal(kx2, (B2, in_ch, T2), jnp.float32)
    out2 = jax.jit(functools.partial(wavlm_discriminator, t_tile=128))(x2, params)
    jax.block_until_ready(out2)
    assert out2.shape == (B2, T2), out2.shape
    ref2 = _ref_forward(x2, params)
    assert jnp.allclose(out2, ref2, atol=3e-2, rtol=3e-2), \
        float(jnp.max(jnp.abs(out2 - ref2)))

    print("KERNEL_OK")
</pallas_src>

<mosaic_0001>
module attributes {stable_mosaic.version = 11 : i64} {
  func.func @_fused_kernel(%arg0: i32, %arg1: i32, %arg2: memref<1x1x8x64xbf16, #tpu.memory_space<vmem>>, %arg3: memref<1x16x64xbf16, #tpu.memory_space<vmem>>, %arg4: memref<1x1x8x64xbf16, #tpu.memory_space<vmem>>, %arg5: memref<64x128xf32, #tpu.memory_space<vmem>>, %arg6: memref<1x128xf32, #tpu.memory_space<vmem>>, %arg7: memref<640x32xf32, #tpu.memory_space<vmem>>, %arg8: memref<1x32xf32, #tpu.memory_space<vmem>>, %arg9: memref<5x32x64xf32, #tpu.memory_space<vmem>>, %arg10: memref<1x64xf32, #tpu.memory_space<vmem>>, %arg11: memref<5x64x64xf32, #tpu.memory_space<vmem>>, %arg12: memref<1x64xf32, #tpu.memory_space<vmem>>, %arg13: memref<3x64x8xf32, #tpu.memory_space<vmem>>, %arg14: memref<1x1xf32, #tpu.memory_space<vmem>>, %arg15: memref<1x1x16xf32, #tpu.memory_space<vmem>>) attributes {dimension_semantics = [#tpu.dimension_semantics<parallel>, #tpu.dimension_semantics<parallel>], iteration_bounds = array<i64: 2, 1>, scalar_prefetch = 0 : i64, scratch_operands = 0 : i64, tpu.core_type = #tpu.core_type<tc>, window_params = [{transform_indices = @transform_0, window_bounds = array<i64: 1, 1, 8, 64>}, {transform_indices = @transform_1, window_bounds = array<i64: 1, 16, 64>}, {transform_indices = @transform_2, window_bounds = array<i64: 1, 1, 8, 64>}, {pipeline_mode = #tpu.pipeline_mode<synchronous>, transform_indices = @transform_3, window_bounds = array<i64: 64, 128>}, {pipeline_mode = #tpu.pipeline_mode<synchronous>, transform_indices = @transform_4, window_bounds = array<i64: 1, 128>}, {pipeline_mode = #tpu.pipeline_mode<synchronous>, transform_indices = @transform_5, window_bounds = array<i64: 640, 32>}, {pipeline_mode = #tpu.pipeline_mode<synchronous>, transform_indices = @transform_6, window_bounds = array<i64: 1, 32>}, {pipeline_mode = #tpu.pipeline_mode<synchronous>, transform_indices = @transform_7, window_bounds = array<i64: 5, 32, 64>}, {pipeline_mode = #tpu.pipeline_mode<synchronous>, transform_indices = @transform_8, window_bounds = array<i64: 1, 64>}, {pipeline_mode = #tpu.pipeline_mode<synchronous>, transform_indices = @transform_9, window_bounds = array<i64: 5, 64, 64>}, {pipeline_mode = #tpu.pipeline_mode<synchronous>, transform_indices = @transform_10, window_bounds = array<i64: 1, 64>}, {pipeline_mode = #tpu.pipeline_mode<synchronous>, transform_indices = @transform_11, window_bounds = array<i64: 3, 64, 8>}, {pipeline_mode = #tpu.pipeline_mode<synchronous>, transform_indices = @transform_12, window_bounds = array<i64: 1, 1>}, {transform_indices = @transform_13, window_bounds = array<i64: 1, 1, 16>}]} {
    %c16_i32 = arith.constant 16 : i32
    %0 = arith.muli %arg1, %c16_i32 : i32
    %c0 = arith.constant 0 : index
    %c0_0 = arith.constant 0 : index
    %c0_1 = arith.constant 0 : index
    %c0_2 = arith.constant 0 : index
    %1 = vector.load %arg2[%c0, %c0_0, %c0_1, %c0_2] : memref<1x1x8x64xbf16, #tpu.memory_space<vmem>>, vector<1x1x8x64xbf16>
    %2 = vector.shape_cast %1 : vector<1x1x8x64xbf16> to vector<8x64xbf16>
    %c0_3 = arith.constant 0 : index
    %c0_4 = arith.constant 0 : index
    %c0_5 = arith.constant 0 : index
    %3 = vector.load %arg3[%c0_3, %c0_4, %c0_5] : memref<1x16x64xbf16, #tpu.memory_space<vmem>>, vector<1x16x64xbf16>
    %4 = vector.shape_cast %3 : vector<1x16x64xbf16> to vector<16x64xbf16>
    %c0_6 = arith.constant 0 : index
    %c0_7 = arith.constant 0 : index
    %c0_8 = arith.constant 0 : index
    %c0_9 = arith.constant 0 : index
    %5 = vector.load %arg4[%c0_6, %c0_7, %c0_8, %c0_9] : memref<1x1x8x64xbf16, #tpu.memory_space<vmem>>, vector<1x1x8x64xbf16>
    %6 = vector.shape_cast %5 : vector<1x1x8x64xbf16> to vector<8x64xbf16>
    %7 = tpu.concatenate %2, %4, %6 in 0 : vector<8x64xbf16>, vector<16x64xbf16>, vector<8x64xbf16> -> vector<32x64xbf16>
    %c0_10 = arith.constant 0 : index
    %c0_11 = arith.constant 0 : index
    %8 = vector.load %arg5[%c0_10, %c0_11] : memref<64x128xf32, #tpu.memory_space<vmem>>, vector<64x128xf32>
    %cst = arith.constant 0.000000e+00 : f32
    %9 = vector.broadcast %cst : f32 to vector<32x128xf32>
    %10 = arith.extf %7 : vector<32x64xbf16> to vector<32x64xf32>
    %cst_12 = arith.constant dense<0.000000e+00> : vector<32x128xf32>
    %11 = tpu.matmul %10, %8, %cst_12 {dimension_numbers = #tpu.dot_dimension_numbers<[1], [0], [0], [1], [0, 0, 1, 1], [], []>} : vector<32x64xf32>, vector<64x128xf32>, vector<32x128xf32> -> vector<32x128xf32>
    %12 = arith.addf %9, %11 : vector<32x128xf32>
    %c0_13 = arith.constant 0 : index
    %c0_14 = arith.constant 0 : index
    %13 = vector.load %arg6[%c0_13, %c0_14] : memref<1x128xf32, #tpu.memory_space<vmem>>, vector<1x128xf32>
    %14 = vector.broadcast %13 : vector<1x128xf32> to vector<32x128xf32>
    %15 = arith.addf %12, %14 : vector<32x128xf32>
    %16 = tpu.iota {dimensions = array<i32: 0>} : vector<32x1xi32>
    %c-8_i32 = arith.constant -8 : i32
    %17 = arith.addi %0, %c-8_i32 : i32
    %18 = vector.broadcast %17 : i32 to vector<32x1xi32>
    %19 = arith.addi %16, %18 : vector<32x1xi32>
    %c0_i32 = arith.constant 0 : i32
    %20 = vector.broadcast %c0_i32 : i32 to vector<32x1xi32>
    %21 = arith.cmpi sge, %19, %20 : vector<32x1xi32>
    %c16_i32_15 = arith.constant 16 : i32
    %22 = vector.broadcast %c16_i32_15 : i32 to vector<32x1xi32>
    %23 = arith.cmpi slt, %19, %22 : vector<32x1xi32>
    %24 = arith.andi %21, %23 : vector<32x1xi1>
    %cst_16 = arith.constant 0.000000e+00 : f32
    %25 = vector.shape_cast %24 : vector<32x1xi1> to vector<32x1xi1>
    %26 = vector.broadcast %25 : vector<32x1xi1> to vector<32x128xi1>
    %27 = vector.broadcast %cst_16 : f32 to vector<32x128xf32>
    %28 = arith.select %26, %15, %27 : vector<32x128xi1>, vector<32x128xf32>
    %29 = vector.extract_strided_slice %28 {offsets = [0, 0], sizes = [28, 128], strides = [1, 1]} : vector<32x128xf32> to vector<28x128xf32>
    %30 = vector.extract_strided_slice %28 {offsets = [1, 0], sizes = [28, 128], strides = [1, 1]} : vector<32x128xf32> to vector<28x128xf32>
    %31 = vector.extract_strided_slice %28 {offsets = [2, 0], sizes = [28, 128], strides = [1, 1]} : vector<32x128xf32> to vector<28x128xf32>
    %32 = vector.extract_strided_slice %28 {offsets = [3, 0], sizes = [28, 128], strides = [1, 1]} : vector<32x128xf32> to vector<28x128xf32>
    %33 = vector.extract_strided_slice %28 {offsets = [4, 0], sizes = [28, 128], strides = [1, 1]} : vector<32x128xf32> to vector<28x128xf32>
    %34 = tpu.concatenate %29, %30, %31, %32, %33 in 1 : vector<28x128xf32>, vector<28x128xf32>, vector<28x128xf32>, vector<28x128xf32>, vector<28x128xf32> -> vector<28x640xf32>
    %c0_17 = arith.constant 0 : index
    %c0_18 = arith.constant 0 : index
    %35 = vector.load %arg7[%c0_17, %c0_18] : memref<640x32xf32, #tpu.memory_space<vmem>>, vector<640x32xf32>
    %cst_19 = arith.constant dense<0.000000e+00> : vector<28x32xf32>
    %36 = tpu.matmul %34, %35, %cst_19 {dimension_numbers = #tpu.dot_dimension_numbers<[1], [0], [0], [1], [0, 0, 1, 1], [], []>} : vector<28x640xf32>, vector<640x32xf32>, vector<28x32xf32> -> vector<28x32xf32>
    %c0_20 = arith.constant 0 : index
    %c0_21 = arith.constant 0 : index
    %37 = vector.load %arg8[%c0_20, %c0_21] : memref<1x32xf32, #tpu.memory_space<vmem>>, vector<1x32xf32>
    %38 = vector.broadcast %37 : vector<1x32xf32> to vector<28x32xf32>
    %39 = arith.addf %36, %38 : vector<28x32xf32>
    %cst_22 = arith.constant 0.000000e+00 : f32
    %40 = vector.broadcast %cst_22 : f32 to vector<28x32xf32>
    %41 = arith.cmpf oge, %39, %40 : vector<28x32xf32>
    %cst_23 = arith.constant 1.000000e-01 : f32
    %42 = vector.broadcast %cst_23 : f32 to vector<28x32xf32>
    %43 = arith.mulf %42, %39 : vector<28x32xf32>
    %44 = arith.select %41, %39, %43 : vector<28x32xi1>, vector<28x32xf32>
    %45 = tpu.iota {dimensions = array<i32: 0>} : vector<28x1xi32>
    %c-6_i32 = arith.constant -6 : i32
    %46 = arith.addi %0, %c-6_i32 : i32
    %47 = vector.broadcast %46 : i32 to vector<28x1xi32>
    %48 = arith.addi %45, %47 : vector<28x1xi32>
    %c0_i32_24 = arith.constant 0 : i32
    %49 = vector.broadcast %c0_i32_24 : i32 to vector<28x1xi32>
    %50 = arith.cmpi sge, %48, %49 : vector<28x1xi32>
    %c16_i32_25 = arith.constant 16 : i32
    %51 = vector.broadcast %c16_i32_25 : i32 to vector<28x1xi32>
    %52 = arith.cmpi slt, %48, %51 : vector<28x1xi32>
    %53 = arith.andi %50, %52 : vector<28x1xi1>
    %cst_26 = arith.constant 0.000000e+00 : f32
    %54 = vector.shape_cast %53 : vector<28x1xi1> to vector<28x1xi1>
    %55 = vector.broadcast %54 : vector<28x1xi1> to vector<28x32xi1>
    %56 = vector.broadcast %cst_26 : f32 to vector<28x32xf32>
    %57 = arith.select %55, %44, %56 : vector<28x32xi1>, vector<28x32xf32>
    %cst_27 = arith.constant 0.000000e+00 : f32
    %58 = vector.broadcast %cst_27 : f32 to vector<24x64xf32>
    %59 = vector.extract_strided_slice %57 {offsets = [0, 0], sizes = [24, 32], strides = [1, 1]} : vector<28x32xf32> to vector<24x32xf32>
    %c0_28 = arith.constant 0 : index
    %c0_29 = arith.constant 0 : index
    %c0_30 = arith.constant 0 : index
    %60 = vector.load %arg9[%c0_28, %c0_29, %c0_30] : memref<5x32x64xf32, #tpu.memory_space<vmem>>, vector<1x32x64xf32>
    %61 = vector.shape_cast %60 : vector<1x32x64xf32> to vector<32x64xf32>
    %cst_31 = arith.constant dense<0.000000e+00> : vector<24x64xf32>
    %62 = tpu.matmul %59, %61, %cst_31 {dimension_numbers = #tpu.dot_dimension_numbers<[1], [0], [0], [1], [0, 0, 1, 1], [], []>} : vector<24x32xf32>, vector<32x64xf32>, vector<24x64xf32> -> vector<24x64xf32>
    %63 = arith.addf %58, %62 : vector<24x64xf32>
    %64 = vector.extract_strided_slice %57 {offsets = [1, 0], sizes = [24, 32], strides = [1, 1]} : vector<28x32xf32> to vector<24x32xf32>
    %c1 = arith.constant 1 : index
    %c0_32 = arith.constant 0 : index
    %c0_33 = arith.constant 0 : index
    %65 = vector.load %arg9[%c1, %c0_32, %c0_33] : memref<5x32x64xf32, #tpu.memory_space<vmem>>, vector<1x32x64xf32>
    %66 = vector.shape_cast %65 : vector<1x32x64xf32> to vector<32x64xf32>
    %cst_34 = arith.constant dense<0.000000e+00> : vector<24x64xf32>
    %67 = tpu.matmul %64, %66, %cst_34 {dimension_numbers = #tpu.dot_dimension_numbers<[1], [0], [0], [1], [0, 0, 1, 1], [], []>} : vector<24x32xf32>, vector<32x64xf32>, vector<24x64xf32> -> vector<24x64xf32>
    %68 = arith.addf %63, %67 : vector<24x64xf32>
    %69 = vector.extract_strided_slice %57 {offsets = [2, 0], sizes = [24, 32], strides = [1, 1]} : vector<28x32xf32> to vector<24x32xf32>
    %c2 = arith.constant 2 : index
    %c0_35 = arith.constant 0 : index
    %c0_36 = arith.constant 0 : index
    %70 = vector.load %arg9[%c2, %c0_35, %c0_36] : memref<5x32x64xf32, #tpu.memory_space<vmem>>, vector<1x32x64xf32>
    %71 = vector.shape_cast %70 : vector<1x32x64xf32> to vector<32x64xf32>
    %cst_37 = arith.constant dense<0.000000e+00> : vector<24x64xf32>
    %72 = tpu.matmul %69, %71, %cst_37 {dimension_numbers = #tpu.dot_dimension_numbers<[1], [0], [0], [1], [0, 0, 1, 1], [], []>} : vector<24x32xf32>, vector<32x64xf32>, vector<24x64xf32> -> vector<24x64xf32>
    %73 = arith.addf %68, %72 : vector<24x64xf32>
    %74 = vector.extract_strided_slice %57 {offsets = [3, 0], sizes = [24, 32], strides = [1, 1]} : vector<28x32xf32> to vector<24x32xf32>
    %c3 = arith.constant 3 : index
    %c0_38 = arith.constant 0 : index
    %c0_39 = arith.constant 0 : index
    %75 = vector.load %arg9[%c3, %c0_38, %c0_39] : memref<5x32x64xf32, #tpu.memory_space<vmem>>, vector<1x32x64xf32>
    %76 = vector.shape_cast %75 : vector<1x32x64xf32> to vector<32x64xf32>
    %cst_40 = arith.constant dense<0.000000e+00> : vector<24x64xf32>
    %77 = tpu.matmul %74, %76, %cst_40 {dimension_numbers = #tpu.dot_dimension_numbers<[1], [0], [0], [1], [0, 0, 1, 1], [], []>} : vector<24x32xf32>, vector<32x64xf32>, vector<24x64xf32> -> vector<24x64xf32>
    %78 = arith.addf %73, %77 : vector<24x64xf32>
    %79 = vector.extract_strided_slice %57 {offsets = [4, 0], sizes = [24, 32], strides = [1, 1]} : vector<28x32xf32> to vector<24x32xf32>
    %c4 = arith.constant 4 : index
    %c0_41 = arith.constant 0 : index
    %c0_42 = arith.constant 0 : index
    %80 = vector.load %arg9[%c4, %c0_41, %c0_42] : memref<5x32x64xf32, #tpu.memory_space<vmem>>, vector<1x32x64xf32>
    %81 = vector.shape_cast %80 : vector<1x32x64xf32> to vector<32x64xf32>
    %cst_43 = arith.constant dense<0.000000e+00> : vector<24x64xf32>
    %82 = tpu.matmul %79, %81, %cst_43 {dimension_numbers = #tpu.dot_dimension_numbers<[1], [0], [0], [1], [0, 0, 1, 1], [], []>} : vector<24x32xf32>, vector<32x64xf32>, vector<24x64xf32> -> vector<24x64xf32>
    %83 = arith.addf %78, %82 : vector<24x64xf32>
    %c0_44 = arith.constant 0 : index
    %c0_45 = arith.constant 0 : index
    %84 = vector.load %arg10[%c0_44, %c0_45] : memref<1x64xf32, #tpu.memory_space<vmem>>, vector<1x64xf32>
    %85 = vector.broadcast %84 : vector<1x64xf32> to vector<24x64xf32>
    %86 = arith.addf %83, %85 : vector<24x64xf32>
    %cst_46 = arith.constant 0.000000e+00 : f32
    %87 = vector.broadcast %cst_46 : f32 to vector<24x64xf32>
    %88 = arith.cmpf oge, %86, %87 : vector<24x64xf32>
    %cst_47 = arith.constant 1.000000e-01 : f32
    %89 = vector.broadcast %cst_47 : f32 to vector<24x64xf32>
    %90 = arith.mulf %89, %86 : vector<24x64xf32>
    %91 = arith.select %88, %86, %90 : vector<24x64xi1>, vector<24x64xf32>
    %92 = tpu.iota {dimensions = array<i32: 0>} : vector<24x1xi32>
    %c-4_i32 = arith.constant -4 : i32
    %93 = arith.addi %0, %c-4_i32 : i32
    %94 = vector.broadcast %93 : i32 to vector<24x1xi32>
    %95 = arith.addi %92, %94 : vector<24x1xi32>
    %c0_i32_48 = arith.constant 0 : i32
    %96 = vector.broadcast %c0_i32_48 : i32 to vector<24x1xi32>
    %97 = arith.cmpi sge, %95, %96 : vector<24x1xi32>
    %c16_i32_49 = arith.constant 16 : i32
    %98 = vector.broadcast %c16_i32_49 : i32 to vector<24x1xi32>
    %99 = arith.cmpi slt, %95, %98 : vector<24x1xi32>
    %100 = arith.andi %97, %99 : vector<24x1xi1>
    %cst_50 = arith.constant 0.000000e+00 : f32
    %101 = vector.shape_cast %100 : vector<24x1xi1> to vector<24x1xi1>
    %102 = vector.broadcast %101 : vector<24x1xi1> to vector<24x64xi1>
    %103 = vector.broadcast %cst_50 : f32 to vector<24x64xf32>
    %104 = arith.select %102, %91, %103 : vector<24x64xi1>, vector<24x64xf32>
    %cst_51 = arith.constant 0.000000e+00 : f32
    %105 = vector.broadcast %cst_51 : f32 to vector<20x64xf32>
    %106 = vector.extract_strided_slice %104 {offsets = [0, 0], sizes = [20, 64], strides = [1, 1]} : vector<24x64xf32> to vector<20x64xf32>
    %c0_52 = arith.constant 0 : index
    %c0_53 = arith.constant 0 : index
    %c0_54 = arith.constant 0 : index
    %107 = vector.load %arg11[%c0_52, %c0_53, %c0_54] : memref<5x64x64xf32, #tpu.memory_space<vmem>>, vector<1x64x64xf32>
    %108 = vector.shape_cast %107 : vector<1x64x64xf32> to vector<64x64xf32>
    %cst_55 = arith.constant dense<0.000000e+00> : vector<20x64xf32>
    %109 = tpu.matmul %106, %108, %cst_55 {dimension_numbers = #tpu.dot_dimension_numbers<[1], [0], [0], [1], [0, 0, 1, 1], [], []>} : vector<20x64xf32>, vector<64x64xf32>, vector<20x64xf32> -> vector<20x64xf32>
    %110 = arith.addf %105, %109 : vector<20x64xf32>
    %111 = vector.extract_strided_slice %104 {offsets = [1, 0], sizes = [20, 64], strides = [1, 1]} : vector<24x64xf32> to vector<20x64xf32>
    %c1_56 = arith.constant 1 : index
    %c0_57 = arith.constant 0 : index
    %c0_58 = arith.constant 0 : index
    %112 = vector.load %arg11[%c1_56, %c0_57, %c0_58] : memref<5x64x64xf32, #tpu.memory_space<vmem>>, vector<1x64x64xf32>
    %113 = vector.shape_cast %112 : vector<1x64x64xf32> to vector<64x64xf32>
    %cst_59 = arith.constant dense<0.000000e+00> : vector<20x64xf32>
    %114 = tpu.matmul %111, %113, %cst_59 {dimension_numbers = #tpu.dot_dimension_numbers<[1], [0], [0], [1], [0, 0, 1, 1], [], []>} : vector<20x64xf32>, vector<64x64xf32>, vector<20x64xf32> -> vector<20x64xf32>
    %115 = arith.addf %110, %114 : vector<20x64xf32>
    %116 = vector.extract_strided_slice %104 {offsets = [2, 0], sizes = [20, 64], strides = [1, 1]} : vector<24x64xf32> to vector<20x64xf32>
    %c2_60 = arith.constant 2 : index
    %c0_61 = arith.constant 0 : index
    %c0_62 = arith.constant 0 : index
    %117 = vector.load %arg11[%c2_60, %c0_61, %c0_62] : memref<5x64x64xf32, #tpu.memory_space<vmem>>, vector<1x64x64xf32>
    %118 = vector.shape_cast %117 : vector<1x64x64xf32> to vector<64x64xf32>
    %cst_63 = arith.constant dense<0.000000e+00> : vector<20x64xf32>
    %119 = tpu.matmul %116, %118, %cst_63 {dimension_numbers = #tpu.dot_dimension_numbers<[1], [0], [0], [1], [0, 0, 1, 1], [], []>} : vector<20x64xf32>, vector<64x64xf32>, vector<20x64xf32> -> vector<20x64xf32>
    %120 = arith.addf %115, %119 : vector<20x64xf32>
    %121 = vector.extract_strided_slice %104 {offsets = [3, 0], sizes = [20, 64], strides = [1, 1]} : vector<24x64xf32> to vector<20x64xf32>
    %c3_64 = arith.constant 3 : index
    %c0_65 = arith.constant 0 : index
    %c0_66 = arith.constant 0 : index
    %122 = vector.load %arg11[%c3_64, %c0_65, %c0_66] : memref<5x64x64xf32, #tpu.memory_space<vmem>>, vector<1x64x64xf32>
    %123 = vector.shape_cast %122 : vector<1x64x64xf32> to vector<64x64xf32>
    %cst_67 = arith.constant dense<0.000000e+00> : vector<20x64xf32>
    %124 = tpu.matmul %121, %123, %cst_67 {dimension_numbers = #tpu.dot_dimension_numbers<[1], [0], [0], [1], [0, 0, 1, 1], [], []>} : vector<20x64xf32>, vector<64x64xf32>, vector<20x64xf32> -> vector<20x64xf32>
    %125 = arith.addf %120, %124 : vector<20x64xf32>
    %126 = vector.extract_strided_slice %104 {offsets = [4, 0], sizes = [20, 64], strides = [1, 1]} : vector<24x64xf32> to vector<20x64xf32>
    %c4_68 = arith.constant 4 : index
    %c0_69 = arith.constant 0 : index
    %c0_70 = arith.constant 0 : index
    %127 = vector.load %arg11[%c4_68, %c0_69, %c0_70] : memref<5x64x64xf32, #tpu.memory_space<vmem>>, vector<1x64x64xf32>
    %128 = vector.shape_cast %127 : vector<1x64x64xf32> to vector<64x64xf32>
    %cst_71 = arith.constant dense<0.000000e+00> : vector<20x64xf32>
    %129 = tpu.matmul %126, %128, %cst_71 {dimension_numbers = #tpu.dot_dimension_numbers<[1], [0], [0], [1], [0, 0, 1, 1], [], []>} : vector<20x64xf32>, vector<64x64xf32>, vector<20x64xf32> -> vector<20x64xf32>
    %130 = arith.addf %125, %129 : vector<20x64xf32>
    %c0_72 = arith.constant 0 : index
    %c0_73 = arith.constant 0 : index
    %131 = vector.load %arg12[%c0_72, %c0_73] : memref<1x64xf32, #tpu.memory_space<vmem>>, vector<1x64xf32>
    %132 = vector.broadcast %131 : vector<1x64xf32> to vector<20x64xf32>
    %133 = arith.addf %130, %132 : vector<20x64xf32>
    %cst_74 = arith.constant 0.000000e+00 : f32
    %134 = vector.broadcast %cst_74 : f32 to vector<20x64xf32>
    %135 = arith.cmpf oge, %133, %134 : vector<20x64xf32>
    %cst_75 = arith.constant 1.000000e-01 : f32
    %136 = vector.broadcast %cst_75 : f32 to vector<20x64xf32>
    %137 = arith.mulf %136, %133 : vector<20x64xf32>
    %138 = arith.select %135, %133, %137 : vector<20x64xi1>, vector<20x64xf32>
    %139 = tpu.iota {dimensions = array<i32: 0>} : vector<20x1xi32>
    %c-2_i32 = arith.constant -2 : i32
    %140 = arith.addi %0, %c-2_i32 : i32
    %141 = vector.broadcast %140 : i32 to vector<20x1xi32>
    %142 = arith.addi %139, %141 : vector<20x1xi32>
    %c0_i32_76 = arith.constant 0 : i32
    %143 = vector.broadcast %c0_i32_76 : i32 to vector<20x1xi32>
    %144 = arith.cmpi sge, %142, %143 : vector<20x1xi32>
    %c16_i32_77 = arith.constant 16 : i32
    %145 = vector.broadcast %c16_i32_77 : i32 to vector<20x1xi32>
    %146 = arith.cmpi slt, %142, %145 : vector<20x1xi32>
    %147 = arith.andi %144, %146 : vector<20x1xi1>
    %cst_78 = arith.constant 0.000000e+00 : f32
    %148 = vector.shape_cast %147 : vector<20x1xi1> to vector<20x1xi1>
    %149 = vector.broadcast %148 : vector<20x1xi1> to vector<20x64xi1>
    %150 = vector.broadcast %cst_78 : f32 to vector<20x64xf32>
    %151 = arith.select %149, %138, %150 : vector<20x64xi1>, vector<20x64xf32>
    %cst_79 = arith.constant 0.000000e+00 : f32
    %152 = vector.broadcast %cst_79 : f32 to vector<16x8xf32>
    %153 = vector.extract_strided_slice %151 {offsets = [1, 0], sizes = [16, 64], strides = [1, 1]} : vector<20x64xf32> to vector<16x64xf32>
    %c0_80 = arith.constant 0 : index
    %c0_81 = arith.constant 0 : index
    %c0_82 = arith.constant 0 : index
    %154 = vector.load %arg13[%c0_80, %c0_81, %c0_82] : memref<3x64x8xf32, #tpu.memory_space<vmem>>, vector<1x64x8xf32>
    %155 = vector.shape_cast %154 : vector<1x64x8xf32> to vector<64x8xf32>
    %cst_83 = arith.constant dense<0.000000e+00> : vector<16x8xf32>
    %156 = tpu.matmul %153, %155, %cst_83 {dimension_numbers = #tpu.dot_dimension_numbers<[1], [0], [0], [1], [0, 0, 1, 1], [], []>} : vector<16x64xf32>, vector<64x8xf32>, vector<16x8xf32> -> vector<16x8xf32>
    %157 = arith.addf %152, %156 : vector<16x8xf32>
    %158 = vector.extract_strided_slice %151 {offsets = [2, 0], sizes = [16, 64], strides = [1, 1]} : vector<20x64xf32> to vector<16x64xf32>
    %c1_84 = arith.constant 1 : index
    %c0_85 = arith.constant 0 : index
    %c0_86 = arith.constant 0 : index
    %159 = vector.load %arg13[%c1_84, %c0_85, %c0_86] : memref<3x64x8xf32, #tpu.memory_space<vmem>>, vector<1x64x8xf32>
    %160 = vector.shape_cast %159 : vector<1x64x8xf32> to vector<64x8xf32>
    %cst_87 = arith.constant dense<0.000000e+00> : vector<16x8xf32>
    %161 = tpu.matmul %158, %160, %cst_87 {dimension_numbers = #tpu.dot_dimension_numbers<[1], [0], [0], [1], [0, 0, 1, 1], [], []>} : vector<16x64xf32>, vector<64x8xf32>, vector<16x8xf32> -> vector<16x8xf32>
    %162 = arith.addf %157, %161 : vector<16x8xf32>
    %163 = vector.extract_strided_slice %151 {offsets = [3, 0], sizes = [16, 64], strides = [1, 1]} : vector<20x64xf32> to vector<16x64xf32>
    %c2_88 = arith.constant 2 : index
    %c0_89 = arith.constant 0 : index
    %c0_90 = arith.constant 0 : index
    %164 = vector.load %arg13[%c2_88, %c0_89, %c0_90] : memref<3x64x8xf32, #tpu.memory_space<vmem>>, vector<1x64x8xf32>
    %165 = vector.shape_cast %164 : vector<1x64x8xf32> to vector<64x8xf32>
    %cst_91 = arith.constant dense<0.000000e+00> : vector<16x8xf32>
    %166 = tpu.matmul %163, %165, %cst_91 {dimension_numbers = #tpu.dot_dimension_numbers<[1], [0], [0], [1], [0, 0, 1, 1], [], []>} : vector<16x64xf32>, vector<64x8xf32>, vector<16x8xf32> -> vector<16x8xf32>
    %167 = arith.addf %162, %166 : vector<16x8xf32>
    %168 = tpu.transpose %167, [1, 0] : vector<16x8xf32> -> vector<8x16xf32>
    %169 = vector.extract_strided_slice %168 {offsets = [0, 0], sizes = [1, 16], strides = [1, 1]} : vector<8x16xf32> to vector<1x16xf32>
    %c0_92 = arith.constant 0 : index
    %c0_93 = arith.constant 0 : index
    %170 = vector.load %arg14[%c0_92, %c0_93] : memref<1x1xf32, #tpu.memory_space<vmem>>, vector<1x1xf32>
    %171 = vector.broadcast %170 : vector<1x1xf32> to vector<1x16xf32>
    %172 = arith.addf %169, %171 : vector<1x16xf32>
    %c0_94 = arith.constant 0 : index
    %c0_95 = arith.constant 0 : index
    %c0_96 = arith.constant 0 : index
    %173 = vector.load %arg15[%c0_94, %c0_95, %c0_96] : memref<1x1x16xf32, #tpu.memory_space<vmem>>, vector<1x1x16xf32>
    %174 = vector.shape_cast %173 : vector<1x1x16xf32> to vector<1x16xf32>
    %175 = vector.shape_cast %172 : vector<1x16xf32> to vector<1x1x16xf32>
    tpu.vector_store %arg15[%c0_94, %c0_95, %c0_96], %175 {strides = array<i32>} : memref<1x1x16xf32, #tpu.memory_space<vmem>>, vector<1x1x16xf32>,
    return
  }
  func.func @transform_0(%arg0: i32, %arg1: i32) -> (i32, i32, i32, i32) {
    %c0_i32 = arith.constant 0 : i32
    %c0_i32_0 = arith.constant 0 : i32
    %c0_i32_1 = arith.constant 0 : i32
    return %arg0, %arg1, %c0_i32, %c0_i32_0 : i32, i32, i32, i32
  }
  func.func @transform_1(%arg0: i32, %arg1: i32) -> (i32, i32, i32) {
    %c0_i32 = arith.constant 0 : i32
    %c0_i32_0 = arith.constant 0 : i32
    return %arg0, %arg1, %c0_i32 : i32, i32, i32
  }
  func.func @transform_2(%arg0: i32, %arg1: i32) -> (i32, i32, i32, i32) {
    %c0_i32 = arith.constant 0 : i32
    %c0_i32_0 = arith.constant 0 : i32
    %c0_i32_1 = arith.constant 0 : i32
    return %arg0, %arg1, %c0_i32, %c0_i32_0 : i32, i32, i32, i32
  }
  func.func @transform_3(%arg0: i32, %arg1: i32) -> (i32, i32) {
    %c0_i32 = arith.constant 0 : i32
    %c0_i32_0 = arith.constant 0 : i32
    %c0_i32_1 = arith.constant 0 : i32
    return %c0_i32, %c0_i32_0 : i32, i32
  }
  func.func @transform_4(%arg0: i32, %arg1: i32) -> (i32, i32) {
    %c0_i32 = arith.constant 0 : i32
    %c0_i32_0 = arith.constant 0 : i32
    %c0_i32_1 = arith.constant 0 : i32
    return %c0_i32, %c0_i32_0 : i32, i32
  }
  func.func @transform_5(%arg0: i32, %arg1: i32) -> (i32, i32) {
    %c0_i32 = arith.constant 0 : i32
    %c0_i32_0 = arith.constant 0 : i32
    %c0_i32_1 = arith.constant 0 : i32
    return %c0_i32, %c0_i32_0 : i32, i32
  }
  func.func @transform_6(%arg0: i32, %arg1: i32) -> (i32, i32) {
    %c0_i32 = arith.constant 0 : i32
    %c0_i32_0 = arith.constant 0 : i32
    %c0_i32_1 = arith.constant 0 : i32
    return %c0_i32, %c0_i32_0 : i32, i32
  }
  func.func @transform_7(%arg0: i32, %arg1: i32) -> (i32, i32, i32) {
    %c0_i32 = arith.constant 0 : i32
    %c0_i32_0 = arith.constant 0 : i32
    %c0_i32_1 = arith.constant 0 : i32
    %c0_i32_2 = arith.constant 0 : i32
    return %c0_i32, %c0_i32_0, %c0_i32_1 : i32, i32, i32
  }
  func.func @transform_8(%arg0: i32, %arg1: i32) -> (i32, i32) {
    %c0_i32 = arith.constant 0 : i32
    %c0_i32_0 = arith.constant 0 : i32
    %c0_i32_1 = arith.constant 0 : i32
    return %c0_i32, %c0_i32_0 : i32, i32
  }
  func.func @transform_9(%arg0: i32, %arg1: i32) -> (i32, i32, i32) {
    %c0_i32 = arith.constant 0 : i32
    %c0_i32_0 = arith.constant 0 : i32
    %c0_i32_1 = arith.constant 0 : i32
    %c0_i32_2 = arith.constant 0 : i32
    return %c0_i32, %c0_i32_0, %c0_i32_1 : i32, i32, i32
  }
  func.func @transform_10(%arg0: i32, %arg1: i32) -> (i32, i32) {
    %c0_i32 = arith.constant 0 : i32
    %c0_i32_0 = arith.constant 0 : i32
    %c0_i32_1 = arith.constant 0 : i32
    return %c0_i32, %c0_i32_0 : i32, i32
  }
  func.func @transform_11(%arg0: i32, %arg1: i32) -> (i32, i32, i32) {
    %c0_i32 = arith.constant 0 : i32
    %c0_i32_0 = arith.constant 0 : i32
    %c0_i32_1 = arith.constant 0 : i32
    %c0_i32_2 = arith.constant 0 : i32
    return %c0_i32, %c0_i32_0, %c0_i32_1 : i32, i32, i32
  }
  func.func @transform_12(%arg0: i32, %arg1: i32) -> (i32, i32) {
    %c0_i32 = arith.constant 0 : i32
    %c0_i32_0 = arith.constant 0 : i32
    %c0_i32_1 = arith.constant 0 : i32
    return %c0_i32, %c0_i32_0 : i32, i32
  }
  func.func @transform_13(%arg0: i32, %arg1: i32) -> (i32, i32, i32) {
    %c0_i32 = arith.constant 0 : i32
    %c0_i32_0 = arith.constant 0 : i32
    return %arg0, %c0_i32, %arg1 : i32, i32, i32
  }
}

</mosaic_0001>

<llo_original>
// kernel: wavlm_discriminator.1
$region0: #{wavlm_discriminator.1}
  #allocation0 [shape = 'u32[]', space=smem, size = 0x4, offset = 0x4, fixed_abs, tag = 'smem constant byte address 0x4 - core index']
  #allocation1 [shape = 'u32[144,128]{1,0:T(1,128)}', space=vmem, size = 0x12000, scoped, tag = 'internal scratch']
  #allocation2 [shape = 'f32[1,1]{1,0:T(1,128)S(1)}', space=vmem, size = 0x200, scoped, tag = 'scoped memory for wavlm_discriminator.1']
  %s0 = inlined_call_operand.hbm [shape: bf16[2,1,8,64], index: 0, kind: input, shape index: {}]
  %s1 = inlined_call_operand.hbm [shape: bf16[2,16,64], index: 1, kind: input, shape index: {}]
  %s2 = inlined_call_operand.hbm [shape: bf16[2,1,8,64], index: 2, kind: input, shape index: {}]
  %s3 = inlined_call_operand.hbm [shape: f32[64,128], index: 3, kind: input, shape index: {}]
  %s4 = inlined_call_operand.hbm [shape: f32[1,128], index: 4, kind: input, shape index: {}]
  %s5 = inlined_call_operand.hbm [shape: f32[640,32], index: 5, kind: input, shape index: {}]
  %s6 = inlined_call_operand.hbm [shape: f32[1,32], index: 6, kind: input, shape index: {}]
  %s7 = inlined_call_operand.hbm [shape: f32[5,32,64], index: 7, kind: input, shape index: {}]
  %s8 = inlined_call_operand.hbm [shape: f32[1,64], index: 8, kind: input, shape index: {}]
  %s9 = inlined_call_operand.hbm [shape: f32[5,64,64], index: 9, kind: input, shape index: {}]
  %s10 = inlined_call_operand.hbm [shape: f32[1,64], index: 10, kind: input, shape index: {}]
  %s11 = inlined_call_operand.hbm [shape: f32[3,64,8], index: 11, kind: input, shape index: {}]
  %s12 = inlined_call_operand.<no memory space> [shape: f32[1,1], index: 12, kind: input, shape index: {}]
  %s13 = inlined_call_operand.hbm [shape: f32[2,1,16], index: 13, kind: output, shape index: {}]
  %s14 = sld [smem:[#allocation0]]
  $region133: #{wavlm_discriminator.1} parent=0
    _
  %s16 = ssub.s32 1, %s14
  %s17 = scalar_select 0, %s16, %s14
  %v18 = vstv %s12
  %19 = vst [vmem:[#allocation2] sm:$0x1] %v18
  $region1: #{wavlm_discriminator.1} parent=0
    #allocation3 [shape = 'u8[4096]{0}', space=vmem, size = 0x1000, scoped, tag = 'input window, operand 0']
    #allocation4 [shape = 's32[2]{0}', space=sflag, size = 0x8, scoped, tag = 'scoped memory for wavlm_discriminator.1']
    #allocation5 [shape = 's32[2]{0}', space=sflag, size = 0x8, scoped, tag = 'scoped memory for wavlm_discriminator.1']
    #allocation6 [shape = 'u8[8192]{0}', space=vmem, size = 0x2000, scoped, tag = 'input window, operand 1']
    #allocation7 [shape = 's32[2]{0}', space=sflag, size = 0x8, scoped, tag = 'scoped memory for wavlm_discriminator.1']
    #allocation8 [shape = 'u8[4096]{0}', space=vmem, size = 0x1000, scoped, tag = 'input window, operand 2']
    #allocation9 [shape = 'u8[32768]{0}', space=vmem, size = 0x8000, scoped, tag = 'input window, operand 3, single buffered']
    #allocation10 [shape = 's32[1]{0}', space=sflag, size = 0x4, scoped, tag = 'scoped memory for wavlm_discriminator.1']
    #allocation11 [shape = 'u8[512]{0}', space=vmem, size = 0x400, scoped, tag = 'input window, operand 4, single buffered']
    #allocation12 [shape = 'u8[327680]{0}', space=vmem, size = 0x50000, scoped, tag = 'input window, operand 5, single buffered']
    #allocation13 [shape = 's32[1]{0}', space=sflag, size = 0x4, scoped, tag = 'scoped memory for wavlm_discriminator.1']
    #allocation14 [shape = 'u8[512]{0}', space=vmem, size = 0x400, scoped, tag = 'input window, operand 6, single buffered']
    #allocation15 [shape = 'u8[81920]{0}', space=vmem, size = 0x14000, scoped, tag = 'input window, operand 7, single buffered']
    #allocation16 [shape = 's32[1]{0}', space=sflag, size = 0x4, scoped, tag = 'scoped memory for wavlm_discriminator.1']
    #allocation17 [shape = 'u8[512]{0}', space=vmem, size = 0x400, scoped, tag = 'input window, operand 8, single buffered']
    #allocation18 [shape = 'u8[163840]{0}', space=vmem, size = 0x28000, scoped, tag = 'input window, operand 9, single buffered']
    #allocation19 [shape = 's32[1]{0}', space=sflag, size = 0x4, scoped, tag = 'scoped memory for wavlm_discriminator.1']
    #allocation20 [shape = 'u8[512]{0}', space=vmem, size = 0x400, scoped, tag = 'input window, operand 10, single buffered']
    #allocation21 [shape = 'u8[98304]{0}', space=vmem, size = 0x18000, scoped, tag = 'input window, operand 11, single buffered']
    #allocation22 [shape = 's32[1]{0}', space=sflag, size = 0x4, scoped, tag = 'scoped memory for wavlm_discriminator.1']
    #allocation23 [shape = 'u8[1024]{0}', space=vmem, size = 0x400, scoped, tag = 'output window, operand 0']
    %20 = vsyncpa [#allocation4], 0
    %s21 = scalar_lea.sflag [#allocation4], 1
    %22 = vsyncpa %s21, 0
    %23 = vsyncpa [#allocation7], 0
    %s24 = scalar_lea.sflag [#allocation7], 1
    %25 = vsyncpa %s24, 0
    %26 = vsyncpa [#allocation10], 0
    %27 = vsyncpa [#allocation13], 0
    %28 = vsyncpa [#allocation16], 0
    %29 = vsyncpa [#allocation19], 0
    %30 = vsyncpa [#allocation22], 0
    %31 = vsyncpa [#allocation5], 0
    %s32 = scalar_lea.sflag [#allocation5], 1
    %33 = vsyncpa %s32, 0
    loop: start=0, step=1, limit=4
    $region2: #{wavlm_discriminator.1} parent=1 // loop_pre_header
      _
    $region3: #{wavlm_discriminator.1} parent=1 // loop_header
      %s35 = sphi 0, %s39
      %p36 = scmp.ge.s32.totalorder %s35, 4
      %s42 = sphi 0, %s54
      %s43 = sphi 0, %s50
      %s44 = sphi 0, %s42
      %s45 = sphi 0, %s43
      %s46 = sphi 0, %s44
      %s47 = sphi 0, %s45
      %s59 = sphi 0, %s61
      %s62 = sphi 0, %s59
      %s63 = sphi 0, %s62
      %s79 = sphi 0, %s63
      %s87 = sphi 0, %s89
      %s90 = sphi 0, %s87
      %s91 = sphi 0, %s90
      %s107 = sphi 0, %s91
      %s115 = sphi 0, %s117
      %s118 = sphi 0, %s115
      %s119 = sphi 0, %s118
      %s135 = sphi 0, %s119
      %s139 = sphi 0, %s139
      %s141 = sphi 0, %s139
      %s142 = sphi 0, %s141
      %s156 = sphi 0, %s142
      %s160 = sphi 0, %s160
      %s162 = sphi 0, %s160
      %s163 = sphi 0, %s162
      %s177 = sphi 0, %s163
      %s181 = sphi 0, %s181
      %s183 = sphi 0, %s181
      %s184 = sphi 0, %s183
      %s198 = sphi 0, %s184
      %s202 = sphi 0, %s202
      %s204 = sphi 0, %s202
      %s205 = sphi 0, %s204
      %s219 = sphi 0, %s205
      %s223 = sphi 0, %s223
      %s225 = sphi 0, %s223
      %s226 = sphi 0, %s225
      %s240 = sphi 0, %s226
      %s244 = sphi 0, %s244
      %s246 = sphi 0, %s244
      %s247 = sphi 0, %s246
      %s261 = sphi 0, %s247
      %s265 = sphi 0, %s265
      %s267 = sphi 0, %s265
      %s268 = sphi 0, %s267
      %s282 = sphi 0, %s268
      %s286 = sphi 0, %s286
      %s288 = sphi 0, %s286
      %s289 = sphi 0, %s288
      %s303 = sphi 0, %s289
      %s307 = sphi 0, %s307
      %s309 = sphi 0, %s307
      %s310 = sphi 0, %s309
      %s324 = sphi 0, %s310
      %s328 = sphi 0, %s328
      %s330 = sphi 0, %s328
      %s331 = sphi 0, %s330
      %s345 = sphi 0, %s331
      %s353 = sphi 0, %s355
      %s356 = sphi 0, %s353
      %s357 = sphi 0, %s356
      %s373 = sphi 0, %s357
    $region4: #{wavlm_discriminator.1} parent=1 // loop_header_branch
      %38 = sbr.rel (%p36) target = $region8
    $region5: #{wavlm_discriminator.1} parent=1 // loop_body
      %s40 = ssub.s32 %s35, 1
      %s41 = ssub.s32 %s35, 2
      %s48 = sadd.s32 1, %s43
      %p49 = scmp.ge.s32.totalorder %s48, 1
      %s50 = scalar_select %p49, 0, %s48
      %s51 = sadd.s32 1, %s42
      %s52 = scalar_select %p49, %s51, %s42
      %p53 = scmp.ge.s32.totalorder %s52, 2
      %s54 = scalar_select %p53, 0, %s52
      %s55 = ssub.s32 %s42, %s54
      %s56 = ssub.s32 %s43, %s50
      %s57 = sor.u32 %s55, %s56
      %p58 = scmp.eq.s32.totalorder %s57, 0
      %s60 = sadd.s32 %s59, 1
      %s61 = scalar_select %p58, %s59, %s60
      %p64 = pneg %p58
      %p65 = scmp.eq.s32.totalorder %s35, 1
      %p66 = por %p64, %p65
      %p67 = scmp.ne.s32.totalorder %s59, %s62
      %p68 = scmp.eq.s32.totalorder %s35, 0
      %p69 = por %p67, %p68
      %p70 = scmp.ne.s32.totalorder %s59, %s62
      %p71 = scmp.eq.s32.totalorder %s40, 1
      %p72 = por %p70, %p71
      %p73 = scmp.ne.s32.totalorder %s62, %s63
      %p74 = scmp.eq.s32.totalorder %s40, 0
      %p75 = por %p73, %p74
      %p76 = scmp.ne.s32.totalorder %s62, %s63
      %p77 = scmp.eq.s32.totalorder %s41, 1
      %p78 = por %p76, %p77
      %p80 = scmp.ne.s32.totalorder %s63, %s79
      %p81 = scmp.eq.s32.totalorder %s41, 0
      %p82 = por %p80, %p81
      %s83 = ssub.s32 %s42, %s54
      %s84 = ssub.s32 %s43, %s50
      %s85 = sor.u32 %s83, %s84
      %p86 = scmp.eq.s32.totalorder %s85, 0
      %s88 = sadd.s32 %s87, 1
      %s89 = scalar_select %p86, %s87, %s88
      %p92 = pneg %p86
      %p93 = scmp.eq.s32.totalorder %s35, 1
      %p94 = por %p92, %p93
      %p95 = scmp.ne.s32.totalorder %s87, %s90
      %p96 = scmp.eq.s32.totalorder %s35, 0
      %p97 = por %p95, %p96
      %p98 = scmp.ne.s32.totalorder %s87, %s90
      %p99 = scmp.eq.s32.totalorder %s40, 1
      %p100 = por %p98, %p99
      %p101 = scmp.ne.s32.totalorder %s90, %s91
      %p102 = scmp.eq.s32.totalorder %s40, 0
      %p103 = por %p101, %p102
      %p104 = scmp.ne.s32.totalorder %s90, %s91
      %p105 = scmp.eq.s32.totalorder %s41, 1
      %p106 = por %p104, %p105
      %p108 = scmp.ne.s32.totalorder %s91, %s107
      %p109 = scmp.eq.s32.totalorder %s41, 0
      %p110 = por %p108, %p109
      %s111 = ssub.s32 %s42, %s54
      %s112 = ssub.s32 %s43, %s50
      %s113 = sor.u32 %s111, %s112
      %p114 = scmp.eq.s32.totalorder %s113, 0
      %s116 = sadd.s32 %s115, 1
      %s117 = scalar_select %p114, %s115, %s116
      %p120 = pneg %p114
      %p121 = scmp.eq.s32.totalorder %s35, 1
      %p122 = por %p120, %p121
      %p123 = scmp.ne.s32.totalorder %s115, %s118
      %p124 = scmp.eq.s32.totalorder %s35, 0
      %p125 = por %p123, %p124
      %p126 = scmp.ne.s32.totalorder %s115, %s118
      %p127 = scmp.eq.s32.totalorder %s40, 1
      %p128 = por %p126, %p127
      %p129 = scmp.ne.s32.totalorder %s118, %s119
      %p130 = scmp.eq.s32.totalorder %s40, 0
      %p131 = por %p129, %p130
      %p132 = scmp.ne.s32.totalorder %s118, %s119
      %p133 = scmp.eq.s32.totalorder %s41, 1
      %p134 = por %p132, %p133
      %p136 = scmp.ne.s32.totalorder %s119, %s135
      %p137 = scmp.eq.s32.totalorder %s41, 0
      %p138 = por %p136, %p137
      %s140 = sadd.s32 %s139, 1
      %p143 = scmp.eq.s32.totalorder %s35, 1
      %p144 = scmp.ne.s32.totalorder %s139, %s141
      %p145 = scmp.eq.s32.totalorder %s35, 0
      %p146 = por %p144, %p145
      %p147 = scmp.ne.s32.totalorder %s139, %s141
      %p148 = scmp.eq.s32.totalorder %s40, 1
      %p149 = por %p147, %p148
      %p150 = scmp.ne.s32.totalorder %s141, %s142
      %p151 = scmp.eq.s32.totalorder %s40, 0
      %p152 = por %p150, %p151
      %p153 = scmp.ne.s32.totalorder %s141, %s142
      %p154 = scmp.eq.s32.totalorder %s41, 1
      %p155 = por %p153, %p154
      %p157 = scmp.ne.s32.totalorder %s142, %s156
      %p158 = scmp.eq.s32.totalorder %s41, 0
      %p159 = por %p157, %p158
      %s161 = sadd.s32 %s160, 1
      %p164 = scmp.eq.s32.totalorder %s35, 1
      %p165 = scmp.ne.s32.totalorder %s160, %s162
      %p166 = scmp.eq.s32.totalorder %s35, 0
      %p167 = por %p165, %p166
      %p168 = scmp.ne.s32.totalorder %s160, %s162
      %p169 = scmp.eq.s32.totalorder %s40, 1
      %p170 = por %p168, %p169
      %p171 = scmp.ne.s32.totalorder %s162, %s163
      %p172 = scmp.eq.s32.totalorder %s40, 0
      %p173 = por %p171, %p172
      %p174 = scmp.ne.s32.totalorder %s162, %s163
      %p175 = scmp.eq.s32.totalorder %s41, 1
      %p176 = por %p174, %p175
      %p178 = scmp.ne.s32.totalorder %s163, %s177
      %p179 = scmp.eq.s32.totalorder %s41, 0
      %p180 = por %p178, %p179
      %s182 = sadd.s32 %s181, 1
      %p185 = scmp.eq.s32.totalorder %s35, 1
      %p186 = scmp.ne.s32.totalorder %s181, %s183
      %p187 = scmp.eq.s32.totalorder %s35, 0
      %p188 = por %p186, %p187
      %p189 = scmp.ne.s32.totalorder %s181, %s183
      %p190 = scmp.eq.s32.totalorder %s40, 1
      %p191 = por %p189, %p190
      %p192 = scmp.ne.s32.totalorder %s183, %s184
      %p193 = scmp.eq.s32.totalorder %s40, 0
      %p194 = por %p192, %p193
      %p195 = scmp.ne.s32.totalorder %s183, %s184
      %p196 = scmp.eq.s32.totalorder %s41, 1
      %p197 = por %p195, %p196
      %p199 = scmp.ne.s32.totalorder %s184, %s198
      %p200 = scmp.eq.s32.totalorder %s41, 0
      %p201 = por %p199, %p200
      %s203 = sadd.s32 %s202, 1
      %p206 = scmp.eq.s32.totalorder %s35, 1
      %p207 = scmp.ne.s32.totalorder %s202, %s204
      %p208 = scmp.eq.s32.totalorder %s35, 0
      %p209 = por %p207, %p208
      %p210 = scmp.ne.s32.totalorder %s202, %s204
      %p211 = scmp.eq.s32.totalorder %s40, 1
      %p212 = por %p210, %p211
      %p213 = scmp.ne.s32.totalorder %s204, %s205
      %p214 = scmp.eq.s32.totalorder %s40, 0
      %p215 = por %p213, %p214
      %p216 = scmp.ne.s32.totalorder %s204, %s205
      %p217 = scmp.eq.s32.totalorder %s41, 1
      %p218 = por %p216, %p217
      %p220 = scmp.ne.s32.totalorder %s205, %s219
      %p221 = scmp.eq.s32.totalorder %s41, 0
      %p222 = por %p220, %p221
      %s224 = sadd.s32 %s223, 1
      %p227 = scmp.eq.s32.totalorder %s35, 1
      %p228 = scmp.ne.s32.totalorder %s223, %s225
      %p229 = scmp.eq.s32.totalorder %s35, 0
      %p230 = por %p228, %p229
      %p231 = scmp.ne.s32.totalorder %s223, %s225
      %p232 = scmp.eq.s32.totalorder %s40, 1
      %p233 = por %p231, %p232
      %p234 = scmp.ne.s32.totalorder %s225, %s226
      %p235 = scmp.eq.s32.totalorder %s40, 0
      %p236 = por %p234, %p235
      %p237 = scmp.ne.s32.totalorder %s225, %s226
      %p238 = scmp.eq.s32.totalorder %s41, 1
      %p239 = por %p237, %p238
      %p241 = scmp.ne.s32.totalorder %s226, %s240
      %p242 = scmp.eq.s32.totalorder %s41, 0
      %p243 = por %p241, %p242
      %s245 = sadd.s32 %s244, 1
      %p248 = scmp.eq.s32.totalorder %s35, 1
      %p249 = scmp.ne.s32.totalorder %s244, %s246
      %p250 = scmp.eq.s32.totalorder %s35, 0
      %p251 = por %p249, %p250
      %p252 = scmp.ne.s32.totalorder %s244, %s246
      %p253 = scmp.eq.s32.totalorder %s40, 1
      %p254 = por %p252, %p253
      %p255 = scmp.ne.s32.totalorder %s246, %s247
      %p256 = scmp.eq.s32.totalorder %s40, 0
      %p257 = por %p255, %p256
      %p258 = scmp.ne.s32.totalorder %s246, %s247
      %p259 = scmp.eq.s32.totalorder %s41, 1
      %p260 = por %p258, %p259
      %p262 = scmp.ne.s32.totalorder %s247, %s261
      %p263 = scmp.eq.s32.totalorder %s41, 0
      %p264 = por %p262, %p263
      %s266 = sadd.s32 %s265, 1
      %p269 = scmp.eq.s32.totalorder %s35, 1
      %p270 = scmp.ne.s32.totalorder %s265, %s267
      %p271 = scmp.eq.s32.totalorder %s35, 0
      %p272 = por %p270, %p271
      %p273 = scmp.ne.s32.totalorder %s265, %s267
      %p274 = scmp.eq.s32.totalorder %s40, 1
      %p275 = por %p273, %p274
      %p276 = scmp.ne.s32.totalorder %s267, %s268
      %p277 = scmp.eq.s32.totalorder %s40, 0
      %p278 = por %p276, %p277
      %p279 = scmp.ne.s32.totalorder %s267, %s268
      %p280 = scmp.eq.s32.totalorder %s41, 1
      %p281 = por %p279, %p280
      %p283 = scmp.ne.s32.totalorder %s268, %s282
      %p284 = scmp.eq.s32.totalorder %s41, 0
      %p285 = por %p283, %p284
      %s287 = sadd.s32 %s286, 1
      %p290 = scmp.eq.s32.totalorder %s35, 1
      %p291 = scmp.ne.s32.totalorder %s286, %s288
      %p292 = scmp.eq.s32.totalorder %s35, 0
      %p293 = por %p291, %p292
      %p294 = scmp.ne.s32.totalorder %s286, %s288
      %p295 = scmp.eq.s32.totalorder %s40, 1
      %p296 = por %p294, %p295
      %p297 = scmp.ne.s32.totalorder %s288, %s289
      %p298 = scmp.eq.s32.totalorder %s40, 0
      %p299 = por %p297, %p298
      %p300 = scmp.ne.s32.totalorder %s288, %s289
      %p301 = scmp.eq.s32.totalorder %s41, 1
      %p302 = por %p300, %p301
      %p304 = scmp.ne.s32.totalorder %s289, %s303
      %p305 = scmp.eq.s32.totalorder %s41, 0
      %p306 = por %p304, %p305
      %s308 = sadd.s32 %s307, 1
      %p311 = scmp.eq.s32.totalorder %s35, 1
      %p312 = scmp.ne.s32.totalorder %s307, %s309
      %p313 = scmp.eq.s32.totalorder %s35, 0
      %p314 = por %p312, %p313
      %p315 = scmp.ne.s32.totalorder %s307, %s309
      %p316 = scmp.eq.s32.totalorder %s40, 1
      %p317 = por %p315, %p316
      %p318 = scmp.ne.s32.totalorder %s309, %s310
      %p319 = scmp.eq.s32.totalorder %s40, 0
      %p320 = por %p318, %p319
      %p321 = scmp.ne.s32.totalorder %s309, %s310
      %p322 = scmp.eq.s32.totalorder %s41, 1
      %p323 = por %p321, %p322
      %p325 = scmp.ne.s32.totalorder %s310, %s324
      %p326 = scmp.eq.s32.totalorder %s41, 0
      %p327 = por %p325, %p326
      %s329 = sadd.s32 %s328, 1
      %p332 = scmp.eq.s32.totalorder %s35, 1
      %p333 = scmp.ne.s32.totalorder %s328, %s330
      %p334 = scmp.eq.s32.totalorder %s35, 0
      %p335 = por %p333, %p334
      %p336 = scmp.ne.s32.totalorder %s328, %s330
      %p337 = scmp.eq.s32.totalorder %s40, 1
      %p338 = por %p336, %p337
      %p339 = scmp.ne.s32.totalorder %s330, %s331
      %p340 = scmp.eq.s32.totalorder %s40, 0
      %p341 = por %p339, %p340
      %p342 = scmp.ne.s32.totalorder %s330, %s331
      %p343 = scmp.eq.s32.totalorder %s41, 1
      %p344 = por %p342, %p343
      %p346 = scmp.ne.s32.totalorder %s331, %s345
      %p347 = scmp.eq.s32.totalorder %s41, 0
      %p348 = por %p346, %p347
      %s349 = ssub.s32 %s42, %s54
      %s350 = ssub.s32 %s43, %s50
      %s351 = sor.u32 %s349, %s350
      %p352 = scmp.eq.s32.totalorder %s351, 0
      %s354 = sadd.s32 %s353, 1
      %s355 = scalar_select %p352, %s353, %s354
      %p358 = pneg %p352
      %p359 = scmp.eq.s32.totalorder %s35, 1
      %p360 = por %p358, %p359
      %p361 = scmp.ne.s32.totalorder %s353, %s356
      %p362 = scmp.eq.s32.totalorder %s35, 0
      %p363 = por %p361, %p362
      %p364 = scmp.ne.s32.totalorder %s353, %s356
      %p365 = scmp.eq.s32.totalorder %s40, 1
      %p366 = por %p364, %p365
      %p367 = scmp.ne.s32.totalorder %s356, %s357
      %p368 = scmp.eq.s32.totalorder %s40, 0
      %p369 = por %p367, %p368
      %p370 = scmp.ne.s32.totalorder %s356, %s357
      %p371 = scmp.eq.s32.totalorder %s41, 1
      %p372 = por %p370, %p371
      %p374 = scmp.ne.s32.totalorder %s357, %s373
      %p375 = scmp.eq.s32.totalorder %s41, 0
      %p376 = por %p374, %p375
      %p377 = scmp.le.s32.totalorder 1, %s35
      %p378 = scmp.lt.s32.totalorder %s35, 3
      %p379 = pnand %p377, %p378
      %p380 = pneg %p379
      // Predicated region
      $region9: #{wavlm_discriminator.1} parent=5 // pred_check
        _
      $region10: #{wavlm_discriminator.1} parent=5 // pred_check_branch
        %382 = sbr.rel (%p379) target = $region12
      $region11: #{wavlm_discriminator.1} parent=5 // pred_region
        %s383 = ssub.s32 %s35, 1
        // Predicated region
        $region13: #{wavlm_discriminator.1} parent=11 // pred_check
          %p384 = pneg %p152
        $region14: #{wavlm_discriminator.1} parent=11 // pred_check_branch
          %386 = sbr.rel (%p384) target = $region16
        $region15: #{wavlm_discriminator.1} parent=11 // pred_region
          %s388 = ssub.s32 1024, 1024
          %389 = vsyncadd [#allocation10], %s388
          %s390 = sshll.u32 [#allocation9], 4
          %s391 = int_to_ptr.vmem [resolvable:$true] %s390
          %396 = dma.hbm_to_vmem [thread:$0]  %s3, 1024, %s391, [#allocation10], 128, 128, 8
        $region16: #{wavlm_discriminator.1} parent=11 // pred_fallthru
          _
        // Predicated region
        $region17: #{wavlm_discriminator.1} parent=11 // pred_check
          %p397 = pneg %p173
        $region18: #{wavlm_discriminator.1} parent=11 // pred_check_branch
          %399 = sbr.rel (%p397) target = $region20
        $region19: #{wavlm_discriminator.1} parent=11 // pred_region
          %s401 = ssub.s32 16, 16
          %402 = vsyncadd [#allocation10], %s401
          %s404 = sshll.u32 [#allocation11], 4
          %s405 = int_to_ptr.vmem [resolvable:$true] %s404
          %407 = dma.hbm_to_vmem [thread:$0]  %s4, 16, %s405, [#allocation10]
        $region20: #{wavlm_discriminator.1} parent=11 // pred_fallthru
          _
        // Predicated region
        $region21: #{wavlm_discriminator.1} parent=11 // pred_check
          %p408 = pneg %p194
        $region22: #{wavlm_discriminator.1} parent=11 // pred_check_branch
          %410 = sbr.rel (%p408) target = $region24
        $region23: #{wavlm_discriminator.1} parent=11 // pred_region
          %s412 = ssub.s32 10240, 10240
          %413 = vsyncadd [#allocation13], %s412
          %s414 = sshll.u32 [#allocation12], 4
          %s415 = int_to_ptr.vmem [resolvable:$true] %s414
          %420 = dma.hbm_to_vmem [thread:$0]  %s5, 10240, %s415, [#allocation13], 128, 128, 8
        $region24: #{wavlm_discriminator.1} parent=11 // pred_fallthru
          _
        // Predicated region
        $region25: #{wavlm_discriminator.1} parent=11 // pred_check
          %p421 = pneg %p215
        $region26: #{wavlm_discriminator.1} parent=11 // pred_check_branch
          %423 = sbr.rel (%p421) target = $region28
        $region27: #{wavlm_discriminator.1} parent=11 // pred_region
          %s425 = ssub.s32 16, 16
          %426 = vsyncadd [#allocation13], %s425
          %s428 = sshll.u32 [#allocation14], 4
          %s429 = int_to_ptr.vmem [resolvable:$true] %s428
          %431 = dma.hbm_to_vmem [thread:$0]  %s6, 16, %s429, [#allocation13]
        $region28: #{wavlm_discriminator.1} parent=11 // pred_fallthru
          _
        // Predicated region
        $region29: #{wavlm_discriminator.1} parent=11 // pred_check
          %p432 = pneg %p236
        $region30: #{wavlm_discriminator.1} parent=11 // pred_check_branch
          %434 = sbr.rel (%p432) target = $region32
        $region31: #{wavlm_discriminator.1} parent=11 // pred_region
          %s436 = ssub.s32 2560, 2560
          %437 = vsyncadd [#allocation16], %s436
          %s438 = sshll.u32 [#allocation15], 4
          %s439 = int_to_ptr.vmem [resolvable:$true] %s438
          %444 = dma.hbm_to_vmem [thread:$0]  %s7, 2560, %s439, [#allocation16], 128, 128, 8
        $region32: #{wavlm_discriminator.1} parent=11 // pred_fallthru
          _
        // Predicated region
        $region33: #{wavlm_discriminator.1} parent=11 // pred_check
          %p445 = pneg %p257
        $region34: #{wavlm_discriminator.1} parent=11 // pred_check_branch
          %447 = sbr.rel (%p445) target = $region36
        $region35: #{wavlm_discriminator.1} parent=11 // pred_region
          %s449 = ssub.s32 16, 16
          %450 = vsyncadd [#allocation16], %s449
          %s452 = sshll.u32 [#allocation17], 4
          %s453 = int_to_ptr.vmem [resolvable:$true] %s452
          %455 = dma.hbm_to_vmem [thread:$0]  %s8, 16, %s453, [#allocation16]
        $region36: #{wavlm_discriminator.1} parent=11 // pred_fallthru
          _
        // Predicated region
        $region37: #{wavlm_discriminator.1} parent=11 // pred_check
          %p456 = pneg %p278
        $region38: #{wavlm_discriminator.1} parent=11 // pred_check_branch
          %458 = sbr.rel (%p456) target = $region40
        $region39: #{wavlm_discriminator.1} parent=11 // pred_region
          %s460 = ssub.s32 5120, 5120
          %461 = vsyncadd [#allocation19], %s460
          %s462 = sshll.u32 [#allocation18], 4
          %s463 = int_to_ptr.vmem [resolvable:$true] %s462
          %468 = dma.hbm_to_vmem [thread:$0]  %s9, 5120, %s463, [#allocation19], 128, 128, 8
        $region40: #{wavlm_discriminator.1} parent=11 // pred_fallthru
          _
        // Predicated region
        $region41: #{wavlm_discriminator.1} parent=11 // pred_check
          %p469 = pneg %p299
        $region42: #{wavlm_discriminator.1} parent=11 // pred_check_branch
          %471 = sbr.rel (%p469) target = $region44
        $region43: #{wavlm_discriminator.1} parent=11 // pred_region
          %s473 = ssub.s32 16, 16
          %474 = vsyncadd [#allocation19], %s473
          %s476 = sshll.u32 [#allocation20], 4
          %s477 = int_to_ptr.vmem [resolvable:$true] %s476
          %479 = dma.hbm_to_vmem [thread:$0]  %s10, 16, %s477, [#allocation19]
        $region44: #{wavlm_discriminator.1} parent=11 // pred_fallthru
          _
        // Predicated region
        $region45: #{wavlm_discriminator.1} parent=11 // pred_check
          %p480 = pneg %p320
        $region46: #{wavlm_discriminator.1} parent=11 // pred_check_branch
          %482 = sbr.rel (%p480) target = $region48
        $region47: #{wavlm_discriminator.1} parent=11 // pred_region
          %s484 = ssub.s32 3072, 3072
          %485 = vsyncadd [#allocation22], %s484
          %s486 = sshll.u32 [#allocation21], 4
          %s487 = int_to_ptr.vmem [resolvable:$true] %s486
          %492 = dma.hbm_to_vmem [thread:$0]  %s11, 3072, %s487, [#allocation22], 128, 128, 8
        $region48: #{wavlm_discriminator.1} parent=11 // pred_fallthru
          _
        // Predicated region
        $region49: #{wavlm_discriminator.1} parent=11 // pred_check
          %p493 = pneg %p341
        $region50: #{wavlm_discriminator.1} parent=11 // pred_check_branch
          %495 = sbr.rel (%p493) target = $region52
        $region51: #{wavlm_discriminator.1} parent=11 // pred_region
          _
        $region52: #{wavlm_discriminator.1} parent=11 // pred_fallthru
          _
      $region12: #{wavlm_discriminator.1} parent=5 // pred_fallthru
        _
      %p496 = scmp.lt.s32.totalorder %s35, 2
      // Predicated region
      $region53: #{wavlm_discriminator.1} parent=5 // pred_check
        %p497 = pneg %p496
      $region54: #{wavlm_discriminator.1} parent=5 // pred_check_branch
        %499 = sbr.rel (%p497) target = $region56
      $region55: #{wavlm_discriminator.1} parent=5 // pred_region
        // Predicated region
        $region57: #{wavlm_discriminator.1} parent=55 // pred_check
          %p500 = pneg %p69
        $region58: #{wavlm_discriminator.1} parent=55 // pred_check_branch
          %502 = sbr.rel (%p500) target = $region60
        $region59: #{wavlm_discriminator.1} parent=55 // pred_region
          %s503 = sand.u32 %s59, 1
          %s504 = scalar_lea.sflag [#allocation4], %s503
          %s505 = sand.u32 %s59, 1
          %s506 = smul.addr %s505, 4
          %s507 = scalar_lea.vmem [#allocation3], %s506
          %s509 = ssub.s32 64, 64
          %510 = vsyncadd %s504, %s509
          %s511 = sadd.s32 %s43, %s42
          %s512 = smul.addr %s511, 64
          %s513 = scalar_lea.hbm %s0, %s512
          %s515 = sshll.u32 %s507, 4
          %s516 = int_to_ptr.vmem [resolvable:$true] %s515
          %518 = dma.hbm_to_vmem [thread:$0]  %s513, 64, %s516, %s504
        $region60: #{wavlm_discriminator.1} parent=55 // pred_fallthru
          _
        // Predicated region
        $region61: #{wavlm_discriminator.1} parent=55 // pred_check
          %p519 = pneg %p97
        $region62: #{wavlm_discriminator.1} parent=55 // pred_check_branch
          %521 = sbr.rel (%p519) target = $region64
        $region63: #{wavlm_discriminator.1} parent=55 // pred_region
          %s522 = sand.u32 %s35, 1
          %s523 = scalar_lea.sflag [#allocation7], %s522
          %s524 = sand.u32 %s87, 1
          %s525 = smul.addr %s524, 8
          %s526 = scalar_lea.vmem [#allocation6], %s525
          %s527 = smul.u32 2, %s43
          %s529 = ssub.s32 128, 128
          %530 = vsyncadd %s523, %s529
          %s531 = smul.addr %s42, 2
          %s532 = sadd.s32 %s527, %s531
          %s533 = smul.addr %s532, 64
          %s534 = scalar_lea.hbm %s1, %s533
          %s535 = sshll.u32 %s526, 4
          %s536 = int_to_ptr.vmem [resolvable:$true] %s535
          %541 = dma.hbm_to_vmem [thread:$0]  %s534, 128, %s536, %s523, 64, 64, 4
        $region64: #{wavlm_discriminator.1} parent=55 // pred_fallthru
          _
        // Predicated region
        $region65: #{wavlm_discriminator.1} parent=55 // pred_check
          %p542 = pneg %p125
        $region66: #{wavlm_discriminator.1} parent=55 // pred_check_branch
          %544 = sbr.rel (%p542) target = $region68
        $region67: #{wavlm_discriminator.1} parent=55 // pred_region
          %s545 = sand.u32 %s35, 1
          %s546 = scalar_lea.sflag [#allocation7], %s545
          %s547 = sand.u32 %s115, 1
          %s548 = smul.addr %s547, 4
          %s549 = scalar_lea.vmem [#allocation8], %s548
          %s551 = ssub.s32 64, 64
          %552 = vsyncadd %s546, %s551
          %s553 = sadd.s32 %s43, %s42
          %s554 = smul.addr %s553, 64
          %s555 = scalar_lea.hbm %s2, %s554
          %s557 = sshll.u32 %s549, 4
          %s558 = int_to_ptr.vmem [resolvable:$true] %s557
          %560 = dma.hbm_to_vmem [thread:$0]  %s555, 64, %s558, %s546
        $region68: #{wavlm_discriminator.1} parent=55 // pred_fallthru
          _
      $region56: #{wavlm_discriminator.1} parent=5 // pred_fallthru
        _
      %p561 = scmp.le.s32.totalorder 1, %s35
      %p562 = scmp.lt.s32.totalorder %s35, 3
      %p563 = pnand %p561, %p562
      %p564 = pneg %p563
      // Predicated region
      $region69: #{wavlm_discriminator.1} parent=5 // pred_check
        _
      $region70: #{wavlm_discriminator.1} parent=5 // pred_check_branch
        %566 = sbr.rel (%p563) target = $region72
      $region71: #{wavlm_discriminator.1} parent=5 // pred_region
        %s567 = ssub.s32 %s35, 1
        %s568 = sand.u32 %s62, 1
        %s569 = scalar_lea.sflag [#allocation4], %s568
        %s570 = sand.u32 %s62, 1
        %s571 = smul.addr %s570, 4
        %s572 = scalar_lea.vmem [#allocation3], %s571
        // Predicated region
        $region73: #{wavlm_discriminator.1} parent=71 // pred_check
          %p573 = pneg %p75
        $region74: #{wavlm_discriminator.1} parent=71 // pred_check_branch
          %575 = sbr.rel (%p573) target = $region76
        $region75: #{wavlm_discriminator.1} parent=71 // pred_region
          %576 = dma.done %s569, 64
        $region76: #{wavlm_discriminator.1} parent=71 // pred_fallthru
          _
        %s577 = sand.u32 %s40, 1
        %s578 = scalar_lea.sflag [#allocation7], %s577
        %s579 = sand.u32 %s90, 1
        %s580 = smul.addr %s579, 8
        %s581 = scalar_lea.vmem [#allocation6], %s580
        // Predicated region
        $region77: #{wavlm_discriminator.1} parent=71 // pred_check
          %p582 = pneg %p103
        $region78: #{wavlm_discriminator.1} parent=71 // pred_check_branch
          %584 = sbr.rel (%p582) target = $region80
        $region79: #{wavlm_discriminator.1} parent=71 // pred_region
          %585 = dma.done %s578, 128
        $region80: #{wavlm_discriminator.1} parent=71 // pred_fallthru
          _
        %s586 = sand.u32 %s40, 1
        %s587 = scalar_lea.sflag [#allocation7], %s586
        %s588 = sand.u32 %s118, 1
        %s589 = smul.addr %s588, 4
        %s590 = scalar_lea.vmem [#allocation8], %s589
        // Predicated region
        $region81: #{wavlm_discriminator.1} parent=71 // pred_check
          %p591 = pneg %p131
        $region82: #{wavlm_discriminator.1} parent=71 // pred_check_branch
          %593 = sbr.rel (%p591) target = $region84
        $region83: #{wavlm_discriminator.1} parent=71 // pred_region
          %594 = dma.done %s587, 64
        $region84: #{wavlm_discriminator.1} parent=71 // pred_fallthru
          _
        // Predicated region
        $region85: #{wavlm_discriminator.1} parent=71 // pred_check
          %p595 = pneg %p152
        $region86: #{wavlm_discriminator.1} parent=71 // pred_check_branch
          %597 = sbr.rel (%p595) target = $region88
        $region87: #{wavlm_discriminator.1} parent=71 // pred_region
          %598 = dma.done [#allocation10], 1024
        $region88: #{wavlm_discriminator.1} parent=71 // pred_fallthru
          _
        // Predicated region
        $region89: #{wavlm_discriminator.1} parent=71 // pred_check
          %p599 = pneg %p173
        $region90: #{wavlm_discriminator.1} parent=71 // pred_check_branch
          %601 = sbr.rel (%p599) target = $region92
        $region91: #{wavlm_discriminator.1} parent=71 // pred_region
          %602 = dma.done [#allocation10], 16
        $region92: #{wavlm_discriminator.1} parent=71 // pred_fallthru
          _
        // Predicated region
        $region93: #{wavlm_discriminator.1} parent=71 // pred_check
          %p603 = pneg %p194
        $region94: #{wavlm_discriminator.1} parent=71 // pred_check_branch
          %605 = sbr.rel (%p603) target = $region96
        $region95: #{wavlm_discriminator.1} parent=71 // pred_region
          %606 = dma.done [#allocation13], 10240
        $region96: #{wavlm_discriminator.1} parent=71 // pred_fallthru
          _
        // Predicated region
        $region97: #{wavlm_discriminator.1} parent=71 // pred_check
          %p607 = pneg %p215
        $region98: #{wavlm_discriminator.1} parent=71 // pred_check_branch
          %609 = sbr.rel (%p607) target = $region100
        $region99: #{wavlm_discriminator.1} parent=71 // pred_region
          %610 = dma.done [#allocation13], 16
        $region100: #{wavlm_discriminator.1} parent=71 // pred_fallthru
          _
        // Predicated region
        $region101: #{wavlm_discriminator.1} parent=71 // pred_check
          %p611 = pneg %p236
        $region102: #{wavlm_discriminator.1} parent=71 // pred_check_branch
          %613 = sbr.rel (%p611) target = $region104
        $region103: #{wavlm_discriminator.1} parent=71 // pred_region
          %614 = dma.done [#allocation16], 2560
        $region104: #{wavlm_discriminator.1} parent=71 // pred_fallthru
          _
        // Predicated region
        $region105: #{wavlm_discriminator.1} parent=71 // pred_check
          %p615 = pneg %p257
        $region106: #{wavlm_discriminator.1} parent=71 // pred_check_branch
          %617 = sbr.rel (%p615) target = $region108
        $region107: #{wavlm_discriminator.1} parent=71 // pred_region
          %618 = dma.done [#allocation16], 16
        $region108: #{wavlm_discriminator.1} parent=71 // pred_fallthru
          _
        // Predicated region
        $region109: #{wavlm_discriminator.1} parent=71 // pred_check
          %p619 = pneg %p278
        $region110: #{wavlm_discriminator.1} parent=71 // pred_check_branch
          %621 = sbr.rel (%p619) target = $region112
        $region111: #{wavlm_discriminator.1} parent=71 // pred_region
          %622 = dma.done [#allocation19], 5120
        $region112: #{wavlm_discriminator.1} parent=71 // pred_fallthru
          _
        // Predicated region
        $region113: #{wavlm_discriminator.1} parent=71 // pred_check
          %p623 = pneg %p299
        $region114: #{wavlm_discriminator.1} parent=71 // pred_check_branch
          %625 = sbr.rel (%p623) target = $region116
        $region115: #{wavlm_discriminator.1} parent=71 // pred_region
          %626 = dma.done [#allocation19], 16
        $region116: #{wavlm_discriminator.1} parent=71 // pred_fallthru
          _
        // Predicated region
        $region117: #{wavlm_discriminator.1} parent=71 // pred_check
          %p627 = pneg %p320
        $region118: #{wavlm_discriminator.1} parent=71 // pred_check_branch
          %629 = sbr.rel (%p627) target = $region120
        $region119: #{wavlm_discriminator.1} parent=71 // pred_region
          %630 = dma.done [#allocation22], 3072
        $region120: #{wavlm_discriminator.1} parent=71 // pred_fallthru
          _
        %s631 = sand.u32 %s62, 1
        %s632 = scalar_lea.sflag [#allocation4], %s631
        %s633 = sand.u32 %s62, 1
        %s634 = smul.addr %s633, 4
        %s635 = scalar_lea.vmem [#allocation3], %s634
        %p636 = pneg %p75
        %p637 = pneg %p72
        %s638 = sand.u32 %s40, 1
        %s639 = scalar_lea.sflag [#allocation7], %s638
        %s640 = sand.u32 %s90, 1
        %s641 = smul.addr %s640, 8
        %s642 = scalar_lea.vmem [#allocation6], %s641
        %p643 = pneg %p103
        %p644 = pneg %p100
        %s645 = sand.u32 %s40, 1
        %s646 = scalar_lea.sflag [#allocation7], %s645
        %s647 = sand.u32 %s118, 1
        %s648 = smul.addr %s647, 4
        %s649 = scalar_lea.vmem [#allocation8], %s648
        %p650 = pneg %p131
        %p651 = pneg %p128
        %p652 = pneg %p152
        %p653 = pneg %p149
        %p654 = pneg %p173
        %p655 = pneg %p170
        %p656 = pneg %p194
        %p657 = pneg %p191
        %p658 = pneg %p215
        %p659 = pneg %p212
        %p660 = pneg %p236
        %p661 = pneg %p233
        %p662 = pneg %p257
        %p663 = pneg %p254
        %p664 = pneg %p278
        %p665 = pneg %p275
        %p666 = pneg %p299
        %p667 = pneg %p296
        %p668 = pneg %p320
        %p669 = pneg %p317
        %p670 = pneg %p341
        %p671 = pneg %p338
        %p672 = pneg %p369
        %p673 = pneg %p366
        %s674 = sand.u32 %s356, 1
        %s675 = scalar_lea.sflag [#allocation5], %s674
        %s676 = sand.u32 %s356, 1
        %s677 = scalar_lea.vmem [#allocation23], %s676
        %s678 = smul.u32 2, %s45
        %s679 = smul.u32 %s45, 16
        %v680 = vld [vmem:[%s572] sm:$0xf]
        %v681 = vld [vmem:[%s581] sm:$0xf]
        %v682 = vld [vmem:[%s581 + $0x4] sm:$0xf]
        %v683 = vld [vmem:[%s590] sm:$0xf]
        %v686 = vunpack.c.l.b16 %v681
        %v687 = vunpack.c.l.b16 %v682
        %v688 = vpack.c.b16 %v686, %v686
        %v689 = vpack.c.b16 %v687, %v687
        %v691 = vunpack.c.l.b16 %v683
        %v692 = vpack.c.b16 %v691, %v691
        %vm693 = vcmask 1043456
        %v696 = vsel %vm693, %v680, %v688
        %v700 = vsel %vm693, %v689, %v692
        %v702 = vld [vmem:[#allocation9] sm:$0xff]
        %v703 = vld [vmem:[#allocation9 + $0x8] sm:$0xff]
        %v704 = vld [vmem:[#allocation9 + $0x10] sm:$0xff]
        %v705 = vld [vmem:[#allocation9 + $0x18] sm:$0xff]
        %v706 = vld [vmem:[#allocation9 + $0x20] sm:$0xff]
        %v707 = vld [vmem:[#allocation9 + $0x28] sm:$0xff]
        %v708 = vld [vmem:[#allocation9 + $0x30] sm:$0xff]
        %v709 = vld [vmem:[#allocation9 + $0x38] sm:$0xff]
        %v710 = vunpack.c.l.bf16 %v696
        %v711 = vunpack.c.h.bf16 %v696
        %v712 = vunpack.c.l.bf16 %v700
        %v713 = vunpack.c.h.bf16 %v700
        %v714 = vld [vmem:[#allocation11] sm:$0x1]
        %v716 = vlaneseq
        %v717 = vshrl.u32 %v716, 7
        %v718 = vsub.s32 0, %v717
        %v719 = vrot.slane %v714, %v718
        %vm721 = vcmask 523264
        %v723 = vsel %vm721, %v710, 0
        %v726 = vsel %vm721, %v711, 0
        %v729 = vsel %vm721, %v712, 0
        %v732 = vsel %vm721, %v713, 0
        %734 = vmatprep.subr.mxu0 0.0
        %735 = vmatpush1.msra.mxu0 %v702
        %736 = vmatprep.subr.mxu0 0.0
        %737 = vmatpush1.msra.mxu0 %v703
        %738 = vmatprep.subr.mxu0 0.0
        %739 = vmatpush1.msra.mxu0 %v704
        %740 = vmatprep.subr.mxu0 0.0
        %741 = vmatpush1.msra.mxu0 %v705
        %742 = vmatprep.subr.mxu0 0.0
        %743 = vmatpush1.msra.mxu0 %v706
        %744 = vmatprep.subr.mxu0 0.0
        %745 = vmatpush1.msra.mxu0 %v707
        %746 = vmatprep.subr.mxu0 0.0
        %747 = vmatpush1.msra.mxu0 %v708
        %748 = vmatprep.subr.mxu0 0.0
        %749 = vmatpush1.msra.mxu0 %v709
        %750 = vmatprep.subr.mxu0 0.0
        %751 = vmatpush1.msra.mxu0 0.0
        %752 = vmatprep.subr.mxu0 0.0
        %753 = vmatpush1.msra.mxu0 0.0
        %754 = vmatprep.subr.mxu0 0.0
        %755 = vmatpush1.msra.mxu0 0.0
        %756 = vmatprep.subr.mxu0 0.0
        %757 = vmatpush1.msra.mxu0 0.0
        %758 = vmatprep.subr.mxu0 0.0
        %759 = vmatpush1.msra.mxu0 0.0
        %760 = vmatprep.subr.mxu0 0.0
        %761 = vmatpush1.msra.mxu0 0.0
        %762 = vmatprep.subr.mxu0 0.0
        %763 = vmatpush1.msra.mxu0 0.0
        %764 = vmatprep.subr.mxu0 0.0
        %765 = vmatpush1.msra.mxu0 0.0
        %766 = vmatprep.subr.mxu0 0.0
        %767 = vmatpush1.msra.mxu0 0.0
        %768 = vmatprep.subr.mxu0 0.0
        %769 = vmatpush1.msra.mxu0 0.0
        %770 = vmatprep.subr.mxu0 0.0
        %771 = vmatpush1.msra.mxu0 0.0
        %772 = vmatprep.subr.mxu0 0.0
        %773 = vmatpush1.msra.mxu0 0.0
        %774 = vmatprep.subr.mxu0 0.0
        %775 = vmatpush1.msra.mxu0 0.0
        %776 = vmatprep.subr.mxu0 0.0
        %777 = vmatpush1.msra.mxu0 0.0
        %778 = vmatprep.subr.mxu0 0.0
        %779 = vmatpush1.msra.mxu0 0.0
        %780 = vmatprep.subr.mxu0 0.0
        %781 = vmatpush1.msra.mxu0 0.0
        %782 = vmatprep.subr.mxu0 0.0
        %783 = vmatpush1.msra.mxu0 0.0
        %784 = vmatprep.subr.mxu0 0.0
        %785 = vmatpush1.msra.mxu0 0.0
        %786 = vmatprep.subr.mxu0 0.0
        %787 = vmatpush1.msra.mxu0 0.0
        %788 = vmatprep.subr.mxu0 0.0
        %789 = vmatpush1.msra.mxu0 0.0
        %790 = vmatprep.subr.mxu0 0.0
        %791 = vmatpush1.msra.mxu0 0.0
        %792 = vmatprep.subr.mxu0 0.0
        %793 = vmatpush1.msra.mxu0 0.0
        %794 = vmatprep.subr.mxu0 0.0
        %795 = vmatpush1.msra.mxu0 0.0
        %796 = vmatprep.subr.mxu0 0.0
        %797 = vmatpush1.msra.mxu0 0.0
        %798 = vmatprep.mubr.f32.mxu0 0.0
        %799 = vmatmul.mubr.f32.gmra.mrb[0].mxu0 %v723
        %v800 = vpop.f32.mrb[0].mxu0
        %v801 = vadd.f32 %v719, %v800
        %v802 = vpop.f32.mrb[0].mxu0
        %803 = vmatprep.mubr.f32.mxu0 0.0
        %804 = vmatmul.mubr.f32.gmra.mrb[0].mxu0 %v726
        %v805 = vpop.f32.mrb[0].mxu0
        %v806 = vadd.f32 %v719, %v805
        %v807 = vpop.f32.mrb[0].mxu0
        %808 = vmatprep.mubr.f32.mxu0 0.0
        %809 = vmatmul.mubr.f32.gmra.mrb[0].mxu0 %v729
        %v810 = vpop.f32.mrb[0].mxu0
        %v811 = vadd.f32 %v719, %v810
        %v812 = vpop.f32.mrb[0].mxu0
        %813 = vmatprep.mubr.f32.mxu0 0.0
        %814 = vmatmul.mubr.f32.gmra.mrb[0].mxu0 %v732
        %v815 = vpop.f32.mrb[0].mxu0
        %v816 = vadd.f32 %v719, %v815
        %v817 = vpop.f32.mrb[0].mxu0
        %818 = vdwg.mxu0
        %v819 = vlaneseq
        %v820 = vshrl.u32 %v819, 7
        %v821 = vadd.s32 %v820, 8
        %v822 = vadd.s32 %v820, 16
        %v823 = vadd.s32 %v820, 24
        %s824 = sadd.s32 %s679, 4294967288
        %v825 = vstv %s824
        %v826 = vadd.s32 %v820, %v825
        %v827 = vadd.s32 %v821, %v825
        %v828 = vadd.s32 %v822, %v825
        %v829 = vadd.s32 %v823, %v825
        %vm830 = vcmp.ge.s32.totalorder %v826, 0
        %vm831 = vcmp.ge.s32.totalorder %v827, 0
        %vm832 = vcmp.ge.s32.totalorder %v828, 0
        %vm833 = vcmp.ge.s32.totalorder %v829, 0
        %vm834 = vcmp.lt.s32.totalorder %v826, 16
        %vm835 = vcmp.lt.s32.totalorder %v827, 16
        %vm836 = vcmp.lt.s32.totalorder %v828, 16
        %vm837 = vcmp.lt.s32.totalorder %v829, 16
        %vm838 = vmand %vm830, %vm834
        %vm839 = vmand %vm831, %vm835
        %vm840 = vmand %vm832, %vm836
        %vm841 = vmand %vm833, %vm837
        %v842 = vsel %vm838, 1, 0
        %v843 = vsel %vm839, 1, 0
        %v844 = vsel %vm840, 1, 0
        %v845 = vsel %vm841, 1, 0
        %vm846 = vcmp.eq.s32.totalorder %v842, 1
        %vm847 = vcmp.eq.s32.totalorder %v843, 1
        %vm848 = vcmp.eq.s32.totalorder %v844, 1
        %vm849 = vcmp.eq.s32.totalorder %v845, 1
        %v850 = vsel %vm846, %v801, 0.0
        %v851 = vsel %vm847, %v806, 0.0
        %v852 = vsel %vm848, %v811, 0.0
        %v853 = vsel %vm849, %v816, 0.0
        %vm858 = vcmask 1046528
        %v859 = vrot.slane %v850, 1
        %v860 = vrot.slane %v851, 1
        %v861 = vsel %vm858, %v859, %v860
        %v862 = vrot.slane %v852, 1
        %v863 = vsel %vm858, %v860, %v862
        %v864 = vrot.slane %v853, 1
        %v865 = vsel %vm858, %v862, %v864
        %vm870 = vcmask 1045504
        %v871 = vrot.slane %v850, 2
        %v872 = vrot.slane %v851, 2
        %v873 = vsel %vm870, %v871, %v872
        %v874 = vrot.slane %v852, 2
        %v875 = vsel %vm870, %v872, %v874
        %v876 = vrot.slane %v853, 2
        %v877 = vsel %vm870, %v874, %v876
        %vm882 = vcmask 1044480
        %v883 = vrot.slane %v850, 3
        %v884 = vrot.slane %v851, 3
        %v885 = vsel %vm882, %v883, %v884
        %v886 = vrot.slane %v852, 3
        %v887 = vsel %vm882, %v884, %v886
        %v888 = vrot.slane %v853, 3
        %v889 = vsel %vm882, %v886, %v888
        %v894 = vrot.slane %v850, 4
        %v895 = vrot.slane %v851, 4
        %v896 = vsel %vm693, %v894, %v895
        %v897 = vrot.slane %v852, 4
        %v898 = vsel %vm693, %v895, %v897
        %v899 = vrot.slane %v853, 4
        %v900 = vsel %vm693, %v897, %v899
        %v905 = vld [vmem:[#allocation12] sm:$0xff]
        %v906 = vld [vmem:[#allocation12 + $0x8] sm:$0xff]
        %v907 = vld [vmem:[#allocation12 + $0x10] sm:$0xff]
        %v908 = vld [vmem:[#allocation12 + $0x18] sm:$0xff]
        %v909 = vld [vmem:[#allocation12 + $0x20] sm:$0xff]
        %v910 = vld [vmem:[#allocation12 + $0x28] sm:$0xff]
        %v911 = vld [vmem:[#allocation12 + $0x30] sm:$0xff]
        %v912 = vld [vmem:[#allocation12 + $0x38] sm:$0xff]
        %v913 = vld [vmem:[#allocation12 + $0x40] sm:$0xff]
        %v914 = vld [vmem:[#allocation12 + $0x48] sm:$0xff]
        %v915 = vld [vmem:[#allocation12 + $0x50] sm:$0xff]
        %v916 = vld [vmem:[#allocation12 + $0x58] sm:$0xff]
        %v917 = vld [vmem:[#allocation12 + $0x60] sm:$0xff]
        %v918 = vld [vmem:[#allocation12 + $0x68] sm:$0xff]
        %v919 = vld [vmem:[#allocation12 + $0x70] sm:$0xff]
        %v920 = vld [vmem:[#allocation12 + $0x78] sm:$0xff]
        %v921 = vld [vmem:[#allocation12 + $0x80] sm:$0xff]
        %v922 = vld [vmem:[#allocation12 + $0x88] sm:$0xff]
        %v923 = vld [vmem:[#allocation12 + $0x90] sm:$0xff]
        %v924 = vld [vmem:[#allocation12 + $0x98] sm:$0xff]
        %v925 = vld [vmem:[#allocation12 + $0xa0] sm:$0xff]
        %v926 = vld [vmem:[#allocation12 + $0xa8] sm:$0xff]
        %v927 = vld [vmem:[#allocation12 + $0xb0] sm:$0xff]
        %v928 = vld [vmem:[#allocation12 + $0xb8] sm:$0xff]
        %v929 = vld [vmem:[#allocation12 + $0xc0] sm:$0xff]
        %v930 = vld [vmem:[#allocation12 + $0xc8] sm:$0xff]
        %v931 = vld [vmem:[#allocation12 + $0xd0] sm:$0xff]
        %v932 = vld [vmem:[#allocation12 + $0xd8] sm:$0xff]
        %v933 = vld [vmem:[#allocation12 + $0xe0] sm:$0xff]
        %v934 = vld [vmem:[#allocation12 + $0xe8] sm:$0xff]
        %v935 = vld [vmem:[#allocation12 + $0xf0] sm:$0xff]
        %v936 = vld [vmem:[#allocation12 + $0xf8] sm:$0xff]
        %v937 = vld [vmem:[#allocation12 + $0x100] sm:$0xff]
        %v938 = vld [vmem:[#allocation12 + $0x108] sm:$0xff]
        %v939 = vld [vmem:[#allocation12 + $0x110] sm:$0xff]
        %v940 = vld [vmem:[#allocation12 + $0x118] sm:$0xff]
        %v941 = vld [vmem:[#allocation12 + $0x120] sm:$0xff]
        %v942 = vld [vmem:[#allocation12 + $0x128] sm:$0xff]
        %v943 = vld [vmem:[#allocation12 + $0x130] sm:$0xff]
        %v944 = vld [vmem:[#allocation12 + $0x138] sm:$0xff]
        %v945 = vld [vmem:[#allocation12 + $0x140] sm:$0xff]
        %v946 = vld [vmem:[#allocation12 + $0x148] sm:$0xff]
        %v947 = vld [vmem:[#allocation12 + $0x150] sm:$0xff]
        %v948 = vld [vmem:[#allocation12 + $0x158] sm:$0xff]
        %v949 = vld [vmem:[#allocation12 + $0x160] sm:$0xff]
        %v950 = vld [vmem:[#allocation12 + $0x168] sm:$0xff]
        %v951 = vld [vmem:[#allocation12 + $0x170] sm:$0xff]
        %v952 = vld [vmem:[#allocation12 + $0x178] sm:$0xff]
        %v953 = vld [vmem:[#allocation12 + $0x180] sm:$0xff]
        %v954 = vld [vmem:[#allocation12 + $0x188] sm:$0xff]
        %v955 = vld [vmem:[#allocation12 + $0x190] sm:$0xff]
        %v956 = vld [vmem:[#allocation12 + $0x198] sm:$0xff]
        %v957 = vld [vmem:[#allocation12 + $0x1a0] sm:$0xff]
        %v958 = vld [vmem:[#allocation12 + $0x1a8] sm:$0xff]
        %v959 = vld [vmem:[#allocation12 + $0x1b0] sm:$0xff]
        %v960 = vld [vmem:[#allocation12 + $0x1b8] sm:$0xff]
        %v961 = vld [vmem:[#allocation12 + $0x1c0] sm:$0xff]
        %v962 = vld [vmem:[#allocation12 + $0x1c8] sm:$0xff]
        %v963 = vld [vmem:[#allocation12 + $0x1d0] sm:$0xff]
        %v964 = vld [vmem:[#allocation12 + $0x1d8] sm:$0xff]
        %v965 = vld [vmem:[#allocation12 + $0x1e0] sm:$0xff]
        %v966 = vld [vmem:[#allocation12 + $0x1e8] sm:$0xff]
        %v967 = vld [vmem:[#allocation12 + $0x1f0] sm:$0xff]
        %v968 = vld [vmem:[#allocation12 + $0x1f8] sm:$0xff]
        %v969 = vld [vmem:[#allocation12 + $0x200] sm:$0xff]
        %v970 = vld [vmem:[#allocation12 + $0x208] sm:$0xff]
        %v971 = vld [vmem:[#allocation12 + $0x210] sm:$0xff]
        %v972 = vld [vmem:[#allocation12 + $0x218] sm:$0xff]
        %v973 = vld [vmem:[#allocation12 + $0x220] sm:$0xff]
        %v974 = vld [vmem:[#allocation12 + $0x228] sm:$0xff]
        %v975 = vld [vmem:[#allocation12 + $0x230] sm:$0xff]
        %v976 = vld [vmem:[#allocation12 + $0x238] sm:$0xff]
        %v977 = vld [vmem:[#allocation12 + $0x240] sm:$0xff]
        %v978 = vld [vmem:[#allocation12 + $0x248] sm:$0xff]
        %v979 = vld [vmem:[#allocation12 + $0x250] sm:$0xff]
        %v980 = vld [vmem:[#allocation12 + $0x258] sm:$0xff]
        %v981 = vld [vmem:[#allocation12 + $0x260] sm:$0xff]
        %v982 = vld [vmem:[#allocation12 + $0x268] sm:$0xff]
        %v983 = vld [vmem:[#allocation12 + $0x270] sm:$0xff]
        %v984 = vld [vmem:[#allocation12 + $0x278] sm:$0xff]
        %v985 = vld [vmem:[#allocation14] sm:$0x1]
        %v987 = vlaneseq
        %v988 = vshrl.u32 %v987, 7
        %v989 = vsub.s32 0, %v988
        %v990 = vrot.slane %v985, %v989
        %992 = vmatprep.subr.mxu0 0.0
        %993 = vmatpush1.msra.mxu0 %v905
        %994 = vmatprep.subr.mxu0 0.0
        %995 = vmatpush1.msra.mxu0 %v906
        %996 = vmatprep.subr.mxu0 0.0
        %997 = vmatpush1.msra.mxu0 %v907
        %998 = vmatprep.subr.mxu0 0.0
        %999 = vmatpush1.msra.mxu0 %v908
        %1000 = vmatprep.subr.mxu0 0.0
        %1001 = vmatpush1.msra.mxu0 %v909
        %1002 = vmatprep.subr.mxu0 0.0
        %1003 = vmatpush1.msra.mxu0 %v910
        %1004 = vmatprep.subr.mxu0 0.0
        %1005 = vmatpush1.msra.mxu0 %v911
        %1006 = vmatprep.subr.mxu0 0.0
        %1007 = vmatpush1.msra.mxu0 %v912
        %1008 = vmatprep.subr.mxu0 0.0
        %1009 = vmatpush1.msra.mxu0 %v913
        %1010 = vmatprep.subr.mxu0 0.0
        %1011 = vmatpush1.msra.mxu0 %v914
        %1012 = vmatprep.subr.mxu0 0.0
        %1013 = vmatpush1.msra.mxu0 %v915
        %1014 = vmatprep.subr.mxu0 0.0
        %1015 = vmatpush1.msra.mxu0 %v916
        %1016 = vmatprep.subr.mxu0 0.0
        %1017 = vmatpush1.msra.mxu0 %v917
        %1018 = vmatprep.subr.mxu0 0.0
        %1019 = vmatpush1.msra.mxu0 %v918
        %1020 = vmatprep.subr.mxu0 0.0
        %1021 = vmatpush1.msra.mxu0 %v919
        %1022 = vmatprep.subr.mxu0 0.0
        %1023 = vmatpush1.msra.mxu0 %v920
        %1024 = vmatprep.subr.mxu0 0.0
        %1025 = vmatpush1.msra.mxu0 %v921
        %1026 = vmatprep.subr.mxu0 0.0
        %1027 = vmatpush1.msra.mxu0 %v922
        %1028 = vmatprep.subr.mxu0 0.0
        %1029 = vmatpush1.msra.mxu0 %v923
        %1030 = vmatprep.subr.mxu0 0.0
        %1031 = vmatpush1.msra.mxu0 %v924
        %1032 = vmatprep.subr.mxu0 0.0
        %1033 = vmatpush1.msra.mxu0 %v925
        %1034 = vmatprep.subr.mxu0 0.0
        %1035 = vmatpush1.msra.mxu0 %v926
        %1036 = vmatprep.subr.mxu0 0.0
        %1037 = vmatpush1.msra.mxu0 %v927
        %1038 = vmatprep.subr.mxu0 0.0
        %1039 = vmatpush1.msra.mxu0 %v928
        %1040 = vmatprep.subr.mxu0 0.0
        %1041 = vmatpush1.msra.mxu0 %v929
        %1042 = vmatprep.subr.mxu0 0.0
        %1043 = vmatpush1.msra.mxu0 %v930
        %1044 = vmatprep.subr.mxu0 0.0
        %1045 = vmatpush1.msra.mxu0 %v931
        %1046 = vmatprep.subr.mxu0 0.0
        %1047 = vmatpush1.msra.mxu0 %v932
        %1048 = vmatprep.subr.mxu0 0.0
        %1049 = vmatpush1.msra.mxu0 %v933
        %1050 = vmatprep.subr.mxu0 0.0
        %1051 = vmatpush1.msra.mxu0 %v934
        %1052 = vmatprep.subr.mxu0 0.0
        %1053 = vmatpush1.msra.mxu0 %v935
        %1054 = vmatprep.subr.mxu0 0.0
        %1055 = vmatpush1.msra.mxu0 %v936
        %1056 = vmatprep.mubr.f32.mxu0 %v861
        %1057 = vmatmul.mubr.f32.gmra.mrb[0].mxu0 %v850
        %v1058 = vpop.f32.mrb[0].mxu0
        %v1059 = vadd.f32 %v990, %v1058
        %v1060 = vpop.f32.mrb[0].mxu0
        %1061 = vmatprep.mubr.f32.mxu0 %v863
        %1062 = vmatmul.mubr.f32.gmra.mrb[0].mxu0 %v851
        %v1063 = vpop.f32.mrb[0].mxu0
        %v1064 = vadd.f32 %v990, %v1063
        %v1065 = vpop.f32.mrb[0].mxu0
        %1066 = vmatprep.mubr.f32.mxu0 %v865
        %1067 = vmatmul.mubr.f32.gmra.mrb[0].mxu0 %v852
        %v1068 = vpop.f32.mrb[0].mxu0
        %v1069 = vadd.f32 %v990, %v1068
        %v1070 = vpop.f32.mrb[0].mxu0
        %1071 = vmatprep.mubr.f32.mxu0 %v864
        %1072 = vmatmul.mubr.f32.gmra.mrb[0].mxu0 %v853
        %v1073 = vpop.f32.mrb[0].mxu0
        %v1074 = vadd.f32 %v990, %v1073
        %v1075 = vpop.f32.mrb[0].mxu0
        %1076 = vdwg.mxu0
        %1077 = vmatprep.subr.mxu0 0.0
        %1078 = vmatpush1.msra.mxu0 %v937
        %1079 = vmatprep.subr.mxu0 0.0
        %1080 = vmatpush1.msra.mxu0 %v938
        %1081 = vmatprep.subr.mxu0 0.0
        %1082 = vmatpush1.msra.mxu0 %v939
        %1083 = vmatprep.subr.mxu0 0.0
        %1084 = vmatpush1.msra.mxu0 %v940
        %1085 = vmatprep.subr.mxu0 0.0
        %1086 = vmatpush1.msra.mxu0 %v941
        %1087 = vmatprep.subr.mxu0 0.0
        %1088 = vmatpush1.msra.mxu0 %v942
        %1089 = vmatprep.subr.mxu0 0.0
        %1090 = vmatpush1.msra.mxu0 %v943
        %1091 = vmatprep.subr.mxu0 0.0
        %1092 = vmatpush1.msra.mxu0 %v944
        %1093 = vmatprep.subr.mxu0 0.0
        %1094 = vmatpush1.msra.mxu0 %v945
        %1095 = vmatprep.subr.mxu0 0.0
        %1096 = vmatpush1.msra.mxu0 %v946
        %1097 = vmatprep.subr.mxu0 0.0
        %1098 = vmatpush1.msra.mxu0 %v947
        %1099 = vmatprep.subr.mxu0 0.0
        %1100 = vmatpush1.msra.mxu0 %v948
        %1101 = vmatprep.subr.mxu0 0.0
        %1102 = vmatpush1.msra.mxu0 %v949
        %1103 = vmatprep.subr.mxu0 0.0
        %1104 = vmatpush1.msra.mxu0 %v950
        %1105 = vmatprep.subr.mxu0 0.0
        %1106 = vmatpush1.msra.mxu0 %v951
        %1107 = vmatprep.subr.mxu0 0.0
        %1108 = vmatpush1.msra.mxu0 %v952
        %1109 = vmatprep.subr.mxu0 0.0
        %1110 = vmatpush1.msra.mxu0 %v953
        %1111 = vmatprep.subr.mxu0 0.0
        %1112 = vmatpush1.msra.mxu0 %v954
        %1113 = vmatprep.subr.mxu0 0.0
        %1114 = vmatpush1.msra.mxu0 %v955
        %1115 = vmatprep.subr.mxu0 0.0
        %1116 = vmatpush1.msra.mxu0 %v956
        %1117 = vmatprep.subr.mxu0 0.0
        %1118 = vmatpush1.msra.mxu0 %v957
        %1119 = vmatprep.subr.mxu0 0.0
        %1120 = vmatpush1.msra.mxu0 %v958
        %1121 = vmatprep.subr.mxu0 0.0
        %1122 = vmatpush1.msra.mxu0 %v959
        %1123 = vmatprep.subr.mxu0 0.0
        %1124 = vmatpush1.msra.mxu0 %v960
        %1125 = vmatprep.subr.mxu0 0.0
        %1126 = vmatpush1.msra.mxu0 %v961
        %1127 = vmatprep.subr.mxu0 0.0
        %1128 = vmatpush1.msra.mxu0 %v962
        %1129 = vmatprep.subr.mxu0 0.0
        %1130 = vmatpush1.msra.mxu0 %v963
        %1131 = vmatprep.subr.mxu0 0.0
        %1132 = vmatpush1.msra.mxu0 %v964
        %1133 = vmatprep.subr.mxu0 0.0
        %1134 = vmatpush1.msra.mxu0 %v965
        %1135 = vmatprep.subr.mxu0 0.0
        %1136 = vmatpush1.msra.mxu0 %v966
        %1137 = vmatprep.subr.mxu0 0.0
        %1138 = vmatpush1.msra.mxu0 %v967
        %1139 = vmatprep.subr.mxu0 0.0
        %1140 = vmatpush1.msra.mxu0 %v968
        %1141 = vmatprep.mubr.f32.mxu0 %v885
        %1142 = vmatmul.mubr.f32.gmra.mrb[0].mxu0 %v873
        %v1143 = vpop.f32.mrb[0].mxu0
        %v1144 = vadd.f32 %v1059, %v1143
        %v1145 = vpop.f32.mrb[0].mxu0
        %1146 = vmatprep.mubr.f32.mxu0 %v887
        %1147 = vmatmul.mubr.f32.gmra.mrb[0].mxu0 %v875
        %v1148 = vpop.f32.mrb[0].mxu0
        %v1149 = vadd.f32 %v1064, %v1148
        %v1150 = vpop.f32.mrb[0].mxu0
        %1151 = vmatprep.mubr.f32.mxu0 %v889
        %1152 = vmatmul.mubr.f32.gmra.mrb[0].mxu0 %v877
        %v1153 = vpop.f32.mrb[0].mxu0
        %v1154 = vadd.f32 %v1069, %v1153
        %v1155 = vpop.f32.mrb[0].mxu0
        %1156 = vmatprep.mubr.f32.mxu0 %v888
        %1157 = vmatmul.mubr.f32.gmra.mrb[0].mxu0 %v876
        %v1158 = vpop.f32.mrb[0].mxu0
        %v1159 = vadd.f32 %v1074, %v1158
        %v1160 = vpop.f32.mrb[0].mxu0
        %1161 = vdwg.mxu0
        %1162 = vmatprep.subr.mxu0 0.0
        %1163 = vmatpush1.msra.mxu0 %v969
        %1164 = vmatprep.subr.mxu0 0.0
        %1165 = vmatpush1.msra.mxu0 %v970
        %1166 = vmatprep.subr.mxu0 0.0
        %1167 = vmatpush1.msra.mxu0 %v971
        %1168 = vmatprep.subr.mxu0 0.0
        %1169 = vmatpush1.msra.mxu0 %v972
        %1170 = vmatprep.subr.mxu0 0.0
        %1171 = vmatpush1.msra.mxu0 %v973
        %1172 = vmatprep.subr.mxu0 0.0
        %1173 = vmatpush1.msra.mxu0 %v974
        %1174 = vmatprep.subr.mxu0 0.0
        %1175 = vmatpush1.msra.mxu0 %v975
        %1176 = vmatprep.subr.mxu0 0.0
        %1177 = vmatpush1.msra.mxu0 %v976
        %1178 = vmatprep.subr.mxu0 0.0
        %1179 = vmatpush1.msra.mxu0 %v977
        %1180 = vmatprep.subr.mxu0 0.0
        %1181 = vmatpush1.msra.mxu0 %v978
        %1182 = vmatprep.subr.mxu0 0.0
        %1183 = vmatpush1.msra.mxu0 %v979
        %1184 = vmatprep.subr.mxu0 0.0
        %1185 = vmatpush1.msra.mxu0 %v980
        %1186 = vmatprep.subr.mxu0 0.0
        %1187 = vmatpush1.msra.mxu0 %v981
        %1188 = vmatprep.subr.mxu0 0.0
        %1189 = vmatpush1.msra.mxu0 %v982
        %1190 = vmatprep.subr.mxu0 0.0
        %1191 = vmatpush1.msra.mxu0 %v983
        %1192 = vmatprep.subr.mxu0 0.0
        %1193 = vmatpush1.msra.mxu0 %v984
        %1194 = vmatprep.subr.mxu0 0.0
        %1195 = vmatpush1.msra.mxu0 0.0
        %1196 = vmatprep.subr.mxu0 0.0
        %1197 = vmatpush1.msra.mxu0 0.0
        %1198 = vmatprep.subr.mxu0 0.0
        %1199 = vmatpush1.msra.mxu0 0.0
        %1200 = vmatprep.subr.mxu0 0.0
        %1201 = vmatpush1.msra.mxu0 0.0
        %1202 = vmatprep.subr.mxu0 0.0
        %1203 = vmatpush1.msra.mxu0 0.0
        %1204 = vmatprep.subr.mxu0 0.0
        %1205 = vmatpush1.msra.mxu0 0.0
        %1206 = vmatprep.subr.mxu0 0.0
        %1207 = vmatpush1.msra.mxu0 0.0
        %1208 = vmatprep.subr.mxu0 0.0
        %1209 = vmatpush1.msra.mxu0 0.0
        %1210 = vmatprep.subr.mxu0 0.0
        %1211 = vmatpush1.msra.mxu0 0.0
        %1212 = vmatprep.subr.mxu0 0.0
        %1213 = vmatpush1.msra.mxu0 0.0
        %1214 = vmatprep.subr.mxu0 0.0
        %1215 = vmatpush1.msra.mxu0 0.0
        %1216 = vmatprep.subr.mxu0 0.0
        %1217 = vmatpush1.msra.mxu0 0.0
        %1218 = vmatprep.subr.mxu0 0.0
        %1219 = vmatpush1.msra.mxu0 0.0
        %1220 = vmatprep.subr.mxu0 0.0
        %1221 = vmatpush1.msra.mxu0 0.0
        %1222 = vmatprep.subr.mxu0 0.0
        %1223 = vmatpush1.msra.mxu0 0.0
        %1224 = vmatprep.subr.mxu0 0.0
        %1225 = vmatpush1.msra.mxu0 0.0
        %1226 = vmatprep.mubr.f32.mxu0 0.0
        %1227 = vmatmul.mubr.f32.gmra.mrb[0].mxu0 %v896
        %v1228 = vpop.f32.mrb[0].mxu0
        %v1229 = vadd.f32 %v1144, %v1228
        %v1230 = vpop.f32.mrb[0].mxu0
        %1231 = vmatprep.mubr.f32.mxu0 0.0
        %1232 = vmatmul.mubr.f32.gmra.mrb[0].mxu0 %v898
        %v1233 = vpop.f32.mrb[0].mxu0
        %v1234 = vadd.f32 %v1149, %v1233
        %v1235 = vpop.f32.mrb[0].mxu0
        %1236 = vmatprep.mubr.f32.mxu0 0.0
        %1237 = vmatmul.mubr.f32.gmra.mrb[0].mxu0 %v900
        %v1238 = vpop.f32.mrb[0].mxu0
        %v1239 = vadd.f32 %v1154, %v1238
        %v1240 = vpop.f32.mrb[0].mxu0
        %1241 = vmatprep.mubr.f32.mxu0 0.0
        %1242 = vmatmul.mubr.f32.gmra.mrb[0].mxu0 %v899
        %v1243 = vpop.f32.mrb[0].mxu0
        %v1244 = vadd.f32 %v1159, %v1243
        %v1245 = vpop.f32.mrb[0].mxu0
        %1246 = vdwg.mxu0
        %vm1247 = vcmp.ge.f32.partialorder %v1229, 0.0
        %vm1248 = vcmp.ge.f32.partialorder %v1234, 0.0
        %vm1249 = vcmp.ge.f32.partialorder %v1239, 0.0
        %vm1250 = vcmp.ge.f32.partialorder %v1244, 0.0
        %v1251 = vmul.f32 %v1229, 0.1
        %v1252 = vmul.f32 %v1234, 0.1
        %v1253 = vmul.f32 %v1239, 0.1
        %v1254 = vmul.f32 %v1244, 0.1
        %v1255 = vsel %vm1247, %v1229, %v1251
        %v1256 = vsel %vm1248, %v1234, %v1252
        %v1257 = vsel %vm1249, %v1239, %v1253
        %v1258 = vsel %vm1250, %v1244, %v1254
        %s1259 = sadd.s32 %s679, 4294967290
        %v1260 = vstv %s1259
        %v1261 = vadd.s32 %v820, %v1260
        %v1262 = vadd.s32 %v821, %v1260
        %v1263 = vadd.s32 %v822, %v1260
        %v1264 = vadd.s32 %v823, %v1260
        %vm1265 = vcmp.ge.s32.totalorder %v1261, 0
        %vm1266 = vcmp.ge.s32.totalorder %v1262, 0
        %vm1267 = vcmp.ge.s32.totalorder %v1263, 0
        %vm1268 = vcmp.ge.s32.totalorder %v1264, 0
        %vm1269 = vcmp.lt.s32.totalorder %v1261, 16
        %vm1270 = vcmp.lt.s32.totalorder %v1262, 16
        %vm1271 = vcmp.lt.s32.totalorder %v1263, 16
        %vm1272 = vcmp.lt.s32.totalorder %v1264, 16
        %vm1273 = vmand %vm1265, %vm1269
        %vm1274 = vmand %vm1266, %vm1270
        %vm1275 = vmand %vm1267, %vm1271
        %vm1276 = vmand %vm1268, %vm1272
        %v1277 = vsel %vm1273, 1, 0
        %v1278 = vsel %vm1274, 1, 0
        %v1279 = vsel %vm1275, 1, 0
        %v1280 = vsel %vm1276, 1, 0
        %vm1281 = vcmp.eq.s32.totalorder %v1277, 1
        %vm1282 = vcmp.eq.s32.totalorder %v1278, 1
        %vm1283 = vcmp.eq.s32.totalorder %v1279, 1
        %vm1284 = vcmp.eq.s32.totalorder %v1280, 1
        %v1285 = vsel %vm1281, %v1255, 0.0
        %v1286 = vsel %vm1282, %v1256, 0.0
        %v1287 = vsel %vm1283, %v1257, 0.0
        %v1288 = vsel %vm1284, %v1258, 0.0
        %v1289 = vld [vmem:[#allocation15] sm:$0xff]
        %v1290 = vld [vmem:[#allocation15 + $0x8] sm:$0xff]
        %v1291 = vld [vmem:[#allocation15 + $0x10] sm:$0xff]
        %v1292 = vld [vmem:[#allocation15 + $0x18] sm:$0xff]
        %s1293 = scalar_lea.vmem [#allocation15], 32
        %v1294 = vld [vmem:[%s1293] sm:$0xff]
        %v1295 = vld [vmem:[%s1293 + $0x8] sm:$0xff]
        %v1296 = vld [vmem:[%s1293 + $0x10] sm:$0xff]
        %v1297 = vld [vmem:[%s1293 + $0x18] sm:$0xff]
        %v1302 = vrot.slane %v1285, 1
        %v1303 = vrot.slane %v1286, 1
        %v1304 = vsel %vm858, %v1302, %v1303
        %v1305 = vrot.slane %v1287, 1
        %v1306 = vsel %vm858, %v1303, %v1305
        %v1307 = vrot.slane %v1288, 1
        %v1308 = vsel %vm858, %v1305, %v1307
        %vm1309 = vcmask 261120
        %v1310 = vsel %vm1309, %v1304, 0
        %v1312 = vsel %vm1309, %v1306, 0
        %v1314 = vsel %vm1309, %v1308, 0
        %1316 = vmatprep.subr.mxu0 0.0
        %1317 = vmatpush1.msra.mxu0 %v1294
        %1318 = vmatprep.subr.mxu0 0.0
        %1319 = vmatpush1.msra.mxu0 %v1295
        %1320 = vmatprep.subr.mxu0 0.0
        %1321 = vmatpush1.msra.mxu0 %v1296
        %1322 = vmatprep.subr.mxu0 0.0
        %1323 = vmatpush1.msra.mxu0 %v1297
        %1324 = vmatprep.subr.mxu0 0.0
        %1325 = vmatpush1.msra.mxu0 0.0
        %1326 = vmatprep.subr.mxu0 0.0
        %1327 = vmatpush1.msra.mxu0 0.0
        %1328 = vmatprep.subr.mxu0 0.0
        %1329 = vmatpush1.msra.mxu0 0.0
        %1330 = vmatprep.subr.mxu0 0.0
        %1331 = vmatpush1.msra.mxu0 0.0
        %1332 = vmatprep.subr.mxu0 0.0
        %1333 = vmatpush1.msra.mxu0 0.0
        %1334 = vmatprep.subr.mxu0 0.0
        %1335 = vmatpush1.msra.mxu0 0.0
        %1336 = vmatprep.subr.mxu0 0.0
        %1337 = vmatpush1.msra.mxu0 0.0
        %1338 = vmatprep.subr.mxu0 0.0
        %1339 = vmatpush1.msra.mxu0 0.0
        %1340 = vmatprep.subr.mxu0 0.0
        %1341 = vmatpush1.msra.mxu0 0.0
        %1342 = vmatprep.subr.mxu0 0.0
        %1343 = vmatpush1.msra.mxu0 0.0
        %1344 = vmatprep.subr.mxu0 0.0
        %1345 = vmatpush1.msra.mxu0 0.0
        %1346 = vmatprep.subr.mxu0 0.0
        %1347 = vmatpush1.msra.mxu0 0.0
        %1348 = vmatprep.subr.mxu0 0.0
        %1349 = vmatpush1.msra.mxu0 0.0
        %1350 = vmatprep.subr.mxu0 0.0
        %1351 = vmatpush1.msra.mxu0 0.0
        %1352 = vmatprep.subr.mxu0 0.0
        %1353 = vmatpush1.msra.mxu0 0.0
        %1354 = vmatprep.subr.mxu0 0.0
        %1355 = vmatpush1.msra.mxu0 0.0
        %1356 = vmatprep.subr.mxu0 0.0
        %1357 = vmatpush1.msra.mxu0 0.0
        %1358 = vmatprep.subr.mxu0 0.0
        %1359 = vmatpush1.msra.mxu0 0.0
        %1360 = vmatprep.subr.mxu0 0.0
        %1361 = vmatpush1.msra.mxu0 0.0
        %1362 = vmatprep.subr.mxu0 0.0
        %1363 = vmatpush1.msra.mxu0 0.0
        %1364 = vmatprep.subr.mxu0 0.0
        %1365 = vmatpush1.msra.mxu0 0.0
        %1366 = vmatprep.subr.mxu0 0.0
        %1367 = vmatpush1.msra.mxu0 0.0
        %1368 = vmatprep.subr.mxu0 0.0
        %1369 = vmatpush1.msra.mxu0 0.0
        %1370 = vmatprep.subr.mxu0 0.0
        %1371 = vmatpush1.msra.mxu0 0.0
        %1372 = vmatprep.subr.mxu0 0.0
        %1373 = vmatpush1.msra.mxu0 0.0
        %1374 = vmatprep.subr.mxu0 0.0
        %1375 = vmatpush1.msra.mxu0 0.0
        %1376 = vmatprep.subr.mxu0 0.0
        %1377 = vmatpush1.msra.mxu0 0.0
        %1378 = vmatprep.subr.mxu0 0.0
        %1379 = vmatpush1.msra.mxu0 0.0
        %1380 = vmatprep.mubr.f32.mxu0 0.0
        %1381 = vmatmul.mubr.f32.gmra.mrb[0].mxu0 %v1310
        %v1382 = vpop.f32.mrb[0].mxu0
        %v1383 = vadd.f32 0.0, %v1382
        %v1384 = vpop.f32.mrb[0].mxu0
        %1385 = vmatprep.mubr.f32.mxu0 0.0
        %1386 = vmatmul.mubr.f32.gmra.mrb[0].mxu0 %v1312
        %v1387 = vpop.f32.mrb[0].mxu0
        %v1388 = vadd.f32 0.0, %v1387
        %v1389 = vpop.f32.mrb[0].mxu0
        %1390 = vmatprep.mubr.f32.mxu0 0.0
        %1391 = vmatmul.mubr.f32.gmra.mrb[0].mxu0 %v1314
        %v1392 = vpop.f32.mrb[0].mxu0
        %v1393 = vadd.f32 0.0, %v1392
        %v1394 = vpop.f32.mrb[0].mxu0
        %1395 = vdwg.mxu0
        %v1396 = vsel %vm1309, %v1285, 0
        %v1398 = vsel %vm1309, %v1286, 0
        %v1400 = vsel %vm1309, %v1287, 0
        %1402 = vmatprep.subr.mxu0 0.0
        %1403 = vmatpush1.msra.mxu0 %v1289
        %1404 = vmatprep.subr.mxu0 0.0
        %1405 = vmatpush1.msra.mxu0 %v1290
        %1406 = vmatprep.subr.mxu0 0.0
        %1407 = vmatpush1.msra.mxu0 %v1291
        %1408 = vmatprep.subr.mxu0 0.0
        %1409 = vmatpush1.msra.mxu0 %v1292
        %1410 = vmatprep.subr.mxu0 0.0
        %1411 = vmatpush1.msra.mxu0 0.0
        %1412 = vmatprep.subr.mxu0 0.0
        %1413 = vmatpush1.msra.mxu0 0.0
        %1414 = vmatprep.subr.mxu0 0.0
        %1415 = vmatpush1.msra.mxu0 0.0
        %1416 = vmatprep.subr.mxu0 0.0
        %1417 = vmatpush1.msra.mxu0 0.0
        %1418 = vmatprep.subr.mxu0 0.0
        %1419 = vmatpush1.msra.mxu0 0.0
        %1420 = vmatprep.subr.mxu0 0.0
        %1421 = vmatpush1.msra.mxu0 0.0
        %1422 = vmatprep.subr.mxu0 0.0
        %1423 = vmatpush1.msra.mxu0 0.0
        %1424 = vmatprep.subr.mxu0 0.0
        %1425 = vmatpush1.msra.mxu0 0.0
        %1426 = vmatprep.subr.mxu0 0.0
        %1427 = vmatpush1.msra.mxu0 0.0
        %1428 = vmatprep.subr.mxu0 0.0
        %1429 = vmatpush1.msra.mxu0 0.0
        %1430 = vmatprep.subr.mxu0 0.0
        %1431 = vmatpush1.msra.mxu0 0.0
        %1432 = vmatprep.subr.mxu0 0.0
        %1433 = vmatpush1.msra.mxu0 0.0
        %1434 = vmatprep.subr.mxu0 0.0
        %1435 = vmatpush1.msra.mxu0 0.0
        %1436 = vmatprep.subr.mxu0 0.0
        %1437 = vmatpush1.msra.mxu0 0.0
        %1438 = vmatprep.subr.mxu0 0.0
        %1439 = vmatpush1.msra.mxu0 0.0
        %1440 = vmatprep.subr.mxu0 0.0
        %1441 = vmatpush1.msra.mxu0 0.0
        %1442 = vmatprep.subr.mxu0 0.0
        %1443 = vmatpush1.msra.mxu0 0.0
        %1444 = vmatprep.subr.mxu0 0.0
        %1445 = vmatpush1.msra.mxu0 0.0
        %1446 = vmatprep.subr.mxu0 0.0
        %1447 = vmatpush1.msra.mxu0 0.0
        %1448 = vmatprep.subr.mxu0 0.0
        %1449 = vmatpush1.msra.mxu0 0.0
        %1450 = vmatprep.subr.mxu0 0.0
        %1451 = vmatpush1.msra.mxu0 0.0
        %1452 = vmatprep.subr.mxu0 0.0
        %1453 = vmatpush1.msra.mxu0 0.0
        %1454 = vmatprep.subr.mxu0 0.0
        %1455 = vmatpush1.msra.mxu0 0.0
        %1456 = vmatprep.subr.mxu0 0.0
        %1457 = vmatpush1.msra.mxu0 0.0
        %1458 = vmatprep.subr.mxu0 0.0
        %1459 = vmatpush1.msra.mxu0 0.0
        %1460 = vmatprep.subr.mxu0 0.0
        %1461 = vmatpush1.msra.mxu0 0.0
        %1462 = vmatprep.subr.mxu0 0.0
        %1463 = vmatpush1.msra.mxu0 0.0
        %1464 = vmatprep.subr.mxu0 0.0
        %1465 = vmatpush1.msra.mxu0 0.0
        %1466 = vmatprep.mubr.f32.mxu0 0.0
        %1467 = vmatmul.mubr.f32.gmra.mrb[0].mxu0 %v1396
        %v1468 = vpop.f32.mrb[0].mxu0
        %v1469 = vadd.f32 %v1383, %v1468
        %v1470 = vpop.f32.mrb[0].mxu0
        %1471 = vmatprep.mubr.f32.mxu0 0.0
        %1472 = vmatmul.mubr.f32.gmra.mrb[0].mxu0 %v1398
        %v1473 = vpop.f32.mrb[0].mxu0
        %v1474 = vadd.f32 %v1388, %v1473
        %v1475 = vpop.f32.mrb[0].mxu0
        %1476 = vmatprep.mubr.f32.mxu0 0.0
        %1477 = vmatmul.mubr.f32.gmra.mrb[0].mxu0 %v1400
        %v1478 = vpop.f32.mrb[0].mxu0
        %v1479 = vadd.f32 %v1393, %v1478
        %v1480 = vpop.f32.mrb[0].mxu0
        %1481 = vdwg.mxu0
        %s1482 = scalar_lea.vmem [#allocation15], 64
        %v1483 = vld [vmem:[%s1482] sm:$0xff]
        %v1484 = vld [vmem:[%s1482 + $0x8] sm:$0xff]
        %v1485 = vld [vmem:[%s1482 + $0x10] sm:$0xff]
        %v1486 = vld [vmem:[%s1482 + $0x18] sm:$0xff]
        %v1487 = vrot.slane %v1285, 2
        %v1488 = vrot.slane %v1286, 2
        %v1489 = vsel %vm870, %v1487, %v1488
        %v1490 = vrot.slane %v1287, 2
        %v1491 = vsel %vm870, %v1488, %v1490
        %v1492 = vrot.slane %v1288, 2
        %v1493 = vsel %vm870, %v1490, %v1492
        %v1494 = vsel %vm1309, %v1489, 0
        %v1496 = vsel %vm1309, %v1491, 0
        %v1498 = vsel %vm1309, %v1493, 0
        %1500 = vmatprep.subr.mxu0 0.0
        %1501 = vmatpush1.msra.mxu0 %v1483
        %1502 = vmatprep.subr.mxu0 0.0
        %1503 = vmatpush1.msra.mxu0 %v1484
        %1504 = vmatprep.subr.mxu0 0.0
        %1505 = vmatpush1.msra.mxu0 %v1485
        %1506 = vmatprep.subr.mxu0 0.0
        %1507 = vmatpush1.msra.mxu0 %v1486
        %1508 = vmatprep.subr.mxu0 0.0
        %1509 = vmatpush1.msra.mxu0 0.0
        %1510 = vmatprep.subr.mxu0 0.0
        %1511 = vmatpush1.msra.mxu0 0.0
        %1512 = vmatprep.subr.mxu0 0.0
        %1513 = vmatpush1.msra.mxu0 0.0
        %1514 = vmatprep.subr.mxu0 0.0
        %1515 = vmatpush1.msra.mxu0 0.0
        %1516 = vmatprep.subr.mxu0 0.0
        %1517 = vmatpush1.msra.mxu0 0.0
        %1518 = vmatprep.subr.mxu0 0.0
        %1519 = vmatpush1.msra.mxu0 0.0
        %1520 = vmatprep.subr.mxu0 0.0
        %1521 = vmatpush1.msra.mxu0 0.0
        %1522 = vmatprep.subr.mxu0 0.0
        %1523 = vmatpush1.msra.mxu0 0.0
        %1524 = vmatprep.subr.mxu0 0.0
        %1525 = vmatpush1.msra.mxu0 0.0
        %1526 = vmatprep.subr.mxu0 0.0
        %1527 = vmatpush1.msra.mxu0 0.0
        %1528 = vmatprep.subr.mxu0 0.0
        %1529 = vmatpush1.msra.mxu0 0.0
        %1530 = vmatprep.subr.mxu0 0.0
        %1531 = vmatpush1.msra.mxu0 0.0
        %1532 = vmatprep.subr.mxu0 0.0
        %1533 = vmatpush1.msra.mxu0 0.0
        %1534 = vmatprep.subr.mxu0 0.0
        %1535 = vmatpush1.msra.mxu0 0.0
        %1536 = vmatprep.subr.mxu0 0.0
        %1537 = vmatpush1.msra.mxu0 0.0
        %1538 = vmatprep.subr.mxu0 0.0
        %1539 = vmatpush1.msra.mxu0 0.0
        %1540 = vmatprep.subr.mxu0 0.0
        %1541 = vmatpush1.msra.mxu0 0.0
        %1542 = vmatprep.subr.mxu0 0.0
        %1543 = vmatpush1.msra.mxu0 0.0
        %1544 = vmatprep.subr.mxu0 0.0
        %1545 = vmatpush1.msra.mxu0 0.0
        %1546 = vmatprep.subr.mxu0 0.0
        %1547 = vmatpush1.msra.mxu0 0.0
        %1548 = vmatprep.subr.mxu0 0.0
        %1549 = vmatpush1.msra.mxu0 0.0
        %1550 = vmatprep.subr.mxu0 0.0
        %1551 = vmatpush1.msra.mxu0 0.0
        %1552 = vmatprep.subr.mxu0 0.0
        %1553 = vmatpush1.msra.mxu0 0.0
        %1554 = vmatprep.subr.mxu0 0.0
        %1555 = vmatpush1.msra.mxu0 0.0
        %1556 = vmatprep.subr.mxu0 0.0
        %1557 = vmatpush1.msra.mxu0 0.0
        %1558 = vmatprep.subr.mxu0 0.0
        %1559 = vmatpush1.msra.mxu0 0.0
        %1560 = vmatprep.subr.mxu0 0.0
        %1561 = vmatpush1.msra.mxu0 0.0
        %1562 = vmatprep.subr.mxu0 0.0
        %1563 = vmatpush1.msra.mxu0 0.0
        %1564 = vmatprep.mubr.f32.mxu0 0.0
        %1565 = vmatmul.mubr.f32.gmra.mrb[0].mxu0 %v1494
        %v1566 = vpop.f32.mrb[0].mxu0
        %v1567 = vadd.f32 0.0, %v1566
        %v1568 = vpop.f32.mrb[0].mxu0
        %1569 = vmatprep.mubr.f32.mxu0 0.0
        %1570 = vmatmul.mubr.f32.gmra.mrb[0].mxu0 %v1496
        %v1571 = vpop.f32.mrb[0].mxu0
        %v1572 = vadd.f32 0.0, %v1571
        %v1573 = vpop.f32.mrb[0].mxu0
        %1574 = vmatprep.mubr.f32.mxu0 0.0
        %1575 = vmatmul.mubr.f32.gmra.mrb[0].mxu0 %v1498
        %v1576 = vpop.f32.mrb[0].mxu0
        %v1577 = vadd.f32 0.0, %v1576
        %v1578 = vpop.f32.mrb[0].mxu0
        %1579 = vdwg.mxu0
        %v1580 = vadd.f32 %v1469, %v1567
        %v1581 = vadd.f32 %v1474, %v1572
        %v1582 = vadd.f32 %v1479, %v1577
        %s1583 = scalar_lea.vmem [#allocation15], 96
        %v1584 = vld [vmem:[%s1583] sm:$0xff]
        %v1585 = vld [vmem:[%s1583 + $0x8] sm:$0xff]
        %v1586 = vld [vmem:[%s1583 + $0x10] sm:$0xff]
        %v1587 = vld [vmem:[%s1583 + $0x18] sm:$0xff]
        %v1588 = vrot.slane %v1285, 3
        %v1589 = vrot.slane %v1286, 3
        %v1590 = vsel %vm882, %v1588, %v1589
        %v1591 = vrot.slane %v1287, 3
        %v1592 = vsel %vm882, %v1589, %v1591
        %v1593 = vrot.slane %v1288, 3
        %v1594 = vsel %vm882, %v1591, %v1593
        %v1595 = vsel %vm1309, %v1590, 0
        %v1597 = vsel %vm1309, %v1592, 0
        %v1599 = vsel %vm1309, %v1594, 0
        %1601 = vmatprep.subr.mxu0 0.0
        %1602 = vmatpush1.msra.mxu0 %v1584
        %1603 = vmatprep.subr.mxu0 0.0
        %1604 = vmatpush1.msra.mxu0 %v1585
        %1605 = vmatprep.subr.mxu0 0.0
        %1606 = vmatpush1.msra.mxu0 %v1586
        %1607 = vmatprep.subr.mxu0 0.0
        %1608 = vmatpush1.msra.mxu0 %v1587
        %1609 = vmatprep.subr.mxu0 0.0
        %1610 = vmatpush1.msra.mxu0 0.0
        %1611 = vmatprep.subr.mxu0 0.0
        %1612 = vmatpush1.msra.mxu0 0.0
        %1613 = vmatprep.subr.mxu0 0.0
        %1614 = vmatpush1.msra.mxu0 0.0
        %1615 = vmatprep.subr.mxu0 0.0
        %1616 = vmatpush1.msra.mxu0 0.0
        %1617 = vmatprep.subr.mxu0 0.0
        %1618 = vmatpush1.msra.mxu0 0.0
        %1619 = vmatprep.subr.mxu0 0.0
        %1620 = vmatpush1.msra.mxu0 0.0
        %1621 = vmatprep.subr.mxu0 0.0
        %1622 = vmatpush1.msra.mxu0 0.0
        %1623 = vmatprep.subr.mxu0 0.0
        %1624 = vmatpush1.msra.mxu0 0.0
        %1625 = vmatprep.subr.mxu0 0.0
        %1626 = vmatpush1.msra.mxu0 0.0
        %1627 = vmatprep.subr.mxu0 0.0
        %1628 = vmatpush1.msra.mxu0 0.0
        %1629 = vmatprep.subr.mxu0 0.0
        %1630 = vmatpush1.msra.mxu0 0.0
        %1631 = vmatprep.subr.mxu0 0.0
        %1632 = vmatpush1.msra.mxu0 0.0
        %1633 = vmatprep.subr.mxu0 0.0
        %1634 = vmatpush1.msra.mxu0 0.0
        %1635 = vmatprep.subr.mxu0 0.0
        %1636 = vmatpush1.msra.mxu0 0.0
        %1637 = vmatprep.subr.mxu0 0.0
        %1638 = vmatpush1.msra.mxu0 0.0
        %1639 = vmatprep.subr.mxu0 0.0
        %1640 = vmatpush1.msra.mxu0 0.0
        %1641 = vmatprep.subr.mxu0 0.0
        %1642 = vmatpush1.msra.mxu0 0.0
        %1643 = vmatprep.subr.mxu0 0.0
        %1644 = vmatpush1.msra.mxu0 0.0
        %1645 = vmatprep.subr.mxu0 0.0
        %1646 = vmatpush1.msra.mxu0 0.0
        %1647 = vmatprep.subr.mxu0 0.0
        %1648 = vmatpush1.msra.mxu0 0.0
        %1649 = vmatprep.subr.mxu0 0.0
        %1650 = vmatpush1.msra.mxu0 0.0
        %1651 = vmatprep.subr.mxu0 0.0
        %1652 = vmatpush1.msra.mxu0 0.0
        %1653 = vmatprep.subr.mxu0 0.0
        %1654 = vmatpush1.msra.mxu0 0.0
        %1655 = vmatprep.subr.mxu0 0.0
        %1656 = vmatpush1.msra.mxu0 0.0
        %1657 = vmatprep.subr.mxu0 0.0
        %1658 = vmatpush1.msra.mxu0 0.0
        %1659 = vmatprep.subr.mxu0 0.0
        %1660 = vmatpush1.msra.mxu0 0.0
        %1661 = vmatprep.subr.mxu0 0.0
        %1662 = vmatpush1.msra.mxu0 0.0
        %1663 = vmatprep.subr.mxu0 0.0
        %1664 = vmatpush1.msra.mxu0 0.0
        %1665 = vmatprep.mubr.f32.mxu0 0.0
        %1666 = vmatmul.mubr.f32.gmra.mrb[0].mxu0 %v1595
        %v1667 = vpop.f32.mrb[0].mxu0
        %v1668 = vadd.f32 0.0, %v1667
        %v1669 = vpop.f32.mrb[0].mxu0
        %1670 = vmatprep.mubr.f32.mxu0 0.0
        %1671 = vmatmul.mubr.f32.gmra.mrb[0].mxu0 %v1597
        %v1672 = vpop.f32.mrb[0].mxu0
        %v1673 = vadd.f32 0.0, %v1672
        %v1674 = vpop.f32.mrb[0].mxu0
        %1675 = vmatprep.mubr.f32.mxu0 0.0
        %1676 = vmatmul.mubr.f32.gmra.mrb[0].mxu0 %v1599
        %v1677 = vpop.f32.mrb[0].mxu0
        %v1678 = vadd.f32 0.0, %v1677
        %v1679 = vpop.f32.mrb[0].mxu0
        %1680 = vdwg.mxu0
        %v1681 = vadd.f32 %v1580, %v1668
        %v1682 = vadd.f32 %v1581, %v1673
        %v1683 = vadd.f32 %v1582, %v1678
        %s1684 = scalar_lea.vmem [#allocation15], 128
        %v1685 = vld [vmem:[%s1684] sm:$0xff]
        %v1686 = vld [vmem:[%s1684 + $0x8] sm:$0xff]
        %v1687 = vld [vmem:[%s1684 + $0x10] sm:$0xff]
        %v1688 = vld [vmem:[%s1684 + $0x18] sm:$0xff]
        %v1689 = vrot.slane %v1285, 4
        %v1690 = vrot.slane %v1286, 4
        %v1691 = vsel %vm693, %v1689, %v1690
        %v1692 = vrot.slane %v1287, 4
        %v1693 = vsel %vm693, %v1690, %v1692
        %v1694 = vrot.slane %v1288, 4
        %v1695 = vsel %vm693, %v1692, %v1694
        %v1696 = vsel %vm1309, %v1691, 0
        %v1698 = vsel %vm1309, %v1693, 0
        %v1700 = vsel %vm1309, %v1695, 0
        %1702 = vmatprep.subr.mxu0 0.0
        %1703 = vmatpush1.msra.mxu0 %v1685
        %1704 = vmatprep.subr.mxu0 0.0
        %1705 = vmatpush1.msra.mxu0 %v1686
        %1706 = vmatprep.subr.mxu0 0.0
        %1707 = vmatpush1.msra.mxu0 %v1687
        %1708 = vmatprep.subr.mxu0 0.0
        %1709 = vmatpush1.msra.mxu0 %v1688
        %1710 = vmatprep.subr.mxu0 0.0
        %1711 = vmatpush1.msra.mxu0 0.0
        %1712 = vmatprep.subr.mxu0 0.0
        %1713 = vmatpush1.msra.mxu0 0.0
        %1714 = vmatprep.subr.mxu0 0.0
        %1715 = vmatpush1.msra.mxu0 0.0
        %1716 = vmatprep.subr.mxu0 0.0
        %1717 = vmatpush1.msra.mxu0 0.0
        %1718 = vmatprep.subr.mxu0 0.0
        %1719 = vmatpush1.msra.mxu0 0.0
        %1720 = vmatprep.subr.mxu0 0.0
        %1721 = vmatpush1.msra.mxu0 0.0
        %1722 = vmatprep.subr.mxu0 0.0
        %1723 = vmatpush1.msra.mxu0 0.0
        %1724 = vmatprep.subr.mxu0 0.0
        %1725 = vmatpush1.msra.mxu0 0.0
        %1726 = vmatprep.subr.mxu0 0.0
        %1727 = vmatpush1.msra.mxu0 0.0
        %1728 = vmatprep.subr.mxu0 0.0
        %1729 = vmatpush1.msra.mxu0 0.0
        %1730 = vmatprep.subr.mxu0 0.0
        %1731 = vmatpush1.msra.mxu0 0.0
        %1732 = vmatprep.subr.mxu0 0.0
        %1733 = vmatpush1.msra.mxu0 0.0
        %1734 = vmatprep.subr.mxu0 0.0
        %1735 = vmatpush1.msra.mxu0 0.0
        %1736 = vmatprep.subr.mxu0 0.0
        %1737 = vmatpush1.msra.mxu0 0.0
        %1738 = vmatprep.subr.mxu0 0.0
        %1739 = vmatpush1.msra.mxu0 0.0
        %1740 = vmatprep.subr.mxu0 0.0
        %1741 = vmatpush1.msra.mxu0 0.0
        %1742 = vmatprep.subr.mxu0 0.0
        %1743 = vmatpush1.msra.mxu0 0.0
        %1744 = vmatprep.subr.mxu0 0.0
        %1745 = vmatpush1.msra.mxu0 0.0
        %1746 = vmatprep.subr.mxu0 0.0
        %1747 = vmatpush1.msra.mxu0 0.0
        %1748 = vmatprep.subr.mxu0 0.0
        %1749 = vmatpush1.msra.mxu0 0.0
        %1750 = vmatprep.subr.mxu0 0.0
        %1751 = vmatpush1.msra.mxu0 0.0
        %1752 = vmatprep.subr.mxu0 0.0
        %1753 = vmatpush1.msra.mxu0 0.0
        %1754 = vmatprep.subr.mxu0 0.0
        %1755 = vmatpush1.msra.mxu0 0.0
        %1756 = vmatprep.subr.mxu0 0.0
        %1757 = vmatpush1.msra.mxu0 0.0
        %1758 = vmatprep.subr.mxu0 0.0
        %1759 = vmatpush1.msra.mxu0 0.0
        %1760 = vmatprep.subr.mxu0 0.0
        %1761 = vmatpush1.msra.mxu0 0.0
        %1762 = vmatprep.subr.mxu0 0.0
        %1763 = vmatpush1.msra.mxu0 0.0
        %1764 = vmatprep.subr.mxu0 0.0
        %1765 = vmatpush1.msra.mxu0 0.0
        %1766 = vmatprep.mubr.f32.mxu0 0.0
        %1767 = vmatmul.mubr.f32.gmra.mrb[0].mxu0 %v1696
        %v1768 = vpop.f32.mrb[0].mxu0
        %v1769 = vadd.f32 0.0, %v1768
        %v1770 = vpop.f32.mrb[0].mxu0
        %1771 = vmatprep.mubr.f32.mxu0 0.0
        %1772 = vmatmul.mubr.f32.gmra.mrb[0].mxu0 %v1698
        %v1773 = vpop.f32.mrb[0].mxu0
        %v1774 = vadd.f32 0.0, %v1773
        %v1775 = vpop.f32.mrb[0].mxu0
        %1776 = vmatprep.mubr.f32.mxu0 0.0
        %1777 = vmatmul.mubr.f32.gmra.mrb[0].mxu0 %v1700
        %v1778 = vpop.f32.mrb[0].mxu0
        %v1779 = vadd.f32 0.0, %v1778
        %v1780 = vpop.f32.mrb[0].mxu0
        %1781 = vdwg.mxu0
        %v1782 = vadd.f32 %v1681, %v1769
        %v1783 = vadd.f32 %v1682, %v1774
        %v1784 = vadd.f32 %v1683, %v1779
        %v1785 = vld [vmem:[#allocation17] sm:$0x1]
        %v1787 = vlaneseq
        %v1788 = vshrl.u32 %v1787, 7
        %v1789 = vsub.s32 0, %v1788
        %v1790 = vrot.slane %v1785, %v1789
        %v1792 = vadd.f32 %v1782, %v1790
        %v1793 = vadd.f32 %v1783, %v1790
        %v1794 = vadd.f32 %v1784, %v1790
        %vm1795 = vcmp.ge.f32.partialorder %v1792, 0.0
        %vm1796 = vcmp.ge.f32.partialorder %v1793, 0.0
        %vm1797 = vcmp.ge.f32.partialorder %v1794, 0.0
        %v1798 = vmul.f32 %v1792, 0.1
        %v1799 = vmul.f32 %v1793, 0.1
        %v1800 = vmul.f32 %v1794, 0.1
        %v1801 = vsel %vm1795, %v1792, %v1798
        %v1802 = vsel %vm1796, %v1793, %v1799
        %v1803 = vsel %vm1797, %v1794, %v1800
        %s1804 = sadd.s32 %s679, 4294967292
        %v1805 = vstv %s1804
        %v1806 = vadd.s32 %v820, %v1805
        %v1807 = vadd.s32 %v821, %v1805
        %v1808 = vadd.s32 %v822, %v1805
        %vm1809 = vcmp.ge.s32.totalorder %v1806, 0
        %vm1810 = vcmp.ge.s32.totalorder %v1807, 0
        %vm1811 = vcmp.ge.s32.totalorder %v1808, 0
        %vm1812 = vcmp.lt.s32.totalorder %v1806, 16
        %vm1813 = vcmp.lt.s32.totalorder %v1807, 16
        %vm1814 = vcmp.lt.s32.totalorder %v1808, 16
        %vm1815 = vmand %vm1809, %vm1812
        %vm1816 = vmand %vm1810, %vm1813
        %vm1817 = vmand %vm1811, %vm1814
        %v1818 = vsel %vm1815, 1, 0
        %v1819 = vsel %vm1816, 1, 0
        %v1820 = vsel %vm1817, 1, 0
        %vm1821 = vcmp.eq.s32.totalorder %v1818, 1
        %vm1822 = vcmp.eq.s32.totalorder %v1819, 1
        %vm1823 = vcmp.eq.s32.totalorder %v1820, 1
        %v1824 = vsel %vm1821, %v1801, 0.0
        %v1825 = vsel %vm1822, %v1802, 0.0
        %v1826 = vsel %vm1823, %v1803, 0.0
        %v1827 = vld [vmem:[#allocation18] sm:$0xff]
        %v1828 = vld [vmem:[#allocation18 + $0x8] sm:$0xff]
        %v1829 = vld [vmem:[#allocation18 + $0x10] sm:$0xff]
        %v1830 = vld [vmem:[#allocation18 + $0x18] sm:$0xff]
        %v1831 = vld [vmem:[#allocation18 + $0x20] sm:$0xff]
        %v1832 = vld [vmem:[#allocation18 + $0x28] sm:$0xff]
        %v1833 = vld [vmem:[#allocation18 + $0x30] sm:$0xff]
        %v1834 = vld [vmem:[#allocation18 + $0x38] sm:$0xff]
        %s1835 = scalar_lea.vmem [#allocation18], 64
        %v1836 = vld [vmem:[%s1835] sm:$0xff]
        %v1837 = vld [vmem:[%s1835 + $0x8] sm:$0xff]
        %v1838 = vld [vmem:[%s1835 + $0x10] sm:$0xff]
        %v1839 = vld [vmem:[%s1835 + $0x18] sm:$0xff]
        %v1840 = vld [vmem:[%s1835 + $0x20] sm:$0xff]
        %v1841 = vld [vmem:[%s1835 + $0x28] sm:$0xff]
        %v1842 = vld [vmem:[%s1835 + $0x30] sm:$0xff]
        %v1843 = vld [vmem:[%s1835 + $0x38] sm:$0xff]
        %v1847 = vrot.slane %v1824, 1
        %v1848 = vrot.slane %v1825, 1
        %v1849 = vsel %vm858, %v1847, %v1848
        %v1850 = vrot.slane %v1826, 1
        %v1851 = vsel %vm858, %v1848, %v1850
        %v1852 = vsel %vm721, %v1849, 0
        %v1854 = vsel %vm721, %v1851, 0
        %v1856 = vsel %vm721, %v1850, 0
        %1858 = vmatprep.subr.mxu0 0.0
        %1859 = vmatpush1.msra.mxu0 %v1836
        %1860 = vmatprep.subr.mxu0 0.0
        %1861 = vmatpush1.msra.mxu0 %v1837
        %1862 = vmatprep.subr.mxu0 0.0
        %1863 = vmatpush1.msra.mxu0 %v1838
        %1864 = vmatprep.subr.mxu0 0.0
        %1865 = vmatpush1.msra.mxu0 %v1839
        %1866 = vmatprep.subr.mxu0 0.0
        %1867 = vmatpush1.msra.mxu0 %v1840
        %1868 = vmatprep.subr.mxu0 0.0
        %1869 = vmatpush1.msra.mxu0 %v1841
        %1870 = vmatprep.subr.mxu0 0.0
        %1871 = vmatpush1.msra.mxu0 %v1842
        %1872 = vmatprep.subr.mxu0 0.0
        %1873 = vmatpush1.msra.mxu0 %v1843
        %1874 = vmatprep.subr.mxu0 0.0
        %1875 = vmatpush1.msra.mxu0 0.0
        %1876 = vmatprep.subr.mxu0 0.0
        %1877 = vmatpush1.msra.mxu0 0.0
        %1878 = vmatprep.subr.mxu0 0.0
        %1879 = vmatpush1.msra.mxu0 0.0
        %1880 = vmatprep.subr.mxu0 0.0
        %1881 = vmatpush1.msra.mxu0 0.0
        %1882 = vmatprep.subr.mxu0 0.0
        %1883 = vmatpush1.msra.mxu0 0.0
        %1884 = vmatprep.subr.mxu0 0.0
        %1885 = vmatpush1.msra.mxu0 0.0
        %1886 = vmatprep.subr.mxu0 0.0
        %1887 = vmatpush1.msra.mxu0 0.0
        %1888 = vmatprep.subr.mxu0 0.0
        %1889 = vmatpush1.msra.mxu0 0.0
        %1890 = vmatprep.subr.mxu0 0.0
        %1891 = vmatpush1.msra.mxu0 0.0
        %1892 = vmatprep.subr.mxu0 0.0
        %1893 = vmatpush1.msra.mxu0 0.0
        %1894 = vmatprep.subr.mxu0 0.0
        %1895 = vmatpush1.msra.mxu0 0.0
        %1896 = vmatprep.subr.mxu0 0.0
        %1897 = vmatpush1.msra.mxu0 0.0
        %1898 = vmatprep.subr.mxu0 0.0
        %1899 = vmatpush1.msra.mxu0 0.0
        %1900 = vmatprep.subr.mxu0 0.0
        %1901 = vmatpush1.msra.mxu0 0.0
        %1902 = vmatprep.subr.mxu0 0.0
        %1903 = vmatpush1.msra.mxu0 0.0
        %1904 = vmatprep.subr.mxu0 0.0
        %1905 = vmatpush1.msra.mxu0 0.0
        %1906 = vmatprep.subr.mxu0 0.0
        %1907 = vmatpush1.msra.mxu0 0.0
        %1908 = vmatprep.subr.mxu0 0.0
        %1909 = vmatpush1.msra.mxu0 0.0
        %1910 = vmatprep.subr.mxu0 0.0
        %1911 = vmatpush1.msra.mxu0 0.0
        %1912 = vmatprep.subr.mxu0 0.0
        %1913 = vmatpush1.msra.mxu0 0.0
        %1914 = vmatprep.subr.mxu0 0.0
        %1915 = vmatpush1.msra.mxu0 0.0
        %1916 = vmatprep.subr.mxu0 0.0
        %1917 = vmatpush1.msra.mxu0 0.0
        %1918 = vmatprep.subr.mxu0 0.0
        %1919 = vmatpush1.msra.mxu0 0.0
        %1920 = vmatprep.subr.mxu0 0.0
        %1921 = vmatpush1.msra.mxu0 0.0
        %1922 = vmatprep.mubr.f32.mxu0 0.0
        %1923 = vmatmul.mubr.f32.gmra.mrb[0].mxu0 %v1852
        %v1924 = vpop.f32.mrb[0].mxu0
        %v1925 = vadd.f32 0.0, %v1924
        %v1926 = vpop.f32.mrb[0].mxu0
        %1927 = vmatprep.mubr.f32.mxu0 0.0
        %1928 = vmatmul.mubr.f32.gmra.mrb[0].mxu0 %v1854
        %v1929 = vpop.f32.mrb[0].mxu0
        %v1930 = vadd.f32 0.0, %v1929
        %v1931 = vpop.f32.mrb[0].mxu0
        %1932 = vmatprep.mubr.f32.mxu0 0.0
        %1933 = vmatmul.mubr.f32.gmra.mrb[0].mxu0 %v1856
        %v1934 = vpop.f32.mrb[0].mxu0
        %v1935 = vadd.f32 0.0, %v1934
        %v1936 = vpop.f32.mrb[0].mxu0
        %1937 = vdwg.mxu0
        %v1938 = vsel %vm721, %v1824, 0
        %v1940 = vsel %vm721, %v1825, 0
        %v1942 = vsel %vm721, %v1826, 0
        %1944 = vmatprep.subr.mxu0 0.0
        %1945 = vmatpush1.msra.mxu0 %v1827
        %1946 = vmatprep.subr.mxu0 0.0
        %1947 = vmatpush1.msra.mxu0 %v1828
        %1948 = vmatprep.subr.mxu0 0.0
        %1949 = vmatpush1.msra.mxu0 %v1829
        %1950 = vmatprep.subr.mxu0 0.0
        %1951 = vmatpush1.msra.mxu0 %v1830
        %1952 = vmatprep.subr.mxu0 0.0
        %1953 = vmatpush1.msra.mxu0 %v1831
        %1954 = vmatprep.subr.mxu0 0.0
        %1955 = vmatpush1.msra.mxu0 %v1832
        %1956 = vmatprep.subr.mxu0 0.0
        %1957 = vmatpush1.msra.mxu0 %v1833
        %1958 = vmatprep.subr.mxu0 0.0
        %1959 = vmatpush1.msra.mxu0 %v1834
        %1960 = vmatprep.subr.mxu0 0.0
        %1961 = vmatpush1.msra.mxu0 0.0
        %1962 = vmatprep.subr.mxu0 0.0
        %1963 = vmatpush1.msra.mxu0 0.0
        %1964 = vmatprep.subr.mxu0 0.0
        %1965 = vmatpush1.msra.mxu0 0.0
        %1966 = vmatprep.subr.mxu0 0.0
        %1967 = vmatpush1.msra.mxu0 0.0
        %1968 = vmatprep.subr.mxu0 0.0
        %1969 = vmatpush1.msra.mxu0 0.0
        %1970 = vmatprep.subr.mxu0 0.0
        %1971 = vmatpush1.msra.mxu0 0.0
        %1972 = vmatprep.subr.mxu0 0.0
        %1973 = vmatpush1.msra.mxu0 0.0
        %1974 = vmatprep.subr.mxu0 0.0
        %1975 = vmatpush1.msra.mxu0 0.0
        %1976 = vmatprep.subr.mxu0 0.0
        %1977 = vmatpush1.msra.mxu0 0.0
        %1978 = vmatprep.subr.mxu0 0.0
        %1979 = vmatpush1.msra.mxu0 0.0
        %1980 = vmatprep.subr.mxu0 0.0
        %1981 = vmatpush1.msra.mxu0 0.0
        %1982 = vmatprep.subr.mxu0 0.0
        %1983 = vmatpush1.msra.mxu0 0.0
        %1984 = vmatprep.subr.mxu0 0.0
        %1985 = vmatpush1.msra.mxu0 0.0
        %1986 = vmatprep.subr.mxu0 0.0
        %1987 = vmatpush1.msra.mxu0 0.0
        %1988 = vmatprep.subr.mxu0 0.0
        %1989 = vmatpush1.msra.mxu0 0.0
        %1990 = vmatprep.subr.mxu0 0.0
        %1991 = vmatpush1.msra.mxu0 0.0
        %1992 = vmatprep.subr.mxu0 0.0
        %1993 = vmatpush1.msra.mxu0 0.0
        %1994 = vmatprep.subr.mxu0 0.0
        %1995 = vmatpush1.msra.mxu0 0.0
        %1996 = vmatprep.subr.mxu0 0.0
        %1997 = vmatpush1.msra.mxu0 0.0
        %1998 = vmatprep.subr.mxu0 0.0
        %1999 = vmatpush1.msra.mxu0 0.0
        %2000 = vmatprep.subr.mxu0 0.0
        %2001 = vmatpush1.msra.mxu0 0.0
        %2002 = vmatprep.subr.mxu0 0.0
        %2003 = vmatpush1.msra.mxu0 0.0
        %2004 = vmatprep.subr.mxu0 0.0
        %2005 = vmatpush1.msra.mxu0 0.0
        %2006 = vmatprep.subr.mxu0 0.0
        %2007 = vmatpush1.msra.mxu0 0.0
        %2008 = vmatprep.mubr.f32.mxu0 0.0
        %2009 = vmatmul.mubr.f32.gmra.mrb[0].mxu0 %v1938
        %v2010 = vpop.f32.mrb[0].mxu0
        %v2011 = vadd.f32 %v1925, %v2010
        %v2012 = vpop.f32.mrb[0].mxu0
        %2013 = vmatprep.mubr.f32.mxu0 0.0
        %2014 = vmatmul.mubr.f32.gmra.mrb[0].mxu0 %v1940
        %v2015 = vpop.f32.mrb[0].mxu0
        %v2016 = vadd.f32 %v1930, %v2015
        %v2017 = vpop.f32.mrb[0].mxu0
        %2018 = vmatprep.mubr.f32.mxu0 0.0
        %2019 = vmatmul.mubr.f32.gmra.mrb[0].mxu0 %v1942
        %v2020 = vpop.f32.mrb[0].mxu0
        %v2021 = vadd.f32 %v1935, %v2020
        %v2022 = vpop.f32.mrb[0].mxu0
        %2023 = vdwg.mxu0
        %s2024 = scalar_lea.vmem [#allocation18], 128
        %v2025 = vld [vmem:[%s2024] sm:$0xff]
        %v2026 = vld [vmem:[%s2024 + $0x8] sm:$0xff]
        %v2027 = vld [vmem:[%s2024 + $0x10] sm:$0xff]
        %v2028 = vld [vmem:[%s2024 + $0x18] sm:$0xff]
        %v2029 = vld [vmem:[%s2024 + $0x20] sm:$0xff]
        %v2030 = vld [vmem:[%s2024 + $0x28] sm:$0xff]
        %v2031 = vld [vmem:[%s2024 + $0x30] sm:$0xff]
        %v2032 = vld [vmem:[%s2024 + $0x38] sm:$0xff]
        %v2033 = vrot.slane %v1824, 2
        %v2034 = vrot.slane %v1825, 2
        %v2035 = vsel %vm870, %v2033, %v2034
        %v2036 = vrot.slane %v1826, 2
        %v2037 = vsel %vm870, %v2034, %v2036
        %v2038 = vsel %vm721, %v2035, 0
        %v2040 = vsel %vm721, %v2037, 0
        %v2042 = vsel %vm721, %v2036, 0
        %2044 = vmatprep.subr.mxu0 0.0
        %2045 = vmatpush1.msra.mxu0 %v2025
        %2046 = vmatprep.subr.mxu0 0.0
        %2047 = vmatpush1.msra.mxu0 %v2026
        %2048 = vmatprep.subr.mxu0 0.0
        %2049 = vmatpush1.msra.mxu0 %v2027
        %2050 = vmatprep.subr.mxu0 0.0
        %2051 = vmatpush1.msra.mxu0 %v2028
        %2052 = vmatprep.subr.mxu0 0.0
        %2053 = vmatpush1.msra.mxu0 %v2029
        %2054 = vmatprep.subr.mxu0 0.0
        %2055 = vmatpush1.msra.mxu0 %v2030
        %2056 = vmatprep.subr.mxu0 0.0
        %2057 = vmatpush1.msra.mxu0 %v2031
        %2058 = vmatprep.subr.mxu0 0.0
        %2059 = vmatpush1.msra.mxu0 %v2032
        %2060 = vmatprep.subr.mxu0 0.0
        %2061 = vmatpush1.msra.mxu0 0.0
        %2062 = vmatprep.subr.mxu0 0.0
        %2063 = vmatpush1.msra.mxu0 0.0
        %2064 = vmatprep.subr.mxu0 0.0
        %2065 = vmatpush1.msra.mxu0 0.0
        %2066 = vmatprep.subr.mxu0 0.0
        %2067 = vmatpush1.msra.mxu0 0.0
        %2068 = vmatprep.subr.mxu0 0.0
        %2069 = vmatpush1.msra.mxu0 0.0
        %2070 = vmatprep.subr.mxu0 0.0
        %2071 = vmatpush1.msra.mxu0 0.0
        %2072 = vmatprep.subr.mxu0 0.0
        %2073 = vmatpush1.msra.mxu0 0.0
        %2074 = vmatprep.subr.mxu0 0.0
        %2075 = vmatpush1.msra.mxu0 0.0
        %2076 = vmatprep.subr.mxu0 0.0
        %2077 = vmatpush1.msra.mxu0 0.0
        %2078 = vmatprep.subr.mxu0 0.0
        %2079 = vmatpush1.msra.mxu0 0.0
        %2080 = vmatprep.subr.mxu0 0.0
        %2081 = vmatpush1.msra.mxu0 0.0
        %2082 = vmatprep.subr.mxu0 0.0
        %2083 = vmatpush1.msra.mxu0 0.0
        %2084 = vmatprep.subr.mxu0 0.0
        %2085 = vmatpush1.msra.mxu0 0.0
        %2086 = vmatprep.subr.mxu0 0.0
        %2087 = vmatpush1.msra.mxu0 0.0
        %2088 = vmatprep.subr.mxu0 0.0
        %2089 = vmatpush1.msra.mxu0 0.0
        %2090 = vmatprep.subr.mxu0 0.0
        %2091 = vmatpush1.msra.mxu0 0.0
        %2092 = vmatprep.subr.mxu0 0.0
        %2093 = vmatpush1.msra.mxu0 0.0
        %2094 = vmatprep.subr.mxu0 0.0
        %2095 = vmatpush1.msra.mxu0 0.0
        %2096 = vmatprep.subr.mxu0 0.0
        %2097 = vmatpush1.msra.mxu0 0.0
        %2098 = vmatprep.subr.mxu0 0.0
        %2099 = vmatpush1.msra.mxu0 0.0
        %2100 = vmatprep.subr.mxu0 0.0
        %2101 = vmatpush1.msra.mxu0 0.0
        %2102 = vmatprep.subr.mxu0 0.0
        %2103 = vmatpush1.msra.mxu0 0.0
        %2104 = vmatprep.subr.mxu0 0.0
        %2105 = vmatpush1.msra.mxu0 0.0
        %2106 = vmatprep.subr.mxu0 0.0
        %2107 = vmatpush1.msra.mxu0 0.0
        %2108 = vmatprep.mubr.f32.mxu0 0.0
        %2109 = vmatmul.mubr.f32.gmra.mrb[0].mxu0 %v2038
        %v2110 = vpop.f32.mrb[0].mxu0
        %v2111 = vadd.f32 0.0, %v2110
        %v2112 = vpop.f32.mrb[0].mxu0
        %2113 = vmatprep.mubr.f32.mxu0 0.0
        %2114 = vmatmul.mubr.f32.gmra.mrb[0].mxu0 %v2040
        %v2115 = vpop.f32.mrb[0].mxu0
        %v2116 = vadd.f32 0.0, %v2115
        %v2117 = vpop.f32.mrb[0].mxu0
        %2118 = vmatprep.mubr.f32.mxu0 0.0
        %2119 = vmatmul.mubr.f32.gmra.mrb[0].mxu0 %v2042
        %v2120 = vpop.f32.mrb[0].mxu0
        %v2121 = vadd.f32 0.0, %v2120
        %v2122 = vpop.f32.mrb[0].mxu0
        %2123 = vdwg.mxu0
        %v2124 = vadd.f32 %v2011, %v2111
        %v2125 = vadd.f32 %v2016, %v2116
        %v2126 = vadd.f32 %v2021, %v2121
        %s2127 = scalar_lea.vmem [#allocation18], 192
        %v2128 = vld [vmem:[%s2127] sm:$0xff]
        %v2129 = vld [vmem:[%s2127 + $0x8] sm:$0xff]
        %v2130 = vld [vmem:[%s2127 + $0x10] sm:$0xff]
        %v2131 = vld [vmem:[%s2127 + $0x18] sm:$0xff]
        %v2132 = vld [vmem:[%s2127 + $0x20] sm:$0xff]
        %v2133 = vld [vmem:[%s2127 + $0x28] sm:$0xff]
        %v2134 = vld [vmem:[%s2127 + $0x30] sm:$0xff]
        %v2135 = vld [vmem:[%s2127 + $0x38] sm:$0xff]
        %v2136 = vrot.slane %v1824, 3
        %v2137 = vrot.slane %v1825, 3
        %v2138 = vsel %vm882, %v2136, %v2137
        %v2139 = vrot.slane %v1826, 3
        %v2140 = vsel %vm882, %v2137, %v2139
        %v2141 = vsel %vm721, %v2138, 0
        %v2143 = vsel %vm721, %v2140, 0
        %v2145 = vsel %vm721, %v2139, 0
        %2147 = vmatprep.subr.mxu0 0.0
        %2148 = vmatpush1.msra.mxu0 %v2128
        %2149 = vmatprep.subr.mxu0 0.0
        %2150 = vmatpush1.msra.mxu0 %v2129
        %2151 = vmatprep.subr.mxu0 0.0
        %2152 = vmatpush1.msra.mxu0 %v2130
        %2153 = vmatprep.subr.mxu0 0.0
        %2154 = vmatpush1.msra.mxu0 %v2131
        %2155 = vmatprep.subr.mxu0 0.0
        %2156 = vmatpush1.msra.mxu0 %v2132
        %2157 = vmatprep.subr.mxu0 0.0
        %2158 = vmatpush1.msra.mxu0 %v2133
        %2159 = vmatprep.subr.mxu0 0.0
        %2160 = vmatpush1.msra.mxu0 %v2134
        %2161 = vmatprep.subr.mxu0 0.0
        %2162 = vmatpush1.msra.mxu0 %v2135
        %2163 = vmatprep.subr.mxu0 0.0
        %2164 = vmatpush1.msra.mxu0 0.0
        %2165 = vmatprep.subr.mxu0 0.0
        %2166 = vmatpush1.msra.mxu0 0.0
        %2167 = vmatprep.subr.mxu0 0.0
        %2168 = vmatpush1.msra.mxu0 0.0
        %2169 = vmatprep.subr.mxu0 0.0
        %2170 = vmatpush1.msra.mxu0 0.0
        %2171 = vmatprep.subr.mxu0 0.0
        %2172 = vmatpush1.msra.mxu0 0.0
        %2173 = vmatprep.subr.mxu0 0.0
        %2174 = vmatpush1.msra.mxu0 0.0
        %2175 = vmatprep.subr.mxu0 0.0
        %2176 = vmatpush1.msra.mxu0 0.0
        %2177 = vmatprep.subr.mxu0 0.0
        %2178 = vmatpush1.msra.mxu0 0.0
        %2179 = vmatprep.subr.mxu0 0.0
        %2180 = vmatpush1.msra.mxu0 0.0
        %2181 = vmatprep.subr.mxu0 0.0
        %2182 = vmatpush1.msra.mxu0 0.0
        %2183 = vmatprep.subr.mxu0 0.0
        %2184 = vmatpush1.msra.mxu0 0.0
        %2185 = vmatprep.subr.mxu0 0.0
        %2186 = vmatpush1.msra.mxu0 0.0
        %2187 = vmatprep.subr.mxu0 0.0
        %2188 = vmatpush1.msra.mxu0 0.0
        %2189 = vmatprep.subr.mxu0 0.0
        %2190 = vmatpush1.msra.mxu0 0.0
        %2191 = vmatprep.subr.mxu0 0.0
        %2192 = vmatpush1.msra.mxu0 0.0
        %2193 = vmatprep.subr.mxu0 0.0
        %2194 = vmatpush1.msra.mxu0 0.0
        %2195 = vmatprep.subr.mxu0 0.0
        %2196 = vmatpush1.msra.mxu0 0.0
        %2197 = vmatprep.subr.mxu0 0.0
        %2198 = vmatpush1.msra.mxu0 0.0
        %2199 = vmatprep.subr.mxu0 0.0
        %2200 = vmatpush1.msra.mxu0 0.0
        %2201 = vmatprep.subr.mxu0 0.0
        %2202 = vmatpush1.msra.mxu0 0.0
        %2203 = vmatprep.subr.mxu0 0.0
        %2204 = vmatpush1.msra.mxu0 0.0
        %2205 = vmatprep.subr.mxu0 0.0
        %2206 = vmatpush1.msra.mxu0 0.0
        %2207 = vmatprep.subr.mxu0 0.0
        %2208 = vmatpush1.msra.mxu0 0.0
        %2209 = vmatprep.subr.mxu0 0.0
        %2210 = vmatpush1.msra.mxu0 0.0
        %2211 = vmatprep.mubr.f32.mxu0 0.0
        %2212 = vmatmul.mubr.f32.gmra.mrb[0].mxu0 %v2141
        %v2213 = vpop.f32.mrb[0].mxu0
        %v2214 = vadd.f32 0.0, %v2213
        %v2215 = vpop.f32.mrb[0].mxu0
        %2216 = vmatprep.mubr.f32.mxu0 0.0
        %2217 = vmatmul.mubr.f32.gmra.mrb[0].mxu0 %v2143
        %v2218 = vpop.f32.mrb[0].mxu0
        %v2219 = vadd.f32 0.0, %v2218
        %v2220 = vpop.f32.mrb[0].mxu0
        %2221 = vmatprep.mubr.f32.mxu0 0.0
        %2222 = vmatmul.mubr.f32.gmra.mrb[0].mxu0 %v2145
        %v2223 = vpop.f32.mrb[0].mxu0
        %v2224 = vadd.f32 0.0, %v2223
        %v2225 = vpop.f32.mrb[0].mxu0
        %2226 = vdwg.mxu0
        %v2227 = vadd.f32 %v2124, %v2214
        %v2228 = vadd.f32 %v2125, %v2219
        %v2229 = vadd.f32 %v2126, %v2224
        %s2230 = scalar_lea.vmem [#allocation18], 256
        %v2231 = vld [vmem:[%s2230] sm:$0xff]
        %v2232 = vld [vmem:[%s2230 + $0x8] sm:$0xff]
        %v2233 = vld [vmem:[%s2230 + $0x10] sm:$0xff]
        %v2234 = vld [vmem:[%s2230 + $0x18] sm:$0xff]
        %v2235 = vld [vmem:[%s2230 + $0x20] sm:$0xff]
        %v2236 = vld [vmem:[%s2230 + $0x28] sm:$0xff]
        %v2237 = vld [vmem:[%s2230 + $0x30] sm:$0xff]
        %v2238 = vld [vmem:[%s2230 + $0x38] sm:$0xff]
        %v2239 = vrot.slane %v1824, 4
        %v2240 = vrot.slane %v1825, 4
        %v2241 = vsel %vm693, %v2239, %v2240
        %v2242 = vrot.slane %v1826, 4
        %v2243 = vsel %vm693, %v2240, %v2242
        %v2244 = vsel %vm721, %v2241, 0
        %v2246 = vsel %vm721, %v2243, 0
        %v2248 = vsel %vm721, %v2242, 0
        %2250 = vmatprep.subr.mxu0 0.0
        %2251 = vmatpush1.msra.mxu0 %v2231
        %2252 = vmatprep.subr.mxu0 0.0
        %2253 = vmatpush1.msra.mxu0 %v2232
        %2254 = vmatprep.subr.mxu0 0.0
        %2255 = vmatpush1.msra.mxu0 %v2233
        %2256 = vmatprep.subr.mxu0 0.0
        %2257 = vmatpush1.msra.mxu0 %v2234
        %2258 = vmatprep.subr.mxu0 0.0
        %2259 = vmatpush1.msra.mxu0 %v2235
        %2260 = vmatprep.subr.mxu0 0.0
        %2261 = vmatpush1.msra.mxu0 %v2236
        %2262 = vmatprep.subr.mxu0 0.0
        %2263 = vmatpush1.msra.mxu0 %v2237
        %2264 = vmatprep.subr.mxu0 0.0
        %2265 = vmatpush1.msra.mxu0 %v2238
        %2266 = vmatprep.subr.mxu0 0.0
        %2267 = vmatpush1.msra.mxu0 0.0
        %2268 = vmatprep.subr.mxu0 0.0
        %2269 = vmatpush1.msra.mxu0 0.0
        %2270 = vmatprep.subr.mxu0 0.0
        %2271 = vmatpush1.msra.mxu0 0.0
        %2272 = vmatprep.subr.mxu0 0.0
        %2273 = vmatpush1.msra.mxu0 0.0
        %2274 = vmatprep.subr.mxu0 0.0
        %2275 = vmatpush1.msra.mxu0 0.0
        %2276 = vmatprep.subr.mxu0 0.0
        %2277 = vmatpush1.msra.mxu0 0.0
        %2278 = vmatprep.subr.mxu0 0.0
        %2279 = vmatpush1.msra.mxu0 0.0
        %2280 = vmatprep.subr.mxu0 0.0
        %2281 = vmatpush1.msra.mxu0 0.0
        %2282 = vmatprep.subr.mxu0 0.0
        %2283 = vmatpush1.msra.mxu0 0.0
        %2284 = vmatprep.subr.mxu0 0.0
        %2285 = vmatpush1.msra.mxu0 0.0
        %2286 = vmatprep.subr.mxu0 0.0
        %2287 = vmatpush1.msra.mxu0 0.0
        %2288 = vmatprep.subr.mxu0 0.0
        %2289 = vmatpush1.msra.mxu0 0.0
        %2290 = vmatprep.subr.mxu0 0.0
        %2291 = vmatpush1.msra.mxu0 0.0
        %2292 = vmatprep.subr.mxu0 0.0
        %2293 = vmatpush1.msra.mxu0 0.0
        %2294 = vmatprep.subr.mxu0 0.0
        %2295 = vmatpush1.msra.mxu0 0.0
        %2296 = vmatprep.subr.mxu0 0.0
        %2297 = vmatpush1.msra.mxu0 0.0
        %2298 = vmatprep.subr.mxu0 0.0
        %2299 = vmatpush1.msra.mxu0 0.0
        %2300 = vmatprep.subr.mxu0 0.0
        %2301 = vmatpush1.msra.mxu0 0.0
        %2302 = vmatprep.subr.mxu0 0.0
        %2303 = vmatpush1.msra.mxu0 0.0
        %2304 = vmatprep.subr.mxu0 0.0
        %2305 = vmatpush1.msra.mxu0 0.0
        %2306 = vmatprep.subr.mxu0 0.0
        %2307 = vmatpush1.msra.mxu0 0.0
        %2308 = vmatprep.subr.mxu0 0.0
        %2309 = vmatpush1.msra.mxu0 0.0
        %2310 = vmatprep.subr.mxu0 0.0
        %2311 = vmatpush1.msra.mxu0 0.0
        %2312 = vmatprep.subr.mxu0 0.0
        %2313 = vmatpush1.msra.mxu0 0.0
        %2314 = vmatprep.mubr.f32.mxu0 0.0
        %2315 = vmatmul.mubr.f32.gmra.mrb[0].mxu0 %v2244
        %v2316 = vpop.f32.mrb[0].mxu0
        %v2317 = vadd.f32 0.0, %v2316
        %v2318 = vpop.f32.mrb[0].mxu0
        %2319 = vmatprep.mubr.f32.mxu0 0.0
        %2320 = vmatmul.mubr.f32.gmra.mrb[0].mxu0 %v2246
        %v2321 = vpop.f32.mrb[0].mxu0
        %v2322 = vadd.f32 0.0, %v2321
        %v2323 = vpop.f32.mrb[0].mxu0
        %2324 = vmatprep.mubr.f32.mxu0 0.0
        %2325 = vmatmul.mubr.f32.gmra.mrb[0].mxu0 %v2248
        %v2326 = vpop.f32.mrb[0].mxu0
        %v2327 = vadd.f32 0.0, %v2326
        %v2328 = vpop.f32.mrb[0].mxu0
        %2329 = vdwg.mxu0
        %v2330 = vadd.f32 %v2227, %v2317
        %v2331 = vadd.f32 %v2228, %v2322
        %v2332 = vadd.f32 %v2229, %v2327
        %v2333 = vld [vmem:[#allocation20] sm:$0x1]
        %v2335 = vlaneseq
        %v2336 = vshrl.u32 %v2335, 7
        %v2337 = vsub.s32 0, %v2336
        %v2338 = vrot.slane %v2333, %v2337
        %v2340 = vadd.f32 %v2330, %v2338
        %v2341 = vadd.f32 %v2331, %v2338
        %v2342 = vadd.f32 %v2332, %v2338
        %vm2343 = vcmp.ge.f32.partialorder %v2340, 0.0
        %vm2344 = vcmp.ge.f32.partialorder %v2341, 0.0
        %vm2345 = vcmp.ge.f32.partialorder %v2342, 0.0
        %v2346 = vmul.f32 %v2340, 0.1
        %v2347 = vmul.f32 %v2341, 0.1
        %v2348 = vmul.f32 %v2342, 0.1
        %v2349 = vsel %vm2343, %v2340, %v2346
        %v2350 = vsel %vm2344, %v2341, %v2347
        %v2351 = vsel %vm2345, %v2342, %v2348
        %s2352 = sadd.s32 %s679, 4294967294
        %v2353 = vstv %s2352
        %v2354 = vadd.s32 %v820, %v2353
        %v2355 = vadd.s32 %v821, %v2353
        %v2356 = vadd.s32 %v822, %v2353
        %vm2357 = vcmp.ge.s32.totalorder %v2354, 0
        %vm2358 = vcmp.ge.s32.totalorder %v2355, 0
        %vm2359 = vcmp.ge.s32.totalorder %v2356, 0
        %vm2360 = vcmp.lt.s32.totalorder %v2354, 16
        %vm2361 = vcmp.lt.s32.totalorder %v2355, 16
        %vm2362 = vcmp.lt.s32.totalorder %v2356, 16
        %vm2363 = vmand %vm2357, %vm2360
        %vm2364 = vmand %vm2358, %vm2361
        %vm2365 = vmand %vm2359, %vm2362
        %v2366 = vsel %vm2363, 1, 0
        %v2367 = vsel %vm2364, 1, 0
        %v2368 = vsel %vm2365, 1, 0
        %vm2369 = vcmp.eq.s32.totalorder %v2366, 1
        %vm2370 = vcmp.eq.s32.totalorder %v2367, 1
        %vm2371 = vcmp.eq.s32.totalorder %v2368, 1
        %v2372 = vsel %vm2369, %v2349, 0.0
        %v2373 = vsel %vm2370, %v2350, 0.0
        %v2374 = vsel %vm2371, %v2351, 0.0
        %v2375 = vld [vmem:[#allocation21] sm:$0xff]
        %v2376 = vld [vmem:[#allocation21 + $0x8] sm:$0xff]
        %v2377 = vld [vmem:[#allocation21 + $0x10] sm:$0xff]
        %v2378 = vld [vmem:[#allocation21 + $0x18] sm:$0xff]
        %v2379 = vld [vmem:[#allocation21 + $0x20] sm:$0xff]
        %v2380 = vld [vmem:[#allocation21 + $0x28] sm:$0xff]
        %v2381 = vld [vmem:[#allocation21 + $0x30] sm:$0xff]
        %v2382 = vld [vmem:[#allocation21 + $0x38] sm:$0xff]
        %s2383 = scalar_lea.vmem [#allocation21], 64
        %v2384 = vld [vmem:[%s2383] sm:$0xff]
        %v2385 = vld [vmem:[%s2383 + $0x8] sm:$0xff]
        %v2386 = vld [vmem:[%s2383 + $0x10] sm:$0xff]
        %v2387 = vld [vmem:[%s2383 + $0x18] sm:$0xff]
        %v2388 = vld [vmem:[%s2383 + $0x20] sm:$0xff]
        %v2389 = vld [vmem:[%s2383 + $0x28] sm:$0xff]
        %v2390 = vld [vmem:[%s2383 + $0x30] sm:$0xff]
        %v2391 = vld [vmem:[%s2383 + $0x38] sm:$0xff]
        %v2395 = vrot.slane %v2372, 2
        %v2396 = vrot.slane %v2373, 2
        %v2397 = vsel %vm870, %v2395, %v2396
        %v2398 = vrot.slane %v2374, 2
        %v2399 = vsel %vm870, %v2396, %v2398
        %v2400 = vsel %vm721, %v2397, 0
        %v2402 = vsel %vm721, %v2399, 0
        %2404 = vmatprep.subr.mxu0 0.0
        %2405 = vmatpush1.msra.mxu0 %v2384
        %2406 = vmatprep.subr.mxu0 0.0
        %2407 = vmatpush1.msra.mxu0 %v2385
        %2408 = vmatprep.subr.mxu0 0.0
        %2409 = vmatpush1.msra.mxu0 %v2386
        %2410 = vmatprep.subr.mxu0 0.0
        %2411 = vmatpush1.msra.mxu0 %v2387
        %2412 = vmatprep.subr.mxu0 0.0
        %2413 = vmatpush1.msra.mxu0 %v2388
        %2414 = vmatprep.subr.mxu0 0.0
        %2415 = vmatpush1.msra.mxu0 %v2389
        %2416 = vmatprep.subr.mxu0 0.0
        %2417 = vmatpush1.msra.mxu0 %v2390
        %2418 = vmatprep.subr.mxu0 0.0
        %2419 = vmatpush1.msra.mxu0 %v2391
        %2420 = vmatprep.subr.mxu0 0.0
        %2421 = vmatpush1.msra.mxu0 0.0
        %2422 = vmatprep.subr.mxu0 0.0
        %2423 = vmatpush1.msra.mxu0 0.0
        %2424 = vmatprep.subr.mxu0 0.0
        %2425 = vmatpush1.msra.mxu0 0.0
        %2426 = vmatprep.subr.mxu0 0.0
        %2427 = vmatpush1.msra.mxu0 0.0
        %2428 = vmatprep.subr.mxu0 0.0
        %2429 = vmatpush1.msra.mxu0 0.0
        %2430 = vmatprep.subr.mxu0 0.0
        %2431 = vmatpush1.msra.mxu0 0.0
        %2432 = vmatprep.subr.mxu0 0.0
        %2433 = vmatpush1.msra.mxu0 0.0
        %2434 = vmatprep.subr.mxu0 0.0
        %2435 = vmatpush1.msra.mxu0 0.0
        %2436 = vmatprep.subr.mxu0 0.0
        %2437 = vmatpush1.msra.mxu0 0.0
        %2438 = vmatprep.subr.mxu0 0.0
        %2439 = vmatpush1.msra.mxu0 0.0
        %2440 = vmatprep.subr.mxu0 0.0
        %2441 = vmatpush1.msra.mxu0 0.0
        %2442 = vmatprep.subr.mxu0 0.0
        %2443 = vmatpush1.msra.mxu0 0.0
        %2444 = vmatprep.subr.mxu0 0.0
        %2445 = vmatpush1.msra.mxu0 0.0
        %2446 = vmatprep.subr.mxu0 0.0
        %2447 = vmatpush1.msra.mxu0 0.0
        %2448 = vmatprep.subr.mxu0 0.0
        %2449 = vmatpush1.msra.mxu0 0.0
        %2450 = vmatprep.subr.mxu0 0.0
        %2451 = vmatpush1.msra.mxu0 0.0
        %2452 = vmatprep.subr.mxu0 0.0
        %2453 = vmatpush1.msra.mxu0 0.0
        %2454 = vmatprep.subr.mxu0 0.0
        %2455 = vmatpush1.msra.mxu0 0.0
        %2456 = vmatprep.subr.mxu0 0.0
        %2457 = vmatpush1.msra.mxu0 0.0
        %2458 = vmatprep.subr.mxu0 0.0
        %2459 = vmatpush1.msra.mxu0 0.0
        %2460 = vmatprep.subr.mxu0 0.0
        %2461 = vmatpush1.msra.mxu0 0.0
        %2462 = vmatprep.subr.mxu0 0.0
        %2463 = vmatpush1.msra.mxu0 0.0
        %2464 = vmatprep.subr.mxu0 0.0
        %2465 = vmatpush1.msra.mxu0 0.0
        %2466 = vmatprep.subr.mxu0 0.0
        %2467 = vmatpush1.msra.mxu0 0.0
        %2468 = vmatprep.mubr.f32.mxu0 0.0
        %2469 = vmatmul.mubr.f32.gmra.mrb[0].mxu0 %v2400
        %v2470 = vpop.f32.mrb[0].mxu0
        %v2471 = vadd.f32 0.0, %v2470
        %v2472 = vpop.f32.mrb[0].mxu0
        %2473 = vmatprep.mubr.f32.mxu0 0.0
        %2474 = vmatmul.mubr.f32.gmra.mrb[0].mxu0 %v2402
        %v2475 = vpop.f32.mrb[0].mxu0
        %v2476 = vadd.f32 0.0, %v2475
        %v2477 = vpop.f32.mrb[0].mxu0
        %2478 = vdwg.mxu0
        %v2479 = vrot.slane %v2372, 1
        %v2480 = vrot.slane %v2373, 1
        %v2481 = vsel %vm858, %v2479, %v2480
        %v2482 = vrot.slane %v2374, 1
        %v2483 = vsel %vm858, %v2480, %v2482
        %v2484 = vsel %vm721, %v2481, 0
        %v2486 = vsel %vm721, %v2483, 0
        %2488 = vmatprep.subr.mxu0 0.0
        %2489 = vmatpush1.msra.mxu0 %v2375
        %2490 = vmatprep.subr.mxu0 0.0
        %2491 = vmatpush1.msra.mxu0 %v2376
        %2492 = vmatprep.subr.mxu0 0.0
        %2493 = vmatpush1.msra.mxu0 %v2377
        %2494 = vmatprep.subr.mxu0 0.0
        %2495 = vmatpush1.msra.mxu0 %v2378
        %2496 = vmatprep.subr.mxu0 0.0
        %2497 = vmatpush1.msra.mxu0 %v2379
        %2498 = vmatprep.subr.mxu0 0.0
        %2499 = vmatpush1.msra.mxu0 %v2380
        %2500 = vmatprep.subr.mxu0 0.0
        %2501 = vmatpush1.msra.mxu0 %v2381
        %2502 = vmatprep.subr.mxu0 0.0
        %2503 = vmatpush1.msra.mxu0 %v2382
        %2504 = vmatprep.subr.mxu0 0.0
        %2505 = vmatpush1.msra.mxu0 0.0
        %2506 = vmatprep.subr.mxu0 0.0
        %2507 = vmatpush1.msra.mxu0 0.0
        %2508 = vmatprep.subr.mxu0 0.0
        %2509 = vmatpush1.msra.mxu0 0.0
        %2510 = vmatprep.subr.mxu0 0.0
        %2511 = vmatpush1.msra.mxu0 0.0
        %2512 = vmatprep.subr.mxu0 0.0
        %2513 = vmatpush1.msra.mxu0 0.0
        %2514 = vmatprep.subr.mxu0 0.0
        %2515 = vmatpush1.msra.mxu0 0.0
        %2516 = vmatprep.subr.mxu0 0.0
        %2517 = vmatpush1.msra.mxu0 0.0
        %2518 = vmatprep.subr.mxu0 0.0
        %2519 = vmatpush1.msra.mxu0 0.0
        %2520 = vmatprep.subr.mxu0 0.0
        %2521 = vmatpush1.msra.mxu0 0.0
        %2522 = vmatprep.subr.mxu0 0.0
        %2523 = vmatpush1.msra.mxu0 0.0
        %2524 = vmatprep.subr.mxu0 0.0
        %2525 = vmatpush1.msra.mxu0 0.0
        %2526 = vmatprep.subr.mxu0 0.0
        %2527 = vmatpush1.msra.mxu0 0.0
        %2528 = vmatprep.subr.mxu0 0.0
        %2529 = vmatpush1.msra.mxu0 0.0
        %2530 = vmatprep.subr.mxu0 0.0
        %2531 = vmatpush1.msra.mxu0 0.0
        %2532 = vmatprep.subr.mxu0 0.0
        %2533 = vmatpush1.msra.mxu0 0.0
        %2534 = vmatprep.subr.mxu0 0.0
        %2535 = vmatpush1.msra.mxu0 0.0
        %2536 = vmatprep.subr.mxu0 0.0
        %2537 = vmatpush1.msra.mxu0 0.0
        %2538 = vmatprep.subr.mxu0 0.0
        %2539 = vmatpush1.msra.mxu0 0.0
        %2540 = vmatprep.subr.mxu0 0.0
        %2541 = vmatpush1.msra.mxu0 0.0
        %2542 = vmatprep.subr.mxu0 0.0
        %2543 = vmatpush1.msra.mxu0 0.0
        %2544 = vmatprep.subr.mxu0 0.0
        %2545 = vmatpush1.msra.mxu0 0.0
        %2546 = vmatprep.subr.mxu0 0.0
        %2547 = vmatpush1.msra.mxu0 0.0
        %2548 = vmatprep.subr.mxu0 0.0
        %2549 = vmatpush1.msra.mxu0 0.0
        %2550 = vmatprep.subr.mxu0 0.0
        %2551 = vmatpush1.msra.mxu0 0.0
        %2552 = vmatprep.mubr.f32.mxu0 0.0
        %2553 = vmatmul.mubr.f32.gmra.mrb[0].mxu0 %v2484
        %v2554 = vpop.f32.mrb[0].mxu0
        %v2555 = vadd.f32 %v2471, %v2554
        %v2556 = vpop.f32.mrb[0].mxu0
        %2557 = vmatprep.mubr.f32.mxu0 0.0
        %2558 = vmatmul.mubr.f32.gmra.mrb[0].mxu0 %v2486
        %v2559 = vpop.f32.mrb[0].mxu0
        %v2560 = vadd.f32 %v2476, %v2559
        %v2561 = vpop.f32.mrb[0].mxu0
        %2562 = vdwg.mxu0
        %s2563 = scalar_lea.vmem [#allocation21], 128
        %v2564 = vld [vmem:[%s2563] sm:$0xff]
        %v2565 = vld [vmem:[%s2563 + $0x8] sm:$0xff]
        %v2566 = vld [vmem:[%s2563 + $0x10] sm:$0xff]
        %v2567 = vld [vmem:[%s2563 + $0x18] sm:$0xff]
        %v2568 = vld [vmem:[%s2563 + $0x20] sm:$0xff]
        %v2569 = vld [vmem:[%s2563 + $0x28] sm:$0xff]
        %v2570 = vld [vmem:[%s2563 + $0x30] sm:$0xff]
        %v2571 = vld [vmem:[%s2563 + $0x38] sm:$0xff]
        %v2572 = vrot.slane %v2372, 3
        %v2573 = vrot.slane %v2373, 3
        %v2574 = vsel %vm882, %v2572, %v2573
        %v2575 = vrot.slane %v2374, 3
        %v2576 = vsel %vm882, %v2573, %v2575
        %v2577 = vsel %vm721, %v2574, 0
        %v2579 = vsel %vm721, %v2576, 0
        %2581 = vmatprep.subr.mxu0 0.0
        %2582 = vmatpush1.msra.mxu0 %v2564
        %2583 = vmatprep.subr.mxu0 0.0
        %2584 = vmatpush1.msra.mxu0 %v2565
        %2585 = vmatprep.subr.mxu0 0.0
        %2586 = vmatpush1.msra.mxu0 %v2566
        %2587 = vmatprep.subr.mxu0 0.0
        %2588 = vmatpush1.msra.mxu0 %v2567
        %2589 = vmatprep.subr.mxu0 0.0
        %2590 = vmatpush1.msra.mxu0 %v2568
        %2591 = vmatprep.subr.mxu0 0.0
        %2592 = vmatpush1.msra.mxu0 %v2569
        %2593 = vmatprep.subr.mxu0 0.0
        %2594 = vmatpush1.msra.mxu0 %v2570
        %2595 = vmatprep.subr.mxu0 0.0
        %2596 = vmatpush1.msra.mxu0 %v2571
        %2597 = vmatprep.subr.mxu0 0.0
        %2598 = vmatpush1.msra.mxu0 0.0
        %2599 = vmatprep.subr.mxu0 0.0
        %2600 = vmatpush1.msra.mxu0 0.0
        %2601 = vmatprep.subr.mxu0 0.0
        %2602 = vmatpush1.msra.mxu0 0.0
        %2603 = vmatprep.subr.mxu0 0.0
        %2604 = vmatpush1.msra.mxu0 0.0
        %2605 = vmatprep.subr.mxu0 0.0
        %2606 = vmatpush1.msra.mxu0 0.0
        %2607 = vmatprep.subr.mxu0 0.0
        %2608 = vmatpush1.msra.mxu0 0.0
        %2609 = vmatprep.subr.mxu0 0.0
        %2610 = vmatpush1.msra.mxu0 0.0
        %2611 = vmatprep.subr.mxu0 0.0
        %2612 = vmatpush1.msra.mxu0 0.0
        %2613 = vmatprep.subr.mxu0 0.0
        %2614 = vmatpush1.msra.mxu0 0.0
        %2615 = vmatprep.subr.mxu0 0.0
        %2616 = vmatpush1.msra.mxu0 0.0
        %2617 = vmatprep.subr.mxu0 0.0
        %2618 = vmatpush1.msra.mxu0 0.0
        %2619 = vmatprep.subr.mxu0 0.0
        %2620 = vmatpush1.msra.mxu0 0.0
        %2621 = vmatprep.subr.mxu0 0.0
        %2622 = vmatpush1.msra.mxu0 0.0
        %2623 = vmatprep.subr.mxu0 0.0
        %2624 = vmatpush1.msra.mxu0 0.0
        %2625 = vmatprep.subr.mxu0 0.0
        %2626 = vmatpush1.msra.mxu0 0.0
        %2627 = vmatprep.subr.mxu0 0.0
        %2628 = vmatpush1.msra.mxu0 0.0
        %2629 = vmatprep.subr.mxu0 0.0
        %2630 = vmatpush1.msra.mxu0 0.0
        %2631 = vmatprep.subr.mxu0 0.0
        %2632 = vmatpush1.msra.mxu0 0.0
        %2633 = vmatprep.subr.mxu0 0.0
        %2634 = vmatpush1.msra.mxu0 0.0
        %2635 = vmatprep.subr.mxu0 0.0
        %2636 = vmatpush1.msra.mxu0 0.0
        %2637 = vmatprep.subr.mxu0 0.0
        %2638 = vmatpush1.msra.mxu0 0.0
        %2639 = vmatprep.subr.mxu0 0.0
        %2640 = vmatpush1.msra.mxu0 0.0
        %2641 = vmatprep.subr.mxu0 0.0
        %2642 = vmatpush1.msra.mxu0 0.0
        %2643 = vmatprep.subr.mxu0 0.0
        %2644 = vmatpush1.msra.mxu0 0.0
        %2645 = vmatprep.mubr.f32.mxu0 0.0
        %2646 = vmatmul.mubr.f32.gmra.mrb[0].mxu0 %v2577
        %v2647 = vpop.f32.mrb[0].mxu0
        %v2648 = vadd.f32 0.0, %v2647
        %v2649 = vpop.f32.mrb[0].mxu0
        %2650 = vmatprep.mubr.f32.mxu0 0.0
        %2651 = vmatmul.mubr.f32.gmra.mrb[0].mxu0 %v2579
        %v2652 = vpop.f32.mrb[0].mxu0
        %v2653 = vadd.f32 0.0, %v2652
        %v2654 = vpop.f32.mrb[0].mxu0
        %2655 = vdwg.mxu0
        %v2656 = vadd.f32 %v2555, %v2648
        %v2657 = vadd.f32 %v2560, %v2653
        %2658 = vxpose.xlu0.b32.start [1/16] %v2656, 128
        %2659 = vxpose.xlu0.b32.cont [2/16] %v2657, 128
        %2660 = vxpose.xlu0.b32.cont [3/16] 0.0, 128
        %2661 = vxpose.xlu0.b32.cont [4/16] 0.0, 128
        %2662 = vxpose.xlu0.b32.cont [5/16] 0.0, 128
        %2663 = vxpose.xlu0.b32.cont [6/16] 0.0, 128
        %2664 = vxpose.xlu0.b32.cont [7/16] 0.0, 128
        %2665 = vxpose.xlu0.b32.cont [8/16] 0.0, 128
        %2666 = vxpose.xlu0.b32.cont [9/16] 0.0, 128
        %2667 = vxpose.xlu0.b32.cont [10/16] 0.0, 128
        %2668 = vxpose.xlu0.b32.cont [11/16] 0.0, 128
        %2669 = vxpose.xlu0.b32.cont [12/16] 0.0, 128
        %2670 = vxpose.xlu0.b32.cont [13/16] 0.0, 128
        %2671 = vxpose.xlu0.b32.cont [14/16] 0.0, 128
        %2672 = vxpose.xlu0.b32.cont [15/16] 0.0, 128
        %2673 = vxpose.xlu0.b32.end [16/16] 0.0, 128
        %v2674 = vpop.trf.xlu0
        %v2675 = vpop.trf.xlu0
        %v2676 = vpop.trf.xlu0
        %v2677 = vpop.trf.xlu0
        %v2678 = vpop.trf.xlu0
        %v2679 = vpop.trf.xlu0
        %v2680 = vpop.trf.xlu0
        %v2681 = vpop.trf.xlu0
        %v2682 = vpop.trf.xlu0
        %v2683 = vpop.trf.xlu0
        %v2684 = vpop.trf.xlu0
        %v2685 = vpop.trf.xlu0
        %v2686 = vpop.trf.xlu0
        %v2687 = vpop.trf.xlu0
        %v2688 = vpop.trf.xlu0
        %v2689 = vpop.trf.xlu0
        %v2690 = vld [vmem:[#allocation2] sm:$0x1]
        %2692 = vset.pattern.permute.xlu0 0
        %2693 = vperm.xlu0 %2692, %v2690
        %v2694 = vpop.permute.xlu0 %2693
        %v2696 = vlaneseq
        %v2697 = vshrl.u32 %v2696, 7
        %v2698 = vsub.s32 0, %v2697
        %v2699 = vrot.slane %v2694, %v2698
        %v2700 = vadd.f32 %v2674, %v2699
        %vm2701 = vcmask 122880
        %2702 = vst.msk [vmem:[%s677] sm:$0x1] %vm2701, %v2700
        %s2703 = sand.u32 %s356, 1
        %s2704 = scalar_lea.sflag [#allocation5], %s2703
        %s2705 = sand.u32 %s356, 1
        %s2706 = scalar_lea.vmem [#allocation23], %s2705
        // Predicated region
        $region121: #{wavlm_discriminator.1} parent=71 // pred_check
          %p2707 = pneg %p366
        $region122: #{wavlm_discriminator.1} parent=71 // pred_check_branch
          %2709 = sbr.rel (%p2707) target = $region124
        $region123: #{wavlm_discriminator.1} parent=71 // pred_region
          %s2711 = ssub.s32 16, 16
          %2712 = vsyncadd %s2704, %s2711
          %s2713 = sadd.s32 %s45, %s44
          %s2714 = smul.addr %s2713, 16
          %s2715 = scalar_lea.hbm %s13, %s2714
          %s2717 = sshll.u32 %s2706, 4
          %s2718 = int_to_ptr.vmem [resolvable:$true] %s2717
          %2720 = dma.vmem_to_hbm [thread:$0]  %s2718, 16, %s2715, %s2704
        $region124: #{wavlm_discriminator.1} parent=71 // pred_fallthru
          _
      $region72: #{wavlm_discriminator.1} parent=5 // pred_fallthru
        _
      %p2721 = scmp.le.s32.totalorder 2, %s35
      // Predicated region
      $region125: #{wavlm_discriminator.1} parent=5 // pred_check
        %p2722 = pneg %p2721
      $region126: #{wavlm_discriminator.1} parent=5 // pred_check_branch
        %2724 = sbr.rel (%p2722) target = $region128
      $region127: #{wavlm_discriminator.1} parent=5 // pred_region
        %s2725 = ssub.s32 %s35, 2
        // Predicated region
        $region129: #{wavlm_discriminator.1} parent=127 // pred_check
          %p2726 = pneg %p372
        $region130: #{wavlm_discriminator.1} parent=127 // pred_check_branch
          %2728 = sbr.rel (%p2726) target = $region132
        $region131: #{wavlm_discriminator.1} parent=127 // pred_region
          %s2729 = sand.u32 %s357, 1
          %s2730 = scalar_lea.sflag [#allocation5], %s2729
          %s2731 = sand.u32 %s357, 1
          %s2732 = scalar_lea.vmem [#allocation23], %s2731
          %2733 = dma.done %s2730, 16
        $region132: #{wavlm_discriminator.1} parent=127 // pred_fallthru
          _
      $region128: #{wavlm_discriminator.1} parent=5 // pred_fallthru
        _
    $region6: #{wavlm_discriminator.1} parent=1 // loop_footer
      %s39 = sadd.s32 1, %s35
    $region7: #{wavlm_discriminator.1} parent=1 // loop_footer_branch
      %34 = sbr.rel target = $region3
    $region8: #{wavlm_discriminator.1} parent=1 // loop_exit
      _
    %2734 = vsyncpa [#allocation4], 1
    %s2735 = scalar_lea.sflag [#allocation4], 1
    %2736 = vsyncpa %s2735, 1
    %2737 = vsyncpa [#allocation7], 1
    %s2738 = scalar_lea.sflag [#allocation7], 1
    %2739 = vsyncpa %s2738, 1
    %2740 = vsyncpa [#allocation10], 1
    %2741 = vsyncpa [#allocation13], 1
    %2742 = vsyncpa [#allocation16], 1
    %2743 = vsyncpa [#allocation19], 1
    %2744 = vsyncpa [#allocation22], 1
    %2745 = vsyncpa [#allocation5], 1
    %s2746 = scalar_lea.sflag [#allocation5], 1
    %2747 = vsyncpa %s2746, 1

</llo_original>
